<compile_context>
chip_gen: v7x
topology: tpu7x:2x2x1
jax: 0.10.0
libtpu: 0.0.40
codegen_flags: <defaults>
</compile_context>

<pallas_src>
import functools

import numpy as np
import jax
import jax.numpy as jnp
from jax import lax
from jax.experimental import pallas as pl
from jax.experimental.pallas import tpu as pltpu

K = 3  # Conv2d kernel size


def _interp_matrix(in_size, out_size):
    """1-D bilinear interpolation matrix (align_corners=True), shape (out_size, in_size)."""
    m = np.zeros((out_size, in_size), dtype=np.float64)
    if out_size == 1:
        m[0, 0] = 1.0
        return m
    src = np.arange(out_size, dtype=np.float64) * (in_size - 1) / max(out_size - 1, 1)
    lo = np.clip(np.floor(src).astype(np.int64), 0, in_size - 1)
    hi = np.minimum(lo + 1, in_size - 1)
    frac = src - lo
    m[np.arange(out_size), lo] += 1.0 - frac
    m[np.arange(out_size), hi] += frac
    return m


def upsample_block_kernel(u_ref, m_ref, b_ref, x_ref, o_ref, *, th, nbl):
    """One (batch-pack, H-tile) per grid step.  Everything runs on the MXU.

    u_ref : (K, th, H)        f32 VMEM  height-interp matrices, one per conv row tap
    m_ref : (K, NCW, NBL)     f32 VMEM  folded (width-interp x conv) weight matrices
    b_ref : (1, NBL)          f32 VMEM  lane-packed bias row
    x_ref : (1, H, NCW)       f32 VMEM  lane-packed input (NB batch elems x Cin channels)
    o_ref : (1, th, NBL)      f32 VMEM  lane-dense packed output (128 lanes for the test shape)
    """
    x = x_ref[0]                                             # (H, NCW)
    acc = jnp.broadcast_to(b_ref[...], (th, nbl))            # bias folded into accumulator init
    for kh in range(K):                                      # K = 3, fully unrolled
        t = jnp.dot(u_ref[kh], x,
                    preferred_element_type=jnp.float32,
                    precision=lax.Precision.HIGHEST)         # (th, NCW)   height interp (+ kh tap)
        acc = acc + jnp.dot(t, m_ref[kh],
                            preferred_element_type=jnp.float32,
                            precision=lax.Precision.HIGHEST) # (th, NBL)   width interp + conv mix
    o_ref[0] = jnp.maximum(acc, 0.0)                         # ReLU + single lane-dense store


def upsample_block(x, w, b, *, nb=None, h_tiles=None):
    """x: (N, Cin, H, W); w: (Cout, Cin, K, K) (PyTorch Conv2d layout); b: (Cout,)."""
    n, cin, h, wd = x.shape
    cout = w.shape[0]
    hup, wup = 2 * h, 2 * wd
    hout, wout = hup, wup                      # 'same' conv keeps the upsampled size
    f32 = jnp.float32

    # ---- batch-packing factor: make the output store >= 128 lanes (unmasked vst) ----
    if nb is None:
        nb = 1
        if (cout * wout) % 128 != 0:
            for cand in range(2, n + 1):
                if n % cand == 0 and (cand * cout * wout) % 128 == 0:
                    nb = cand
                    break
    assert n % nb == 0
    nbatch = n // nb
    ncw = nb * cin * wd                        # contraction width (lanes of packed input)
    nbl = nb * cout * wout                     # packed output lane width

    # ---- H tiling: keep >= 2 parallel grid steps when the batch collapsed to one step ----
    if h_tiles is None:
        h_tiles = 2 if (nbatch == 1 and hout % 16 == 0) else 1
    assert hout % h_tiles == 0
    th = hout // h_tiles
    assert th == hout or th % 8 == 0           # sublane-aligned output tile

    # ---- host-side matrix prep (shape-only parts in numpy, weight folding in jnp) ----
    # Height interpolation with the 'same'-padding zero rows folded in, one slice per kh tap.
    uh = _interp_matrix(h, hup)                                  # (hup, h)
    uh_pad = np.zeros((hup + 2, h), dtype=np.float64)
    uh_pad[1:1 + hup] = uh
    u = jnp.asarray(np.stack([uh_pad[kh:kh + hout] for kh in range(K)]), dtype=f32)  # (K,hout,h)

    # Width interpolation x kw shift: S[kw, xo, k] = Uw[xo+kw-1, k], zero when out of range.
    uw = _interp_matrix(wd, wup)                                 # (wup, wd)
    s = np.zeros((K, wout, wd), dtype=np.float64)
    for kw in range(K):
        c = np.arange(wout) + kw - 1
        valid = (c >= 0) & (c < wup)
        s[kw, valid, :] = uw[c[valid], :]
    s = jnp.asarray(s, dtype=f32)

    # M[kh, ci*W + k, co*Wout + xo] = sum_kw w[co,ci,kh,kw] * S[kw, xo, k]
    m = jnp.einsum("oihw,wxk->hikox", w.astype(f32), s,
                   precision=lax.Precision.HIGHEST)
    m = m.reshape(K, cin * wd, cout * wout)
    # Block-diagonal over the NB lane-packed batch elements.
    mb = jnp.zeros((K, ncw, nbl), dtype=f32)
    for i in range(nb):
        mb = mb.at[:, i * cin * wd:(i + 1) * cin * wd,
                   i * cout * wout:(i + 1) * cout * wout].set(m)

    # Lane-packed bias row matching the packed output layout.
    bias_row = jnp.tile(jnp.repeat(b.astype(f32), wout), nb).reshape(1, nbl)

    # Lane-pack the input: (N, Cin, H, W) -> (N/NB, H, NB*Cin*W)   (wrapper-side layout glue)
    xp = x.astype(f32).reshape(nbatch, nb, cin, h, wd)
    xp = xp.transpose(0, 3, 1, 2, 4).reshape(nbatch, h, ncw)

    kernel = functools.partial(upsample_block_kernel, th=th, nbl=nbl)

    out_packed = pl.pallas_call(
        kernel,
        out_shape=jax.ShapeDtypeStruct((nbatch, hout, nbl), f32),
        grid=(nbatch, h_tiles),
        in_specs=[
            pl.BlockSpec((K, th, h), lambda i, j: (0, j, 0)),      # U taps (per H tile)
            pl.BlockSpec((K, ncw, nbl), lambda i, j: (0, 0, 0)),   # folded conv weights
            pl.BlockSpec((1, nbl), lambda i, j: (0, 0)),           # bias row
            pl.BlockSpec((1, h, ncw), lambda i, j: (i, 0, 0)),     # packed input
        ],
        out_specs=pl.BlockSpec((1, th, nbl), lambda i, j: (i, j, 0)),
        compiler_params=pltpu.CompilerParams(
            dimension_semantics=("parallel", "parallel"),          # both axes independent
        ),
    )(u, mb, bias_row, xp)

    # Unpack (N/NB, hout, NB*Cout*Wout) -> NCHW (N, Cout, hout, Wout).
    out = out_packed.reshape(nbatch, hout, nb, cout, wout)
    return out.transpose(0, 2, 3, 1, 4).reshape(n, cout, hout, wout)


def _upsample_ref(x):
    """Pure-JAX reference bilinear x2 upsample, align_corners=True (== nn.UpsamplingBilinear2d)."""
    n, c, h, w = x.shape
    ho, wo = 2 * h, 2 * w

    def idx(in_size, out_size):
        src = np.arange(out_size, dtype=np.float64) * (in_size - 1) / (out_size - 1)
        lo = np.clip(np.floor(src).astype(np.int64), 0, in_size - 1)
        hi = np.minimum(lo + 1, in_size - 1)
        frac = (src - lo).astype(np.float32)
        return lo, hi, frac

    y0, y1, fy = idx(h, ho)
    x0, x1, fx = idx(w, wo)
    rows = (x[:, :, y0, :] * (1.0 - fy)[None, None, :, None]
            + x[:, :, y1, :] * fy[None, None, :, None])
    return (rows[:, :, :, x0] * (1.0 - fx)[None, None, None, :]
            + rows[:, :, :, x1] * fx[None, None, None, :])


if __name__ == "__main__":
    # Small shapes consistent with the module: batch=2, n_features=4, spatial=16.
    n_features = 4
    batch, spatial = 2, 16
    key = jax.random.PRNGKey(0)
    kx, kw_key, kb_key = jax.random.split(key, 3)

    x = jax.random.normal(kx, (batch, n_features, spatial, spatial), dtype=jnp.float32)
    # Conv2d weight layout: (out_channels, in_channels, kH, kW)
    w = 0.1 * jax.random.normal(kw_key, (n_features // 2, n_features, K, K), dtype=jnp.float32)
    b = 0.1 * jax.random.normal(kb_key, (n_features // 2,), dtype=jnp.float32)

    out = upsample_block(x, w, b)
    out = jax.block_until_ready(out)

    # Pure-JAX reference: bilinear x2 (align_corners=True) -> 3x3 'same' conv -> bias -> ReLU.
    up_ref = _upsample_ref(x)
    ref = lax.conv_general_dilated(
        up_ref, w, window_strides=(1, 1),
        padding=[(1, 1), (1, 1)],
        dimension_numbers=("NCHW", "OIHW", "NCHW"),
        precision=lax.Precision.HIGHEST,
    )
    ref = jnp.maximum(ref + b[None, :, None, None], 0.0)

    assert out.shape == (batch, n_features // 2, 2 * spatial, 2 * spatial)
    err = float(jnp.max(jnp.abs(out - ref)))
    assert jnp.allclose(out, ref, atol=1e-3, rtol=1e-3), err
    print("KERNEL_OK")
</pallas_src>

<mosaic_0001>
module attributes {stable_mosaic.version = 11 : i64} {
  func.func @upsample_block_kernel(%arg0: i32, %arg1: i32, %arg2: memref<3x16x16xf32, #tpu.memory_space<vmem>>, %arg3: memref<3x128x128xf32, #tpu.memory_space<vmem>>, %arg4: memref<1x128xf32, #tpu.memory_space<vmem>>, %arg5: memref<1x16x128xf32, #tpu.memory_space<vmem>>, %arg6: memref<1x16x128xf32, #tpu.memory_space<vmem>>) attributes {dimension_semantics = [#tpu.dimension_semantics<parallel>, #tpu.dimension_semantics<parallel>], iteration_bounds = array<i64: 1, 2>, scalar_prefetch = 0 : i64, scratch_operands = 0 : i64, tpu.core_type = #tpu.core_type<tc>, window_params = [{transform_indices = @transform_0, window_bounds = array<i64: 3, 16, 16>}, {pipeline_mode = #tpu.pipeline_mode<synchronous>, transform_indices = @transform_1, window_bounds = array<i64: 3, 128, 128>}, {pipeline_mode = #tpu.pipeline_mode<synchronous>, transform_indices = @transform_2, window_bounds = array<i64: 1, 128>}, {transform_indices = @transform_3, window_bounds = array<i64: 1, 16, 128>}, {transform_indices = @transform_4, window_bounds = array<i64: 1, 16, 128>}]} {
    %c0 = arith.constant 0 : index
    %c0_0 = arith.constant 0 : index
    %c0_1 = arith.constant 0 : index
    %0 = vector.load %arg5[%c0, %c0_0, %c0_1] : memref<1x16x128xf32, #tpu.memory_space<vmem>>, vector<1x16x128xf32>
    %1 = vector.shape_cast %0 : vector<1x16x128xf32> to vector<16x128xf32>
    %c0_2 = arith.constant 0 : index
    %c0_3 = arith.constant 0 : index
    %2 = vector.load %arg4[%c0_2, %c0_3] : memref<1x128xf32, #tpu.memory_space<vmem>>, vector<1x128xf32>
    %3 = vector.shape_cast %2 : vector<1x128xf32> to vector<1x128xf32>
    %4 = vector.broadcast %3 : vector<1x128xf32> to vector<16x128xf32>
    %c0_4 = arith.constant 0 : index
    %c0_5 = arith.constant 0 : index
    %c0_6 = arith.constant 0 : index
    %5 = vector.load %arg2[%c0_4, %c0_5, %c0_6] : memref<3x16x16xf32, #tpu.memory_space<vmem>>, vector<1x16x16xf32>
    %6 = vector.shape_cast %5 : vector<1x16x16xf32> to vector<16x16xf32>
    %cst = arith.constant dense<0.000000e+00> : vector<16x128xf32>
    %7 = tpu.matmul %6, %1, %cst {dimension_numbers = #tpu.dot_dimension_numbers<[1], [0], [0], [1], [0, 0, 1, 1], [], []>, precision = #tpu.contract_precision<fp32>} : vector<16x16xf32>, vector<16x128xf32>, vector<16x128xf32> -> vector<16x128xf32>
    %c0_7 = arith.constant 0 : index
    %c0_8 = arith.constant 0 : index
    %c0_9 = arith.constant 0 : index
    %8 = vector.load %arg3[%c0_7, %c0_8, %c0_9] : memref<3x128x128xf32, #tpu.memory_space<vmem>>, vector<1x128x128xf32>
    %9 = vector.shape_cast %8 : vector<1x128x128xf32> to vector<128x128xf32>
    %cst_10 = arith.constant dense<0.000000e+00> : vector<16x128xf32>
    %10 = tpu.matmul %7, %9, %cst_10 {dimension_numbers = #tpu.dot_dimension_numbers<[1], [0], [0], [1], [0, 0, 1, 1], [], []>, precision = #tpu.contract_precision<fp32>} : vector<16x128xf32>, vector<128x128xf32>, vector<16x128xf32> -> vector<16x128xf32>
    %11 = arith.addf %4, %10 : vector<16x128xf32>
    %c1 = arith.constant 1 : index
    %c0_11 = arith.constant 0 : index
    %c0_12 = arith.constant 0 : index
    %12 = vector.load %arg2[%c1, %c0_11, %c0_12] : memref<3x16x16xf32, #tpu.memory_space<vmem>>, vector<1x16x16xf32>
    %13 = vector.shape_cast %12 : vector<1x16x16xf32> to vector<16x16xf32>
    %cst_13 = arith.constant dense<0.000000e+00> : vector<16x128xf32>
    %14 = tpu.matmul %13, %1, %cst_13 {dimension_numbers = #tpu.dot_dimension_numbers<[1], [0], [0], [1], [0, 0, 1, 1], [], []>, precision = #tpu.contract_precision<fp32>} : vector<16x16xf32>, vector<16x128xf32>, vector<16x128xf32> -> vector<16x128xf32>
    %c1_14 = arith.constant 1 : index
    %c0_15 = arith.constant 0 : index
    %c0_16 = arith.constant 0 : index
    %15 = vector.load %arg3[%c1_14, %c0_15, %c0_16] : memref<3x128x128xf32, #tpu.memory_space<vmem>>, vector<1x128x128xf32>
    %16 = vector.shape_cast %15 : vector<1x128x128xf32> to vector<128x128xf32>
    %cst_17 = arith.constant dense<0.000000e+00> : vector<16x128xf32>
    %17 = tpu.matmul %14, %16, %cst_17 {dimension_numbers = #tpu.dot_dimension_numbers<[1], [0], [0], [1], [0, 0, 1, 1], [], []>, precision = #tpu.contract_precision<fp32>} : vector<16x128xf32>, vector<128x128xf32>, vector<16x128xf32> -> vector<16x128xf32>
    %18 = arith.addf %11, %17 : vector<16x128xf32>
    %c2 = arith.constant 2 : index
    %c0_18 = arith.constant 0 : index
    %c0_19 = arith.constant 0 : index
    %19 = vector.load %arg2[%c2, %c0_18, %c0_19] : memref<3x16x16xf32, #tpu.memory_space<vmem>>, vector<1x16x16xf32>
    %20 = vector.shape_cast %19 : vector<1x16x16xf32> to vector<16x16xf32>
    %cst_20 = arith.constant dense<0.000000e+00> : vector<16x128xf32>
    %21 = tpu.matmul %20, %1, %cst_20 {dimension_numbers = #tpu.dot_dimension_numbers<[1], [0], [0], [1], [0, 0, 1, 1], [], []>, precision = #tpu.contract_precision<fp32>} : vector<16x16xf32>, vector<16x128xf32>, vector<16x128xf32> -> vector<16x128xf32>
    %c2_21 = arith.constant 2 : index
    %c0_22 = arith.constant 0 : index
    %c0_23 = arith.constant 0 : index
    %22 = vector.load %arg3[%c2_21, %c0_22, %c0_23] : memref<3x128x128xf32, #tpu.memory_space<vmem>>, vector<1x128x128xf32>
    %23 = vector.shape_cast %22 : vector<1x128x128xf32> to vector<128x128xf32>
    %cst_24 = arith.constant dense<0.000000e+00> : vector<16x128xf32>
    %24 = tpu.matmul %21, %23, %cst_24 {dimension_numbers = #tpu.dot_dimension_numbers<[1], [0], [0], [1], [0, 0, 1, 1], [], []>, precision = #tpu.contract_precision<fp32>} : vector<16x128xf32>, vector<128x128xf32>, vector<16x128xf32> -> vector<16x128xf32>
    %25 = arith.addf %18, %24 : vector<16x128xf32>
    %cst_25 = arith.constant 0.000000e+00 : f32
    %26 = vector.broadcast %cst_25 : f32 to vector<16x128xf32>
    %27 = arith.maximumf %25, %26 : vector<16x128xf32>
    %c0_26 = arith.constant 0 : index
    %c0_27 = arith.constant 0 : index
    %c0_28 = arith.constant 0 : index
    %28 = vector.load %arg6[%c0_26, %c0_27, %c0_28] : memref<1x16x128xf32, #tpu.memory_space<vmem>>, vector<1x16x128xf32>
    %29 = vector.shape_cast %28 : vector<1x16x128xf32> to vector<16x128xf32>
    %30 = vector.shape_cast %27 : vector<16x128xf32> to vector<1x16x128xf32>
    tpu.vector_store %arg6[%c0_26, %c0_27, %c0_28], %30 {strides = array<i32>} : memref<1x16x128xf32, #tpu.memory_space<vmem>>, vector<1x16x128xf32>,
    return
  }
  func.func @transform_0(%arg0: i32, %arg1: i32) -> (i32, i32, i32) {
    %c0_i32 = arith.constant 0 : i32
    %c0_i32_0 = arith.constant 0 : i32
    %c0_i32_1 = arith.constant 0 : i32
    return %c0_i32, %arg1, %c0_i32_0 : i32, i32, i32
  }
  func.func @transform_1(%arg0: i32, %arg1: i32) -> (i32, i32, i32) {
    %c0_i32 = arith.constant 0 : i32
    %c0_i32_0 = arith.constant 0 : i32
    %c0_i32_1 = arith.constant 0 : i32
    %c0_i32_2 = arith.constant 0 : i32
    return %c0_i32, %c0_i32_0, %c0_i32_1 : i32, i32, i32
  }
  func.func @transform_2(%arg0: i32, %arg1: i32) -> (i32, i32) {
    %c0_i32 = arith.constant 0 : i32
    %c0_i32_0 = arith.constant 0 : i32
    %c0_i32_1 = arith.constant 0 : i32
    return %c0_i32, %c0_i32_0 : i32, i32
  }
  func.func @transform_3(%arg0: i32, %arg1: i32) -> (i32, i32, i32) {
    %c0_i32 = arith.constant 0 : i32
    %c0_i32_0 = arith.constant 0 : i32
    %c0_i32_1 = arith.constant 0 : i32
    return %arg0, %c0_i32, %c0_i32_0 : i32, i32, i32
  }
  func.func @transform_4(%arg0: i32, %arg1: i32) -> (i32, i32, i32) {
    %c0_i32 = arith.constant 0 : i32
    %c0_i32_0 = arith.constant 0 : i32
    return %arg0, %arg1, %c0_i32 : i32, i32, i32
  }
}

</mosaic_0001>

<llo_original>
// kernel: tpu_custom_call.1
$region0: #{tpu_custom_call.1}
  #allocation0 [shape = 'u32[]', space=smem, size = 0x4, offset = 0x4, fixed_abs, tag = 'smem constant byte address 0x4 - core index']
  #allocation1 [shape = 'u32[144,128]{1,0:T(1,128)}', space=vmem, size = 0x12000, scoped, tag = 'internal scratch']
  %s0 = inlined_call_operand.vmem [shape: f32[3,32,16], index: 0, kind: input, shape index: {}]
  %s1 = inlined_call_operand.hbm [shape: f32[3,128,128], index: 1, kind: input, shape index: {}]
  %s2 = inlined_call_operand.vmem [shape: f32[1,128], index: 2, kind: input, shape index: {}]
  %s3 = inlined_call_operand.vmem [shape: f32[1,16,128], index: 3, kind: input, shape index: {}]
  %s4 = inlined_call_operand.hbm [shape: f32[1,32,128], index: 4, kind: output, shape index: {}]
  %s5 = sld [smem:[#allocation0]]
  $region91: #{tpu_custom_call.1} parent=0
    _
  %s7 = ssub.s32 1, %s5
  %s8 = scalar_select 0, %s7, %s5
  $region1: #{tpu_custom_call.1} parent=0
    #allocation2 [shape = 'u8[49152]{0}', space=vmem, size = 0xc000, scoped, tag = 'input window, operand 0']
    #allocation3 [shape = 'u8[196608]{0}', space=vmem, size = 0x30000, scoped, tag = 'input window, operand 1, single buffered']
    #allocation4 [shape = 's32[2]{0}', space=sflag, size = 0x8, scoped, tag = 'scoped memory for tpu_custom_call.1']
    #allocation5 [shape = 's32[2]{0}', space=sflag, size = 0x8, scoped, tag = 'scoped memory for tpu_custom_call.1']
    #allocation6 [shape = 'u8[16384]{0}', space=vmem, size = 0x4000, scoped, tag = 'output window, operand 0']
    %9 = vsyncpa [#allocation4], 0
    %10 = vsyncpa [#allocation5], 0
    %s11 = scalar_lea.sflag [#allocation5], 1
    %12 = vsyncpa %s11, 0
    loop: start=0, step=1, limit=4
    $region2: #{tpu_custom_call.1} parent=1 // loop_pre_header
      _
    $region3: #{tpu_custom_call.1} parent=1 // loop_header
      %s14 = sphi 0, %s18
      %p15 = scmp.ge.s32.totalorder %s14, 4
      %s21 = sphi 0, %s33
      %s22 = sphi 0, %s29
      %s23 = sphi 0, %s21
      %s24 = sphi 0, %s22
      %s25 = sphi 0, %s23
      %s26 = sphi 0, %s24
      %s36 = sphi 0, %s38
      %s39 = sphi 0, %s36
      %s40 = sphi 0, %s39
      %s56 = sphi 0, %s40
      %s60 = sphi 0, %s60
      %s62 = sphi 0, %s60
      %s63 = sphi 0, %s62
      %s77 = sphi 0, %s63
      %s81 = sphi 0, %s81
      %s83 = sphi 0, %s81
      %s84 = sphi 0, %s83
      %s98 = sphi 0, %s84
      %s104 = sphi 0, %s106
      %s107 = sphi 0, %s104
      %s108 = sphi 0, %s107
      %s124 = sphi 0, %s108
      %s132 = sphi 0, %s134
      %s135 = sphi 0, %s132
      %s136 = sphi 0, %s135
      %s152 = sphi 0, %s136
    $region4: #{tpu_custom_call.1} parent=1 // loop_header_branch
      %17 = sbr.rel (%p15) target = $region8
    $region5: #{tpu_custom_call.1} parent=1 // loop_body
      %s19 = ssub.s32 %s14, 1
      %s20 = ssub.s32 %s14, 2
      %s27 = sadd.s32 1, %s22
      %p28 = scmp.ge.s32.totalorder %s27, 2
      %s29 = scalar_select %p28, 0, %s27
      %s30 = sadd.s32 1, %s21
      %s31 = scalar_select %p28, %s30, %s21
      %p32 = scmp.ge.s32.totalorder %s31, 1
      %s33 = scalar_select %p32, 0, %s31
      %s34 = ssub.s32 %s22, %s29
      %p35 = scmp.eq.s32.totalorder %s34, 0
      %s37 = sadd.s32 %s36, 1
      %s38 = scalar_select %p35, %s36, %s37
      %p41 = pneg %p35
      %p42 = scmp.eq.s32.totalorder %s14, 1
      %p43 = por %p41, %p42
      %p44 = scmp.ne.s32.totalorder %s36, %s39
      %p45 = scmp.eq.s32.totalorder %s14, 0
      %p46 = por %p44, %p45
      %p47 = scmp.ne.s32.totalorder %s36, %s39
      %p48 = scmp.eq.s32.totalorder %s19, 1
      %p49 = por %p47, %p48
      %p50 = scmp.ne.s32.totalorder %s39, %s40
      %p51 = scmp.eq.s32.totalorder %s19, 0
      %p52 = por %p50, %p51
      %p53 = scmp.ne.s32.totalorder %s39, %s40
      %p54 = scmp.eq.s32.totalorder %s20, 1
      %p55 = por %p53, %p54
      %p57 = scmp.ne.s32.totalorder %s40, %s56
      %p58 = scmp.eq.s32.totalorder %s20, 0
      %p59 = por %p57, %p58
      %s61 = sadd.s32 %s60, 1
      %p64 = scmp.eq.s32.totalorder %s14, 1
      %p65 = scmp.ne.s32.totalorder %s60, %s62
      %p66 = scmp.eq.s32.totalorder %s14, 0
      %p67 = por %p65, %p66
      %p68 = scmp.ne.s32.totalorder %s60, %s62
      %p69 = scmp.eq.s32.totalorder %s19, 1
      %p70 = por %p68, %p69
      %p71 = scmp.ne.s32.totalorder %s62, %s63
      %p72 = scmp.eq.s32.totalorder %s19, 0
      %p73 = por %p71, %p72
      %p74 = scmp.ne.s32.totalorder %s62, %s63
      %p75 = scmp.eq.s32.totalorder %s20, 1
      %p76 = por %p74, %p75
      %p78 = scmp.ne.s32.totalorder %s63, %s77
      %p79 = scmp.eq.s32.totalorder %s20, 0
      %p80 = por %p78, %p79
      %s82 = sadd.s32 %s81, 1
      %p85 = scmp.eq.s32.totalorder %s14, 1
      %p86 = scmp.ne.s32.totalorder %s81, %s83
      %p87 = scmp.eq.s32.totalorder %s14, 0
      %p88 = por %p86, %p87
      %p89 = scmp.ne.s32.totalorder %s81, %s83
      %p90 = scmp.eq.s32.totalorder %s19, 1
      %p91 = por %p89, %p90
      %p92 = scmp.ne.s32.totalorder %s83, %s84
      %p93 = scmp.eq.s32.totalorder %s19, 0
      %p94 = por %p92, %p93
      %p95 = scmp.ne.s32.totalorder %s83, %s84
      %p96 = scmp.eq.s32.totalorder %s20, 1
      %p97 = por %p95, %p96
      %p99 = scmp.ne.s32.totalorder %s84, %s98
      %p100 = scmp.eq.s32.totalorder %s20, 0
      %p101 = por %p99, %p100
      %s102 = ssub.s32 %s21, %s33
      %p103 = scmp.eq.s32.totalorder %s102, 0
      %s105 = sadd.s32 %s104, 1
      %s106 = scalar_select %p103, %s104, %s105
      %p109 = pneg %p103
      %p110 = scmp.eq.s32.totalorder %s14, 1
      %p111 = por %p109, %p110
      %p112 = scmp.ne.s32.totalorder %s104, %s107
      %p113 = scmp.eq.s32.totalorder %s14, 0
      %p114 = por %p112, %p113
      %p115 = scmp.ne.s32.totalorder %s104, %s107
      %p116 = scmp.eq.s32.totalorder %s19, 1
      %p117 = por %p115, %p116
      %p118 = scmp.ne.s32.totalorder %s107, %s108
      %p119 = scmp.eq.s32.totalorder %s19, 0
      %p120 = por %p118, %p119
      %p121 = scmp.ne.s32.totalorder %s107, %s108
      %p122 = scmp.eq.s32.totalorder %s20, 1
      %p123 = por %p121, %p122
      %p125 = scmp.ne.s32.totalorder %s108, %s124
      %p126 = scmp.eq.s32.totalorder %s20, 0
      %p127 = por %p125, %p126
      %s128 = ssub.s32 %s21, %s33
      %s129 = ssub.s32 %s22, %s29
      %s130 = sor.u32 %s128, %s129
      %p131 = scmp.eq.s32.totalorder %s130, 0
      %s133 = sadd.s32 %s132, 1
      %s134 = scalar_select %p131, %s132, %s133
      %p137 = pneg %p131
      %p138 = scmp.eq.s32.totalorder %s14, 1
      %p139 = por %p137, %p138
      %p140 = scmp.ne.s32.totalorder %s132, %s135
      %p141 = scmp.eq.s32.totalorder %s14, 0
      %p142 = por %p140, %p141
      %p143 = scmp.ne.s32.totalorder %s132, %s135
      %p144 = scmp.eq.s32.totalorder %s19, 1
      %p145 = por %p143, %p144
      %p146 = scmp.ne.s32.totalorder %s135, %s136
      %p147 = scmp.eq.s32.totalorder %s19, 0
      %p148 = por %p146, %p147
      %p149 = scmp.ne.s32.totalorder %s135, %s136
      %p150 = scmp.eq.s32.totalorder %s20, 1
      %p151 = por %p149, %p150
      %p153 = scmp.ne.s32.totalorder %s136, %s152
      %p154 = scmp.eq.s32.totalorder %s20, 0
      %p155 = por %p153, %p154
      %p156 = scmp.le.s32.totalorder 1, %s14
      %p157 = scmp.lt.s32.totalorder %s14, 3
      %p158 = pnand %p156, %p157
      %p159 = pneg %p158
      // Predicated region
      $region9: #{tpu_custom_call.1} parent=5 // pred_check
        _
      $region10: #{tpu_custom_call.1} parent=5 // pred_check_branch
        %161 = sbr.rel (%p158) target = $region12
      $region11: #{tpu_custom_call.1} parent=5 // pred_region
        %s162 = ssub.s32 %s14, 1
        // Predicated region
        $region13: #{tpu_custom_call.1} parent=11 // pred_check
          %p163 = pneg %p73
        $region14: #{tpu_custom_call.1} parent=11 // pred_check_branch
          %165 = sbr.rel (%p163) target = $region16
        $region15: #{tpu_custom_call.1} parent=11 // pred_region
          %s167 = ssub.s32 6144, 6144
          %168 = vsyncadd [#allocation4], %s167
          %s169 = sshll.u32 [#allocation3], 4
          %s170 = int_to_ptr.vmem [resolvable:$true] %s169
          %175 = dma.hbm_to_vmem [thread:$0]  %s1, 6144, %s170, [#allocation4], 128, 128, 8
        $region16: #{tpu_custom_call.1} parent=11 // pred_fallthru
          _
        // Predicated region
        $region17: #{tpu_custom_call.1} parent=11 // pred_check
          %p176 = pneg %p94
        $region18: #{tpu_custom_call.1} parent=11 // pred_check_branch
          %178 = sbr.rel (%p176) target = $region20
        $region19: #{tpu_custom_call.1} parent=11 // pred_region
          _
        $region20: #{tpu_custom_call.1} parent=11 // pred_fallthru
          _
        // Predicated region
        $region21: #{tpu_custom_call.1} parent=11 // pred_check
          %p179 = pneg %p120
        $region22: #{tpu_custom_call.1} parent=11 // pred_check_branch
          %181 = sbr.rel (%p179) target = $region24
        $region23: #{tpu_custom_call.1} parent=11 // pred_region
          %p182 = scmp.lt.s32.totalorder %s23, 0
          %s183 = scalar_select %p182, %s23, 0
          %s184 = smul.addr %s183, 2
          %s185 = smul.addr %s184, 8
          %s186 = scalar_lea.vmem %s3, %s185
        $region24: #{tpu_custom_call.1} parent=11 // pred_fallthru
          _
      $region12: #{tpu_custom_call.1} parent=5 // pred_fallthru
        _
      %p187 = scmp.lt.s32.totalorder %s14, 2
      // Predicated region
      $region25: #{tpu_custom_call.1} parent=5 // pred_check
        %p188 = pneg %p187
      $region26: #{tpu_custom_call.1} parent=5 // pred_check_branch
        %190 = sbr.rel (%p188) target = $region28
      $region27: #{tpu_custom_call.1} parent=5 // pred_region
        // Predicated region
        $region29: #{tpu_custom_call.1} parent=27 // pred_check
          %p191 = pneg %p46
        $region30: #{tpu_custom_call.1} parent=27 // pred_check_branch
          %193 = sbr.rel (%p191) target = $region32
        $region31: #{tpu_custom_call.1} parent=27 // pred_region
          %s194 = sand.u32 %s36, 1
          %s195 = sand.u32 %s36, 1
          %s196 = smul.addr %s195, 48
          %s197 = scalar_lea.vmem [#allocation2], %s196
          %s198 = smul.u32 2, %s22
          %s199 = smul.addr %s198, 8
          %s200 = scalar_lea.vmem %s0, %s199
          // Predicated region
          $region33: #{tpu_custom_call.1} parent=31 // pred_check
            _
          $region34: #{tpu_custom_call.1} parent=31 // pred_check_branch
            %202 = sbr.rel (0) target = $region36
          $region35: #{tpu_custom_call.1} parent=31 // pred_region
            // Predicated region
            $region37: #{tpu_custom_call.1} parent=35 // pred_check
              _
            $region38: #{tpu_custom_call.1} parent=35 // pred_check_branch
              %204 = sbr.rel (0) target = $region40
            $region39: #{tpu_custom_call.1} parent=35 // pred_region
              // Predicated region
              $region52: #{tpu_custom_call.1} parent=39 // pred_check
                _
              $region53: #{tpu_custom_call.1} parent=39 // pred_check_branch
                %229 = sbr.rel (0) target = $region55
              $region54: #{tpu_custom_call.1} parent=39 // pred_region
                loop: start=0, step=1, limit=1
                $region56: #{tpu_custom_call.1} parent=54 // loop_pre_header
                  _
                $region57: #{tpu_custom_call.1} parent=54 // loop_header
                  %s231 = sphi 0, %s235
                  %p232 = scmp.ge.s32.totalorder %s231, 1
                  %s236 = sphi %s200, %s200
                  %s237 = sphi %s197, %s197
                $region58: #{tpu_custom_call.1} parent=54 // loop_header_branch
                  %234 = sbr.rel (%p232) target = $region62
                $region59: #{tpu_custom_call.1} parent=54 // loop_body
                  %v238 = vld [vmem:[%s236] sm:$0xff]
                  %239 = vst [vmem:[%s237] sm:$0xff] %v238
                  %v240 = vld [vmem:[%s236 + $0x8] sm:$0xff]
                  %241 = vst [vmem:[%s237 + $0x8] sm:$0xff] %v240
                  %v242 = vld [vmem:[%s236 + $0x20] sm:$0xff]
                  %243 = vst [vmem:[%s237 + $0x10] sm:$0xff] %v242
                  %v244 = vld [vmem:[%s236 + $0x28] sm:$0xff]
                  %245 = vst [vmem:[%s237 + $0x18] sm:$0xff] %v244
                  %v246 = vld [vmem:[%s236 + $0x40] sm:$0xff]
                  %247 = vst [vmem:[%s237 + $0x20] sm:$0xff] %v246
                  %v248 = vld [vmem:[%s236 + $0x48] sm:$0xff]
                  %249 = vst [vmem:[%s237 + $0x28] sm:$0xff] %v248
                $region60: #{tpu_custom_call.1} parent=54 // loop_footer
                  %s235 = sadd.s32 1, %s231
                $region61: #{tpu_custom_call.1} parent=54 // loop_footer_branch
                  %230 = sbr.rel target = $region57
                $region62: #{tpu_custom_call.1} parent=54 // loop_exit
                  _
              $region55: #{tpu_custom_call.1} parent=39 // pred_fallthru
                _
              // Predicated region
              $region63: #{tpu_custom_call.1} parent=39 // pred_check
                _
              $region64: #{tpu_custom_call.1} parent=39 // pred_check_branch
                %251 = sbr.rel target = $region66
              $region65: #{tpu_custom_call.1} parent=39 // pred_region
                _
              $region66: #{tpu_custom_call.1} parent=39 // pred_fallthru
                _
            $region40: #{tpu_custom_call.1} parent=35 // pred_fallthru
              _
            // Predicated region
            $region41: #{tpu_custom_call.1} parent=35 // pred_check
              _
            $region42: #{tpu_custom_call.1} parent=35 // pred_check_branch
              %206 = sbr.rel target = $region44
            $region43: #{tpu_custom_call.1} parent=35 // pred_region
              loop: start=0, step=1, limit=1
              $region45: #{tpu_custom_call.1} parent=43 // loop_pre_header
                _
              $region46: #{tpu_custom_call.1} parent=43 // loop_header
                %s209 = sphi 0, %s213
                %p210 = scmp.ge.s32.totalorder %s209, 1
                %s214 = sphi %s200, %s200
                %s215 = sphi %s197, %s197
              $region47: #{tpu_custom_call.1} parent=43 // loop_header_branch
                %212 = sbr.rel (%p210) target = $region51
              $region48: #{tpu_custom_call.1} parent=43 // loop_body
                %v216 = vld [vmem:[%s214] sm:$0xff]
                %217 = vst [vmem:[%s215] sm:$0xff] %v216
                %v218 = vld [vmem:[%s214 + $0x8] sm:$0xff]
                %219 = vst [vmem:[%s215 + $0x8] sm:$0xff] %v218
                %v220 = vld [vmem:[%s214 + $0x20] sm:$0xff]
                %221 = vst [vmem:[%s215 + $0x10] sm:$0xff] %v220
                %v222 = vld [vmem:[%s214 + $0x28] sm:$0xff]
                %223 = vst [vmem:[%s215 + $0x18] sm:$0xff] %v222
                %v224 = vld [vmem:[%s214 + $0x40] sm:$0xff]
                %225 = vst [vmem:[%s215 + $0x20] sm:$0xff] %v224
                %v226 = vld [vmem:[%s214 + $0x48] sm:$0xff]
                %227 = vst [vmem:[%s215 + $0x28] sm:$0xff] %v226
              $region49: #{tpu_custom_call.1} parent=43 // loop_footer
                %s213 = sadd.s32 1, %s209
              $region50: #{tpu_custom_call.1} parent=43 // loop_footer_branch
                %208 = sbr.rel target = $region46
              $region51: #{tpu_custom_call.1} parent=43 // loop_exit
                _
            $region44: #{tpu_custom_call.1} parent=35 // pred_fallthru
              _
          $region36: #{tpu_custom_call.1} parent=31 // pred_fallthru
            _
          %252 = vnop
        $region32: #{tpu_custom_call.1} parent=27 // pred_fallthru
          _
      $region28: #{tpu_custom_call.1} parent=5 // pred_fallthru
        _
      %p253 = scmp.le.s32.totalorder 1, %s14
      %p254 = scmp.lt.s32.totalorder %s14, 3
      %p255 = pnand %p253, %p254
      %p256 = pneg %p255
      // Predicated region
      $region67: #{tpu_custom_call.1} parent=5 // pred_check
        _
      $region68: #{tpu_custom_call.1} parent=5 // pred_check_branch
        %258 = sbr.rel (%p255) target = $region70
      $region69: #{tpu_custom_call.1} parent=5 // pred_region
        %s259 = ssub.s32 %s14, 1
        %s260 = sand.u32 %s39, 1
        %s261 = sand.u32 %s39, 1
        %s262 = smul.addr %s261, 48
        %s263 = scalar_lea.vmem [#allocation2], %s262
        // Predicated region
        $region71: #{tpu_custom_call.1} parent=69 // pred_check
          %p264 = pneg %p52
        $region72: #{tpu_custom_call.1} parent=69 // pred_check_branch
          %266 = sbr.rel (%p264) target = $region74
        $region73: #{tpu_custom_call.1} parent=69 // pred_region
          _
        $region74: #{tpu_custom_call.1} parent=69 // pred_fallthru
          _
        // Predicated region
        $region75: #{tpu_custom_call.1} parent=69 // pred_check
          %p267 = pneg %p73
        $region76: #{tpu_custom_call.1} parent=69 // pred_check_branch
          %269 = sbr.rel (%p267) target = $region78
        $region77: #{tpu_custom_call.1} parent=69 // pred_region
          %270 = dma.done [#allocation4], 6144
        $region78: #{tpu_custom_call.1} parent=69 // pred_fallthru
          _
        %s271 = sand.u32 %s39, 1
        %s272 = sand.u32 %s39, 1
        %s273 = smul.addr %s272, 48
        %s274 = scalar_lea.vmem [#allocation2], %s273
        %p275 = pneg %p52
        %p276 = pneg %p49
        %p277 = pneg %p73
        %p278 = pneg %p70
        %p279 = pneg %p94
        %p280 = pneg %p91
        %p281 = scmp.lt.s32.totalorder %s23, 0
        %s282 = scalar_select %p281, %s23, 0
        %s283 = smul.addr %s282, 2
        %s284 = smul.addr %s283, 8
        %s285 = scalar_lea.vmem %s3, %s284
        %p286 = pneg %p120
        %p287 = pneg %p117
        %p288 = pneg %p148
        %p289 = pneg %p145
        %s290 = sand.u32 %s135, 1
        %s291 = scalar_lea.sflag [#allocation5], %s290
        %s292 = sand.u32 %s135, 1
        %s293 = smul.addr %s292, 16
        %s294 = scalar_lea.vmem [#allocation6], %s293
        %s295 = smul.u32 2, %s24
        %p296 = scmp.lt.s32.totalorder %s23, 0
        %s297 = scalar_select %p296, %s23, 0
        %s298 = smul.addr %s297, 2
        %s299 = smul.addr %s298, 8
        %s300 = scalar_lea.vmem %s3, %s299
        %s301 = smul.u32 2, %s24
        %v302 = vld [vmem:[%s300] sm:$0xff]
        %v303 = vld [vmem:[%s300 + $0x8] sm:$0xff]
        %v304 = vld [vmem:[%s2] sm:$0x1]
        %v306 = vlaneseq
        %v307 = vshrl.u32 %v306, 7
        %v308 = vsub.s32 0, %v307
        %v309 = vrot.slane %v304, %v308
        %v311 = vld [vmem:[%s263] sm:$0xff]
        %v312 = vld [vmem:[%s263 + $0x8] sm:$0xff]
        %vm313 = vcmask 130048
        %v315 = vsel %vm313, %v311, 0
        %v318 = vsel %vm313, %v312, 0
        %320 = vmatprep.subr.mxu0 0.0
        %v321 = vand.u32 %v302, 4294901760
        %322 = vmatpush1.msra.mxu0 %v321
        %323 = vmatprep.subr.mxu0 0.0
        %v324 = vand.u32 %v303, 4294901760
        %325 = vmatpush1.msra.mxu0 %v324
        %326 = vmatprep.subr.mxu0 0.0
        %327 = vmatpush1.msra.mxu0 0.0
        %328 = vmatprep.subr.mxu0 0.0
        %329 = vmatpush1.msra.mxu0 0.0
        %330 = vmatprep.subr.mxu0 0.0
        %331 = vmatpush1.msra.mxu0 0.0
        %332 = vmatprep.subr.mxu0 0.0
        %333 = vmatpush1.msra.mxu0 0.0
        %334 = vmatprep.subr.mxu0 0.0
        %335 = vmatpush1.msra.mxu0 0.0
        %336 = vmatprep.subr.mxu0 0.0
        %337 = vmatpush1.msra.mxu0 0.0
        %338 = vmatprep.subr.mxu0 0.0
        %339 = vmatpush1.msra.mxu0 0.0
        %340 = vmatprep.subr.mxu0 0.0
        %341 = vmatpush1.msra.mxu0 0.0
        %342 = vmatprep.subr.mxu0 0.0
        %343 = vmatpush1.msra.mxu0 0.0
        %344 = vmatprep.subr.mxu0 0.0
        %345 = vmatpush1.msra.mxu0 0.0
        %346 = vmatprep.subr.mxu0 0.0
        %347 = vmatpush1.msra.mxu0 0.0
        %348 = vmatprep.subr.mxu0 0.0
        %349 = vmatpush1.msra.mxu0 0.0
        %350 = vmatprep.subr.mxu0 0.0
        %351 = vmatpush1.msra.mxu0 0.0
        %352 = vmatprep.subr.mxu0 0.0
        %353 = vmatpush1.msra.mxu0 0.0
        %354 = vmatprep.subr.mxu0 0.0
        %355 = vmatpush1.msra.mxu0 0.0
        %356 = vmatprep.subr.mxu0 0.0
        %357 = vmatpush1.msra.mxu0 0.0
        %358 = vmatprep.subr.mxu0 0.0
        %359 = vmatpush1.msra.mxu0 0.0
        %360 = vmatprep.subr.mxu0 0.0
        %361 = vmatpush1.msra.mxu0 0.0
        %362 = vmatprep.subr.mxu0 0.0
        %363 = vmatpush1.msra.mxu0 0.0
        %364 = vmatprep.subr.mxu0 0.0
        %365 = vmatpush1.msra.mxu0 0.0
        %366 = vmatprep.subr.mxu0 0.0
        %367 = vmatpush1.msra.mxu0 0.0
        %368 = vmatprep.subr.mxu0 0.0
        %369 = vmatpush1.msra.mxu0 0.0
        %370 = vmatprep.subr.mxu0 0.0
        %371 = vmatpush1.msra.mxu0 0.0
        %372 = vmatprep.subr.mxu0 0.0
        %373 = vmatpush1.msra.mxu0 0.0
        %374 = vmatprep.subr.mxu0 0.0
        %375 = vmatpush1.msra.mxu0 0.0
        %376 = vmatprep.subr.mxu0 0.0
        %377 = vmatpush1.msra.mxu0 0.0
        %378 = vmatprep.subr.mxu0 0.0
        %379 = vmatpush1.msra.mxu0 0.0
        %380 = vmatprep.subr.mxu0 0.0
        %381 = vmatpush1.msra.mxu0 0.0
        %382 = vmatprep.subr.mxu0 0.0
        %383 = vmatpush1.msra.mxu0 0.0
        %384 = vmatprep.subr.mxu0 0.0
        %385 = vmatpush1.msra.mxu0 0.0
        %386 = vmatprep.mubr.f32.mxu0 0.0
        %v387 = vand.u32 %v315, 4294901760
        %v388 = vsub.f32 %v315, %v387
        %v389 = vand.u32 %v388, 4294901760
        %v390 = vsub.f32 %v388, %v389
        %v391 = vand.u32 %v390, 4294901760
        %392 = vmatmul.mubr.f32.gmra.mrb[0].mxu0 %v391
        %v393 = vpop.f32.mrb[0].mxu0
        %v394 = vadd.f32 0.0, %v393
        %v395 = vpop.f32.mrb[0].mxu0
        %396 = vmatprep.mubr.f32.mxu0 0.0
        %v397 = vand.u32 %v318, 4294901760
        %v398 = vsub.f32 %v318, %v397
        %v399 = vand.u32 %v398, 4294901760
        %v400 = vsub.f32 %v398, %v399
        %v401 = vand.u32 %v400, 4294901760
        %402 = vmatmul.mubr.f32.gmra.mrb[0].mxu0 %v401
        %v403 = vpop.f32.mrb[0].mxu0
        %v404 = vadd.f32 0.0, %v403
        %v405 = vpop.f32.mrb[0].mxu0
        %406 = vdwg.mxu0
        %407 = vmatprep.subr.mxu0 0.0
        %v408 = vand.u32 %v302, 4294901760
        %v409 = vsub.f32 %v302, %v408
        %v410 = vand.u32 %v409, 4294901760
        %v411 = vsub.f32 %v409, %v410
        %v412 = vand.u32 %v411, 4294901760
        %413 = vmatpush1.msra.mxu0 %v412
        %414 = vmatprep.subr.mxu0 0.0
        %v415 = vand.u32 %v303, 4294901760
        %v416 = vsub.f32 %v303, %v415
        %v417 = vand.u32 %v416, 4294901760
        %v418 = vsub.f32 %v416, %v417
        %v419 = vand.u32 %v418, 4294901760
        %420 = vmatpush1.msra.mxu0 %v419
        %421 = vmatprep.subr.mxu0 0.0
        %422 = vmatpush1.msra.mxu0 0.0
        %423 = vmatprep.subr.mxu0 0.0
        %424 = vmatpush1.msra.mxu0 0.0
        %425 = vmatprep.subr.mxu0 0.0
        %426 = vmatpush1.msra.mxu0 0.0
        %427 = vmatprep.subr.mxu0 0.0
        %428 = vmatpush1.msra.mxu0 0.0
        %429 = vmatprep.subr.mxu0 0.0
        %430 = vmatpush1.msra.mxu0 0.0
        %431 = vmatprep.subr.mxu0 0.0
        %432 = vmatpush1.msra.mxu0 0.0
        %433 = vmatprep.subr.mxu0 0.0
        %434 = vmatpush1.msra.mxu0 0.0
        %435 = vmatprep.subr.mxu0 0.0
        %436 = vmatpush1.msra.mxu0 0.0
        %437 = vmatprep.subr.mxu0 0.0
        %438 = vmatpush1.msra.mxu0 0.0
        %439 = vmatprep.subr.mxu0 0.0
        %440 = vmatpush1.msra.mxu0 0.0
        %441 = vmatprep.subr.mxu0 0.0
        %442 = vmatpush1.msra.mxu0 0.0
        %443 = vmatprep.subr.mxu0 0.0
        %444 = vmatpush1.msra.mxu0 0.0
        %445 = vmatprep.subr.mxu0 0.0
        %446 = vmatpush1.msra.mxu0 0.0
        %447 = vmatprep.subr.mxu0 0.0
        %448 = vmatpush1.msra.mxu0 0.0
        %449 = vmatprep.subr.mxu0 0.0
        %450 = vmatpush1.msra.mxu0 0.0
        %451 = vmatprep.subr.mxu0 0.0
        %452 = vmatpush1.msra.mxu0 0.0
        %453 = vmatprep.subr.mxu0 0.0
        %454 = vmatpush1.msra.mxu0 0.0
        %455 = vmatprep.subr.mxu0 0.0
        %456 = vmatpush1.msra.mxu0 0.0
        %457 = vmatprep.subr.mxu0 0.0
        %458 = vmatpush1.msra.mxu0 0.0
        %459 = vmatprep.subr.mxu0 0.0
        %460 = vmatpush1.msra.mxu0 0.0
        %461 = vmatprep.subr.mxu0 0.0
        %462 = vmatpush1.msra.mxu0 0.0
        %463 = vmatprep.subr.mxu0 0.0
        %464 = vmatpush1.msra.mxu0 0.0
        %465 = vmatprep.subr.mxu0 0.0
        %466 = vmatpush1.msra.mxu0 0.0
        %467 = vmatprep.subr.mxu0 0.0
        %468 = vmatpush1.msra.mxu0 0.0
        %469 = vmatprep.subr.mxu0 0.0
        %470 = vmatpush1.msra.mxu0 0.0
        %471 = vmatprep.subr.mxu0 0.0
        %472 = vmatpush1.msra.mxu0 0.0
        %473 = vmatprep.subr.mxu0 0.0
        %474 = vmatpush1.msra.mxu0 0.0
        %475 = vmatprep.subr.mxu0 0.0
        %476 = vmatpush1.msra.mxu0 0.0
        %477 = vmatprep.subr.mxu0 0.0
        %478 = vmatpush1.msra.mxu0 0.0
        %479 = vmatprep.subr.mxu0 0.0
        %480 = vmatpush1.msra.mxu0 0.0
        %481 = vmatprep.mubr.f32.mxu0 0.0
        %v482 = vand.u32 %v315, 4294901760
        %483 = vmatmul.mubr.f32.gmra.mrb[0].mxu0 %v482
        %v484 = vpop.f32.mrb[0].mxu0
        %v485 = vadd.f32 %v394, %v484
        %v486 = vpop.f32.mrb[0].mxu0
        %487 = vmatprep.mubr.f32.mxu0 0.0
        %v488 = vand.u32 %v318, 4294901760
        %489 = vmatmul.mubr.f32.gmra.mrb[0].mxu0 %v488
        %v490 = vpop.f32.mrb[0].mxu0
        %v491 = vadd.f32 %v404, %v490
        %v492 = vpop.f32.mrb[0].mxu0
        %493 = vdwg.mxu0
        %494 = vmatprep.subr.mxu0 0.0
        %v495 = vand.u32 %v302, 4294901760
        %v496 = vsub.f32 %v302, %v495
        %497 = vmatpush1.msra.mxu0 %v496
        %498 = vmatprep.subr.mxu0 0.0
        %v499 = vand.u32 %v303, 4294901760
        %v500 = vsub.f32 %v303, %v499
        %501 = vmatpush1.msra.mxu0 %v500
        %502 = vmatprep.subr.mxu0 0.0
        %503 = vmatpush1.msra.mxu0 0.0
        %504 = vmatprep.subr.mxu0 0.0
        %505 = vmatpush1.msra.mxu0 0.0
        %506 = vmatprep.subr.mxu0 0.0
        %507 = vmatpush1.msra.mxu0 0.0
        %508 = vmatprep.subr.mxu0 0.0
        %509 = vmatpush1.msra.mxu0 0.0
        %510 = vmatprep.subr.mxu0 0.0
        %511 = vmatpush1.msra.mxu0 0.0
        %512 = vmatprep.subr.mxu0 0.0
        %513 = vmatpush1.msra.mxu0 0.0
        %514 = vmatprep.subr.mxu0 0.0
        %515 = vmatpush1.msra.mxu0 0.0
        %516 = vmatprep.subr.mxu0 0.0
        %517 = vmatpush1.msra.mxu0 0.0
        %518 = vmatprep.subr.mxu0 0.0
        %519 = vmatpush1.msra.mxu0 0.0
        %520 = vmatprep.subr.mxu0 0.0
        %521 = vmatpush1.msra.mxu0 0.0
        %522 = vmatprep.subr.mxu0 0.0
        %523 = vmatpush1.msra.mxu0 0.0
        %524 = vmatprep.subr.mxu0 0.0
        %525 = vmatpush1.msra.mxu0 0.0
        %526 = vmatprep.subr.mxu0 0.0
        %527 = vmatpush1.msra.mxu0 0.0
        %528 = vmatprep.subr.mxu0 0.0
        %529 = vmatpush1.msra.mxu0 0.0
        %530 = vmatprep.subr.mxu0 0.0
        %531 = vmatpush1.msra.mxu0 0.0
        %532 = vmatprep.subr.mxu0 0.0
        %533 = vmatpush1.msra.mxu0 0.0
        %534 = vmatprep.subr.mxu0 0.0
        %535 = vmatpush1.msra.mxu0 0.0
        %536 = vmatprep.subr.mxu0 0.0
        %537 = vmatpush1.msra.mxu0 0.0
        %538 = vmatprep.subr.mxu0 0.0
        %539 = vmatpush1.msra.mxu0 0.0
        %540 = vmatprep.subr.mxu0 0.0
        %541 = vmatpush1.msra.mxu0 0.0
        %542 = vmatprep.subr.mxu0 0.0
        %543 = vmatpush1.msra.mxu0 0.0
        %544 = vmatprep.subr.mxu0 0.0
        %545 = vmatpush1.msra.mxu0 0.0
        %546 = vmatprep.subr.mxu0 0.0
        %547 = vmatpush1.msra.mxu0 0.0
        %548 = vmatprep.subr.mxu0 0.0
        %549 = vmatpush1.msra.mxu0 0.0
        %550 = vmatprep.subr.mxu0 0.0
        %551 = vmatpush1.msra.mxu0 0.0
        %552 = vmatprep.subr.mxu0 0.0
        %553 = vmatpush1.msra.mxu0 0.0
        %554 = vmatprep.subr.mxu0 0.0
        %555 = vmatpush1.msra.mxu0 0.0
        %556 = vmatprep.subr.mxu0 0.0
        %557 = vmatpush1.msra.mxu0 0.0
        %558 = vmatprep.subr.mxu0 0.0
        %559 = vmatpush1.msra.mxu0 0.0
        %560 = vmatprep.subr.mxu0 0.0
        %561 = vmatpush1.msra.mxu0 0.0
        %562 = vmatprep.mubr.f32.mxu0 0.0
        %v563 = vand.u32 %v315, 4294901760
        %v564 = vsub.f32 %v315, %v563
        %565 = vmatmul.mubr.f32.gmra.mrb[0].mxu0 %v564
        %v566 = vpop.f32.mrb[0].mxu0
        %v567 = vadd.f32 %v485, %v566
        %v568 = vpop.f32.mrb[0].mxu0
        %569 = vmatprep.mubr.f32.mxu0 0.0
        %v570 = vand.u32 %v318, 4294901760
        %v571 = vsub.f32 %v318, %v570
        %572 = vmatmul.mubr.f32.gmra.mrb[0].mxu0 %v571
        %v573 = vpop.f32.mrb[0].mxu0
        %v574 = vadd.f32 %v491, %v573
        %v575 = vpop.f32.mrb[0].mxu0
        %576 = vdwg.mxu0
        %577 = vmatprep.subr.mxu0 0.0
        %v578 = vand.u32 %v302, 4294901760
        %579 = vmatpush1.msra.mxu0 %v578
        %580 = vmatprep.subr.mxu0 0.0
        %v581 = vand.u32 %v303, 4294901760
        %582 = vmatpush1.msra.mxu0 %v581
        %583 = vmatprep.subr.mxu0 0.0
        %584 = vmatpush1.msra.mxu0 0.0
        %585 = vmatprep.subr.mxu0 0.0
        %586 = vmatpush1.msra.mxu0 0.0
        %587 = vmatprep.subr.mxu0 0.0
        %588 = vmatpush1.msra.mxu0 0.0
        %589 = vmatprep.subr.mxu0 0.0
        %590 = vmatpush1.msra.mxu0 0.0
        %591 = vmatprep.subr.mxu0 0.0
        %592 = vmatpush1.msra.mxu0 0.0
        %593 = vmatprep.subr.mxu0 0.0
        %594 = vmatpush1.msra.mxu0 0.0
        %595 = vmatprep.subr.mxu0 0.0
        %596 = vmatpush1.msra.mxu0 0.0
        %597 = vmatprep.subr.mxu0 0.0
        %598 = vmatpush1.msra.mxu0 0.0
        %599 = vmatprep.subr.mxu0 0.0
        %600 = vmatpush1.msra.mxu0 0.0
        %601 = vmatprep.subr.mxu0 0.0
        %602 = vmatpush1.msra.mxu0 0.0
        %603 = vmatprep.subr.mxu0 0.0
        %604 = vmatpush1.msra.mxu0 0.0
        %605 = vmatprep.subr.mxu0 0.0
        %606 = vmatpush1.msra.mxu0 0.0
        %607 = vmatprep.subr.mxu0 0.0
        %608 = vmatpush1.msra.mxu0 0.0
        %609 = vmatprep.subr.mxu0 0.0
        %610 = vmatpush1.msra.mxu0 0.0
        %611 = vmatprep.subr.mxu0 0.0
        %612 = vmatpush1.msra.mxu0 0.0
        %613 = vmatprep.subr.mxu0 0.0
        %614 = vmatpush1.msra.mxu0 0.0
        %615 = vmatprep.subr.mxu0 0.0
        %616 = vmatpush1.msra.mxu0 0.0
        %617 = vmatprep.subr.mxu0 0.0
        %618 = vmatpush1.msra.mxu0 0.0
        %619 = vmatprep.subr.mxu0 0.0
        %620 = vmatpush1.msra.mxu0 0.0
        %621 = vmatprep.subr.mxu0 0.0
        %622 = vmatpush1.msra.mxu0 0.0
        %623 = vmatprep.subr.mxu0 0.0
        %624 = vmatpush1.msra.mxu0 0.0
        %625 = vmatprep.subr.mxu0 0.0
        %626 = vmatpush1.msra.mxu0 0.0
        %627 = vmatprep.subr.mxu0 0.0
        %628 = vmatpush1.msra.mxu0 0.0
        %629 = vmatprep.subr.mxu0 0.0
        %630 = vmatpush1.msra.mxu0 0.0
        %631 = vmatprep.subr.mxu0 0.0
        %632 = vmatpush1.msra.mxu0 0.0
        %633 = vmatprep.subr.mxu0 0.0
        %634 = vmatpush1.msra.mxu0 0.0
        %635 = vmatprep.subr.mxu0 0.0
        %636 = vmatpush1.msra.mxu0 0.0
        %637 = vmatprep.subr.mxu0 0.0
        %638 = vmatpush1.msra.mxu0 0.0
        %639 = vmatprep.subr.mxu0 0.0
        %640 = vmatpush1.msra.mxu0 0.0
        %641 = vmatprep.subr.mxu0 0.0
        %642 = vmatpush1.msra.mxu0 0.0
        %643 = vmatprep.mubr.f32.mxu0 0.0
        %v644 = vand.u32 %v315, 4294901760
        %v645 = vsub.f32 %v315, %v644
        %v646 = vand.u32 %v645, 4294901760
        %647 = vmatmul.mubr.f32.gmra.mrb[0].mxu0 %v646
        %v648 = vpop.f32.mrb[0].mxu0
        %v649 = vadd.f32 %v567, %v648
        %v650 = vpop.f32.mrb[0].mxu0
        %651 = vmatprep.mubr.f32.mxu0 0.0
        %v652 = vand.u32 %v318, 4294901760
        %v653 = vsub.f32 %v318, %v652
        %v654 = vand.u32 %v653, 4294901760
        %655 = vmatmul.mubr.f32.gmra.mrb[0].mxu0 %v654
        %v656 = vpop.f32.mrb[0].mxu0
        %v657 = vadd.f32 %v574, %v656
        %v658 = vpop.f32.mrb[0].mxu0
        %659 = vdwg.mxu0
        %660 = vmatprep.subr.mxu0 0.0
        %v661 = vand.u32 %v302, 4294901760
        %v662 = vsub.f32 %v302, %v661
        %v663 = vand.u32 %v662, 4294901760
        %664 = vmatpush1.msra.mxu0 %v663
        %665 = vmatprep.subr.mxu0 0.0
        %v666 = vand.u32 %v303, 4294901760
        %v667 = vsub.f32 %v303, %v666
        %v668 = vand.u32 %v667, 4294901760
        %669 = vmatpush1.msra.mxu0 %v668
        %670 = vmatprep.subr.mxu0 0.0
        %671 = vmatpush1.msra.mxu0 0.0
        %672 = vmatprep.subr.mxu0 0.0
        %673 = vmatpush1.msra.mxu0 0.0
        %674 = vmatprep.subr.mxu0 0.0
        %675 = vmatpush1.msra.mxu0 0.0
        %676 = vmatprep.subr.mxu0 0.0
        %677 = vmatpush1.msra.mxu0 0.0
        %678 = vmatprep.subr.mxu0 0.0
        %679 = vmatpush1.msra.mxu0 0.0
        %680 = vmatprep.subr.mxu0 0.0
        %681 = vmatpush1.msra.mxu0 0.0
        %682 = vmatprep.subr.mxu0 0.0
        %683 = vmatpush1.msra.mxu0 0.0
        %684 = vmatprep.subr.mxu0 0.0
        %685 = vmatpush1.msra.mxu0 0.0
        %686 = vmatprep.subr.mxu0 0.0
        %687 = vmatpush1.msra.mxu0 0.0
        %688 = vmatprep.subr.mxu0 0.0
        %689 = vmatpush1.msra.mxu0 0.0
        %690 = vmatprep.subr.mxu0 0.0
        %691 = vmatpush1.msra.mxu0 0.0
        %692 = vmatprep.subr.mxu0 0.0
        %693 = vmatpush1.msra.mxu0 0.0
        %694 = vmatprep.subr.mxu0 0.0
        %695 = vmatpush1.msra.mxu0 0.0
        %696 = vmatprep.subr.mxu0 0.0
        %697 = vmatpush1.msra.mxu0 0.0
        %698 = vmatprep.subr.mxu0 0.0
        %699 = vmatpush1.msra.mxu0 0.0
        %700 = vmatprep.subr.mxu0 0.0
        %701 = vmatpush1.msra.mxu0 0.0
        %702 = vmatprep.subr.mxu0 0.0
        %703 = vmatpush1.msra.mxu0 0.0
        %704 = vmatprep.subr.mxu0 0.0
        %705 = vmatpush1.msra.mxu0 0.0
        %706 = vmatprep.subr.mxu0 0.0
        %707 = vmatpush1.msra.mxu0 0.0
        %708 = vmatprep.subr.mxu0 0.0
        %709 = vmatpush1.msra.mxu0 0.0
        %710 = vmatprep.subr.mxu0 0.0
        %711 = vmatpush1.msra.mxu0 0.0
        %712 = vmatprep.subr.mxu0 0.0
        %713 = vmatpush1.msra.mxu0 0.0
        %714 = vmatprep.subr.mxu0 0.0
        %715 = vmatpush1.msra.mxu0 0.0
        %716 = vmatprep.subr.mxu0 0.0
        %717 = vmatpush1.msra.mxu0 0.0
        %718 = vmatprep.subr.mxu0 0.0
        %719 = vmatpush1.msra.mxu0 0.0
        %720 = vmatprep.subr.mxu0 0.0
        %721 = vmatpush1.msra.mxu0 0.0
        %722 = vmatprep.subr.mxu0 0.0
        %723 = vmatpush1.msra.mxu0 0.0
        %724 = vmatprep.subr.mxu0 0.0
        %725 = vmatpush1.msra.mxu0 0.0
        %726 = vmatprep.subr.mxu0 0.0
        %727 = vmatpush1.msra.mxu0 0.0
        %728 = vmatprep.subr.mxu0 0.0
        %729 = vmatpush1.msra.mxu0 0.0
        %730 = vmatprep.mubr.f32.mxu0 0.0
        %v731 = vand.u32 %v315, 4294901760
        %732 = vmatmul.mubr.f32.gmra.mrb[0].mxu0 %v731
        %v733 = vpop.f32.mrb[0].mxu0
        %v734 = vadd.f32 %v649, %v733
        %v735 = vpop.f32.mrb[0].mxu0
        %736 = vmatprep.mubr.f32.mxu0 0.0
        %v737 = vand.u32 %v318, 4294901760
        %738 = vmatmul.mubr.f32.gmra.mrb[0].mxu0 %v737
        %v739 = vpop.f32.mrb[0].mxu0
        %v740 = vadd.f32 %v657, %v739
        %v741 = vpop.f32.mrb[0].mxu0
        %742 = vdwg.mxu0
        %743 = vmatprep.subr.mxu0 0.0
        %v744 = vand.u32 %v302, 4294901760
        %745 = vmatpush1.msra.mxu0 %v744
        %746 = vmatprep.subr.mxu0 0.0
        %v747 = vand.u32 %v303, 4294901760
        %748 = vmatpush1.msra.mxu0 %v747
        %749 = vmatprep.subr.mxu0 0.0
        %750 = vmatpush1.msra.mxu0 0.0
        %751 = vmatprep.subr.mxu0 0.0
        %752 = vmatpush1.msra.mxu0 0.0
        %753 = vmatprep.subr.mxu0 0.0
        %754 = vmatpush1.msra.mxu0 0.0
        %755 = vmatprep.subr.mxu0 0.0
        %756 = vmatpush1.msra.mxu0 0.0
        %757 = vmatprep.subr.mxu0 0.0
        %758 = vmatpush1.msra.mxu0 0.0
        %759 = vmatprep.subr.mxu0 0.0
        %760 = vmatpush1.msra.mxu0 0.0
        %761 = vmatprep.subr.mxu0 0.0
        %762 = vmatpush1.msra.mxu0 0.0
        %763 = vmatprep.subr.mxu0 0.0
        %764 = vmatpush1.msra.mxu0 0.0
        %765 = vmatprep.subr.mxu0 0.0
        %766 = vmatpush1.msra.mxu0 0.0
        %767 = vmatprep.subr.mxu0 0.0
        %768 = vmatpush1.msra.mxu0 0.0
        %769 = vmatprep.subr.mxu0 0.0
        %770 = vmatpush1.msra.mxu0 0.0
        %771 = vmatprep.subr.mxu0 0.0
        %772 = vmatpush1.msra.mxu0 0.0
        %773 = vmatprep.subr.mxu0 0.0
        %774 = vmatpush1.msra.mxu0 0.0
        %775 = vmatprep.subr.mxu0 0.0
        %776 = vmatpush1.msra.mxu0 0.0
        %777 = vmatprep.subr.mxu0 0.0
        %778 = vmatpush1.msra.mxu0 0.0
        %779 = vmatprep.subr.mxu0 0.0
        %780 = vmatpush1.msra.mxu0 0.0
        %781 = vmatprep.subr.mxu0 0.0
        %782 = vmatpush1.msra.mxu0 0.0
        %783 = vmatprep.subr.mxu0 0.0
        %784 = vmatpush1.msra.mxu0 0.0
        %785 = vmatprep.subr.mxu0 0.0
        %786 = vmatpush1.msra.mxu0 0.0
        %787 = vmatprep.subr.mxu0 0.0
        %788 = vmatpush1.msra.mxu0 0.0
        %789 = vmatprep.subr.mxu0 0.0
        %790 = vmatpush1.msra.mxu0 0.0
        %791 = vmatprep.subr.mxu0 0.0
        %792 = vmatpush1.msra.mxu0 0.0
        %793 = vmatprep.subr.mxu0 0.0
        %794 = vmatpush1.msra.mxu0 0.0
        %795 = vmatprep.subr.mxu0 0.0
        %796 = vmatpush1.msra.mxu0 0.0
        %797 = vmatprep.subr.mxu0 0.0
        %798 = vmatpush1.msra.mxu0 0.0
        %799 = vmatprep.subr.mxu0 0.0
        %800 = vmatpush1.msra.mxu0 0.0
        %801 = vmatprep.subr.mxu0 0.0
        %802 = vmatpush1.msra.mxu0 0.0
        %803 = vmatprep.subr.mxu0 0.0
        %804 = vmatpush1.msra.mxu0 0.0
        %805 = vmatprep.subr.mxu0 0.0
        %806 = vmatpush1.msra.mxu0 0.0
        %807 = vmatprep.subr.mxu0 0.0
        %808 = vmatpush1.msra.mxu0 0.0
        %809 = vmatprep.mubr.f32.mxu0 0.0
        %v810 = vand.u32 %v315, 4294901760
        %811 = vmatmul.mubr.f32.gmra.mrb[0].mxu0 %v810
        %v812 = vpop.f32.mrb[0].mxu0
        %v813 = vadd.f32 %v734, %v812
        %v814 = vpop.f32.mrb[0].mxu0
        %815 = vmatprep.mubr.f32.mxu0 0.0
        %v816 = vand.u32 %v318, 4294901760
        %817 = vmatmul.mubr.f32.gmra.mrb[0].mxu0 %v816
        %v818 = vpop.f32.mrb[0].mxu0
        %v819 = vadd.f32 %v740, %v818
        %v820 = vpop.f32.mrb[0].mxu0
        %821 = vdwg.mxu0
        %v822 = vld [vmem:[#allocation3] sm:$0xff]
        %v823 = vld [vmem:[#allocation3 + $0x8] sm:$0xff]
        %v824 = vld [vmem:[#allocation3 + $0x10] sm:$0xff]
        %v825 = vld [vmem:[#allocation3 + $0x18] sm:$0xff]
        %v826 = vld [vmem:[#allocation3 + $0x20] sm:$0xff]
        %v827 = vld [vmem:[#allocation3 + $0x28] sm:$0xff]
        %v828 = vld [vmem:[#allocation3 + $0x30] sm:$0xff]
        %v829 = vld [vmem:[#allocation3 + $0x38] sm:$0xff]
        %v830 = vld [vmem:[#allocation3 + $0x40] sm:$0xff]
        %v831 = vld [vmem:[#allocation3 + $0x48] sm:$0xff]
        %v832 = vld [vmem:[#allocation3 + $0x50] sm:$0xff]
        %v833 = vld [vmem:[#allocation3 + $0x58] sm:$0xff]
        %v834 = vld [vmem:[#allocation3 + $0x60] sm:$0xff]
        %v835 = vld [vmem:[#allocation3 + $0x68] sm:$0xff]
        %v836 = vld [vmem:[#allocation3 + $0x70] sm:$0xff]
        %v837 = vld [vmem:[#allocation3 + $0x78] sm:$0xff]
        %838 = vmatprep.subr.mxu0 0.0
        %v839 = vand.u32 %v822, 4294901760
        %840 = vmatpush1.msra.mxu0 %v839
        %841 = vmatprep.subr.mxu0 0.0
        %v842 = vand.u32 %v823, 4294901760
        %843 = vmatpush1.msra.mxu0 %v842
        %844 = vmatprep.subr.mxu0 0.0
        %v845 = vand.u32 %v824, 4294901760
        %846 = vmatpush1.msra.mxu0 %v845
        %847 = vmatprep.subr.mxu0 0.0
        %v848 = vand.u32 %v825, 4294901760
        %849 = vmatpush1.msra.mxu0 %v848
        %850 = vmatprep.subr.mxu0 0.0
        %v851 = vand.u32 %v826, 4294901760
        %852 = vmatpush1.msra.mxu0 %v851
        %853 = vmatprep.subr.mxu0 0.0
        %v854 = vand.u32 %v827, 4294901760
        %855 = vmatpush1.msra.mxu0 %v854
        %856 = vmatprep.subr.mxu0 0.0
        %v857 = vand.u32 %v828, 4294901760
        %858 = vmatpush1.msra.mxu0 %v857
        %859 = vmatprep.subr.mxu0 0.0
        %v860 = vand.u32 %v829, 4294901760
        %861 = vmatpush1.msra.mxu0 %v860
        %862 = vmatprep.subr.mxu0 0.0
        %v863 = vand.u32 %v830, 4294901760
        %864 = vmatpush1.msra.mxu0 %v863
        %865 = vmatprep.subr.mxu0 0.0
        %v866 = vand.u32 %v831, 4294901760
        %867 = vmatpush1.msra.mxu0 %v866
        %868 = vmatprep.subr.mxu0 0.0
        %v869 = vand.u32 %v832, 4294901760
        %870 = vmatpush1.msra.mxu0 %v869
        %871 = vmatprep.subr.mxu0 0.0
        %v872 = vand.u32 %v833, 4294901760
        %873 = vmatpush1.msra.mxu0 %v872
        %874 = vmatprep.subr.mxu0 0.0
        %v875 = vand.u32 %v834, 4294901760
        %876 = vmatpush1.msra.mxu0 %v875
        %877 = vmatprep.subr.mxu0 0.0
        %v878 = vand.u32 %v835, 4294901760
        %879 = vmatpush1.msra.mxu0 %v878
        %880 = vmatprep.subr.mxu0 0.0
        %v881 = vand.u32 %v836, 4294901760
        %882 = vmatpush1.msra.mxu0 %v881
        %883 = vmatprep.subr.mxu0 0.0
        %v884 = vand.u32 %v837, 4294901760
        %885 = vmatpush1.msra.mxu0 %v884
        %886 = vmatprep.subr.mxu0 0.0
        %887 = vmatpush1.msra.mxu0 0.0
        %888 = vmatprep.subr.mxu0 0.0
        %889 = vmatpush1.msra.mxu0 0.0
        %890 = vmatprep.subr.mxu0 0.0
        %891 = vmatpush1.msra.mxu0 0.0
        %892 = vmatprep.subr.mxu0 0.0
        %893 = vmatpush1.msra.mxu0 0.0
        %894 = vmatprep.subr.mxu0 0.0
        %895 = vmatpush1.msra.mxu0 0.0
        %896 = vmatprep.subr.mxu0 0.0
        %897 = vmatpush1.msra.mxu0 0.0
        %898 = vmatprep.subr.mxu0 0.0
        %899 = vmatpush1.msra.mxu0 0.0
        %900 = vmatprep.subr.mxu0 0.0
        %901 = vmatpush1.msra.mxu0 0.0
        %902 = vmatprep.subr.mxu0 0.0
        %903 = vmatpush1.msra.mxu0 0.0
        %904 = vmatprep.subr.mxu0 0.0
        %905 = vmatpush1.msra.mxu0 0.0
        %906 = vmatprep.subr.mxu0 0.0
        %907 = vmatpush1.msra.mxu0 0.0
        %908 = vmatprep.subr.mxu0 0.0
        %909 = vmatpush1.msra.mxu0 0.0
        %910 = vmatprep.subr.mxu0 0.0
        %911 = vmatpush1.msra.mxu0 0.0
        %912 = vmatprep.subr.mxu0 0.0
        %913 = vmatpush1.msra.mxu0 0.0
        %914 = vmatprep.subr.mxu0 0.0
        %915 = vmatpush1.msra.mxu0 0.0
        %916 = vmatprep.subr.mxu0 0.0
        %917 = vmatpush1.msra.mxu0 0.0
        %918 = vmatprep.mubr.f32.mxu0 0.0
        %v919 = vand.u32 %v813, 4294901760
        %v920 = vsub.f32 %v813, %v919
        %v921 = vand.u32 %v920, 4294901760
        %v922 = vsub.f32 %v920, %v921
        %v923 = vand.u32 %v922, 4294901760
        %924 = vmatmul.mubr.f32.gmra.mrb[0].mxu0 %v923
        %v925 = vpop.f32.mrb[0].mxu0
        %v926 = vadd.f32 0.0, %v925
        %v927 = vpop.f32.mrb[0].mxu0
        %928 = vmatprep.mubr.f32.mxu0 0.0
        %v929 = vand.u32 %v819, 4294901760
        %v930 = vsub.f32 %v819, %v929
        %v931 = vand.u32 %v930, 4294901760
        %v932 = vsub.f32 %v930, %v931
        %v933 = vand.u32 %v932, 4294901760
        %934 = vmatmul.mubr.f32.gmra.mrb[0].mxu0 %v933
        %v935 = vpop.f32.mrb[0].mxu0
        %v936 = vadd.f32 0.0, %v935
        %v937 = vpop.f32.mrb[0].mxu0
        %938 = vdwg.mxu0
        %939 = vmatprep.subr.mxu0 0.0
        %v940 = vand.u32 %v822, 4294901760
        %v941 = vsub.f32 %v822, %v940
        %v942 = vand.u32 %v941, 4294901760
        %v943 = vsub.f32 %v941, %v942
        %v944 = vand.u32 %v943, 4294901760
        %945 = vmatpush1.msra.mxu0 %v944
        %946 = vmatprep.subr.mxu0 0.0
        %v947 = vand.u32 %v823, 4294901760
        %v948 = vsub.f32 %v823, %v947
        %v949 = vand.u32 %v948, 4294901760
        %v950 = vsub.f32 %v948, %v949
        %v951 = vand.u32 %v950, 4294901760
        %952 = vmatpush1.msra.mxu0 %v951
        %953 = vmatprep.subr.mxu0 0.0
        %v954 = vand.u32 %v824, 4294901760
        %v955 = vsub.f32 %v824, %v954
        %v956 = vand.u32 %v955, 4294901760
        %v957 = vsub.f32 %v955, %v956
        %v958 = vand.u32 %v957, 4294901760
        %959 = vmatpush1.msra.mxu0 %v958
        %960 = vmatprep.subr.mxu0 0.0
        %v961 = vand.u32 %v825, 4294901760
        %v962 = vsub.f32 %v825, %v961
        %v963 = vand.u32 %v962, 4294901760
        %v964 = vsub.f32 %v962, %v963
        %v965 = vand.u32 %v964, 4294901760
        %966 = vmatpush1.msra.mxu0 %v965
        %967 = vmatprep.subr.mxu0 0.0
        %v968 = vand.u32 %v826, 4294901760
        %v969 = vsub.f32 %v826, %v968
        %v970 = vand.u32 %v969, 4294901760
        %v971 = vsub.f32 %v969, %v970
        %v972 = vand.u32 %v971, 4294901760
        %973 = vmatpush1.msra.mxu0 %v972
        %974 = vmatprep.subr.mxu0 0.0
        %v975 = vand.u32 %v827, 4294901760
        %v976 = vsub.f32 %v827, %v975
        %v977 = vand.u32 %v976, 4294901760
        %v978 = vsub.f32 %v976, %v977
        %v979 = vand.u32 %v978, 4294901760
        %980 = vmatpush1.msra.mxu0 %v979
        %981 = vmatprep.subr.mxu0 0.0
        %v982 = vand.u32 %v828, 4294901760
        %v983 = vsub.f32 %v828, %v982
        %v984 = vand.u32 %v983, 4294901760
        %v985 = vsub.f32 %v983, %v984
        %v986 = vand.u32 %v985, 4294901760
        %987 = vmatpush1.msra.mxu0 %v986
        %988 = vmatprep.subr.mxu0 0.0
        %v989 = vand.u32 %v829, 4294901760
        %v990 = vsub.f32 %v829, %v989
        %v991 = vand.u32 %v990, 4294901760
        %v992 = vsub.f32 %v990, %v991
        %v993 = vand.u32 %v992, 4294901760
        %994 = vmatpush1.msra.mxu0 %v993
        %995 = vmatprep.subr.mxu0 0.0
        %v996 = vand.u32 %v830, 4294901760
        %v997 = vsub.f32 %v830, %v996
        %v998 = vand.u32 %v997, 4294901760
        %v999 = vsub.f32 %v997, %v998
        %v1000 = vand.u32 %v999, 4294901760
        %1001 = vmatpush1.msra.mxu0 %v1000
        %1002 = vmatprep.subr.mxu0 0.0
        %v1003 = vand.u32 %v831, 4294901760
        %v1004 = vsub.f32 %v831, %v1003
        %v1005 = vand.u32 %v1004, 4294901760
        %v1006 = vsub.f32 %v1004, %v1005
        %v1007 = vand.u32 %v1006, 4294901760
        %1008 = vmatpush1.msra.mxu0 %v1007
        %1009 = vmatprep.subr.mxu0 0.0
        %v1010 = vand.u32 %v832, 4294901760
        %v1011 = vsub.f32 %v832, %v1010
        %v1012 = vand.u32 %v1011, 4294901760
        %v1013 = vsub.f32 %v1011, %v1012
        %v1014 = vand.u32 %v1013, 4294901760
        %1015 = vmatpush1.msra.mxu0 %v1014
        %1016 = vmatprep.subr.mxu0 0.0
        %v1017 = vand.u32 %v833, 4294901760
        %v1018 = vsub.f32 %v833, %v1017
        %v1019 = vand.u32 %v1018, 4294901760
        %v1020 = vsub.f32 %v1018, %v1019
        %v1021 = vand.u32 %v1020, 4294901760
        %1022 = vmatpush1.msra.mxu0 %v1021
        %1023 = vmatprep.subr.mxu0 0.0
        %v1024 = vand.u32 %v834, 4294901760
        %v1025 = vsub.f32 %v834, %v1024
        %v1026 = vand.u32 %v1025, 4294901760
        %v1027 = vsub.f32 %v1025, %v1026
        %v1028 = vand.u32 %v1027, 4294901760
        %1029 = vmatpush1.msra.mxu0 %v1028
        %1030 = vmatprep.subr.mxu0 0.0
        %v1031 = vand.u32 %v835, 4294901760
        %v1032 = vsub.f32 %v835, %v1031
        %v1033 = vand.u32 %v1032, 4294901760
        %v1034 = vsub.f32 %v1032, %v1033
        %v1035 = vand.u32 %v1034, 4294901760
        %1036 = vmatpush1.msra.mxu0 %v1035
        %1037 = vmatprep.subr.mxu0 0.0
        %v1038 = vand.u32 %v836, 4294901760
        %v1039 = vsub.f32 %v836, %v1038
        %v1040 = vand.u32 %v1039, 4294901760
        %v1041 = vsub.f32 %v1039, %v1040
        %v1042 = vand.u32 %v1041, 4294901760
        %1043 = vmatpush1.msra.mxu0 %v1042
        %1044 = vmatprep.subr.mxu0 0.0
        %v1045 = vand.u32 %v837, 4294901760
        %v1046 = vsub.f32 %v837, %v1045
        %v1047 = vand.u32 %v1046, 4294901760
        %v1048 = vsub.f32 %v1046, %v1047
        %v1049 = vand.u32 %v1048, 4294901760
        %1050 = vmatpush1.msra.mxu0 %v1049
        %1051 = vmatprep.subr.mxu0 0.0
        %1052 = vmatpush1.msra.mxu0 0.0
        %1053 = vmatprep.subr.mxu0 0.0
        %1054 = vmatpush1.msra.mxu0 0.0
        %1055 = vmatprep.subr.mxu0 0.0
        %1056 = vmatpush1.msra.mxu0 0.0
        %1057 = vmatprep.subr.mxu0 0.0
        %1058 = vmatpush1.msra.mxu0 0.0
        %1059 = vmatprep.subr.mxu0 0.0
        %1060 = vmatpush1.msra.mxu0 0.0
        %1061 = vmatprep.subr.mxu0 0.0
        %1062 = vmatpush1.msra.mxu0 0.0
        %1063 = vmatprep.subr.mxu0 0.0
        %1064 = vmatpush1.msra.mxu0 0.0
        %1065 = vmatprep.subr.mxu0 0.0
        %1066 = vmatpush1.msra.mxu0 0.0
        %1067 = vmatprep.subr.mxu0 0.0
        %1068 = vmatpush1.msra.mxu0 0.0
        %1069 = vmatprep.subr.mxu0 0.0
        %1070 = vmatpush1.msra.mxu0 0.0
        %1071 = vmatprep.subr.mxu0 0.0
        %1072 = vmatpush1.msra.mxu0 0.0
        %1073 = vmatprep.subr.mxu0 0.0
        %1074 = vmatpush1.msra.mxu0 0.0
        %1075 = vmatprep.subr.mxu0 0.0
        %1076 = vmatpush1.msra.mxu0 0.0
        %1077 = vmatprep.subr.mxu0 0.0
        %1078 = vmatpush1.msra.mxu0 0.0
        %1079 = vmatprep.subr.mxu0 0.0
        %1080 = vmatpush1.msra.mxu0 0.0
        %1081 = vmatprep.subr.mxu0 0.0
        %1082 = vmatpush1.msra.mxu0 0.0
        %1083 = vmatprep.mubr.f32.mxu0 0.0
        %v1084 = vand.u32 %v813, 4294901760
        %1085 = vmatmul.mubr.f32.gmra.mrb[0].mxu0 %v1084
        %v1086 = vpop.f32.mrb[0].mxu0
        %v1087 = vadd.f32 %v926, %v1086
        %v1088 = vpop.f32.mrb[0].mxu0
        %1089 = vmatprep.mubr.f32.mxu0 0.0
        %v1090 = vand.u32 %v819, 4294901760
        %1091 = vmatmul.mubr.f32.gmra.mrb[0].mxu0 %v1090
        %v1092 = vpop.f32.mrb[0].mxu0
        %v1093 = vadd.f32 %v936, %v1092
        %v1094 = vpop.f32.mrb[0].mxu0
        %1095 = vdwg.mxu0
        %1096 = vmatprep.subr.mxu0 0.0
        %v1097 = vand.u32 %v822, 4294901760
        %v1098 = vsub.f32 %v822, %v1097
        %1099 = vmatpush1.msra.mxu0 %v1098
        %1100 = vmatprep.subr.mxu0 0.0
        %v1101 = vand.u32 %v823, 4294901760
        %v1102 = vsub.f32 %v823, %v1101
        %1103 = vmatpush1.msra.mxu0 %v1102
        %1104 = vmatprep.subr.mxu0 0.0
        %v1105 = vand.u32 %v824, 4294901760
        %v1106 = vsub.f32 %v824, %v1105
        %1107 = vmatpush1.msra.mxu0 %v1106
        %1108 = vmatprep.subr.mxu0 0.0
        %v1109 = vand.u32 %v825, 4294901760
        %v1110 = vsub.f32 %v825, %v1109
        %1111 = vmatpush1.msra.mxu0 %v1110
        %1112 = vmatprep.subr.mxu0 0.0
        %v1113 = vand.u32 %v826, 4294901760
        %v1114 = vsub.f32 %v826, %v1113
        %1115 = vmatpush1.msra.mxu0 %v1114
        %1116 = vmatprep.subr.mxu0 0.0
        %v1117 = vand.u32 %v827, 4294901760
        %v1118 = vsub.f32 %v827, %v1117
        %1119 = vmatpush1.msra.mxu0 %v1118
        %1120 = vmatprep.subr.mxu0 0.0
        %v1121 = vand.u32 %v828, 4294901760
        %v1122 = vsub.f32 %v828, %v1121
        %1123 = vmatpush1.msra.mxu0 %v1122
        %1124 = vmatprep.subr.mxu0 0.0
        %v1125 = vand.u32 %v829, 4294901760
        %v1126 = vsub.f32 %v829, %v1125
        %1127 = vmatpush1.msra.mxu0 %v1126
        %1128 = vmatprep.subr.mxu0 0.0
        %v1129 = vand.u32 %v830, 4294901760
        %v1130 = vsub.f32 %v830, %v1129
        %1131 = vmatpush1.msra.mxu0 %v1130
        %1132 = vmatprep.subr.mxu0 0.0
        %v1133 = vand.u32 %v831, 4294901760
        %v1134 = vsub.f32 %v831, %v1133
        %1135 = vmatpush1.msra.mxu0 %v1134
        %1136 = vmatprep.subr.mxu0 0.0
        %v1137 = vand.u32 %v832, 4294901760
        %v1138 = vsub.f32 %v832, %v1137
        %1139 = vmatpush1.msra.mxu0 %v1138
        %1140 = vmatprep.subr.mxu0 0.0
        %v1141 = vand.u32 %v833, 4294901760
        %v1142 = vsub.f32 %v833, %v1141
        %1143 = vmatpush1.msra.mxu0 %v1142
        %1144 = vmatprep.subr.mxu0 0.0
        %v1145 = vand.u32 %v834, 4294901760
        %v1146 = vsub.f32 %v834, %v1145
        %1147 = vmatpush1.msra.mxu0 %v1146
        %1148 = vmatprep.subr.mxu0 0.0
        %v1149 = vand.u32 %v835, 4294901760
        %v1150 = vsub.f32 %v835, %v1149
        %1151 = vmatpush1.msra.mxu0 %v1150
        %1152 = vmatprep.subr.mxu0 0.0
        %v1153 = vand.u32 %v836, 4294901760
        %v1154 = vsub.f32 %v836, %v1153
        %1155 = vmatpush1.msra.mxu0 %v1154
        %1156 = vmatprep.subr.mxu0 0.0
        %v1157 = vand.u32 %v837, 4294901760
        %v1158 = vsub.f32 %v837, %v1157
        %1159 = vmatpush1.msra.mxu0 %v1158
        %1160 = vmatprep.subr.mxu0 0.0
        %1161 = vmatpush1.msra.mxu0 0.0
        %1162 = vmatprep.subr.mxu0 0.0
        %1163 = vmatpush1.msra.mxu0 0.0
        %1164 = vmatprep.subr.mxu0 0.0
        %1165 = vmatpush1.msra.mxu0 0.0
        %1166 = vmatprep.subr.mxu0 0.0
        %1167 = vmatpush1.msra.mxu0 0.0
        %1168 = vmatprep.subr.mxu0 0.0
        %1169 = vmatpush1.msra.mxu0 0.0
        %1170 = vmatprep.subr.mxu0 0.0
        %1171 = vmatpush1.msra.mxu0 0.0
        %1172 = vmatprep.subr.mxu0 0.0
        %1173 = vmatpush1.msra.mxu0 0.0
        %1174 = vmatprep.subr.mxu0 0.0
        %1175 = vmatpush1.msra.mxu0 0.0
        %1176 = vmatprep.subr.mxu0 0.0
        %1177 = vmatpush1.msra.mxu0 0.0
        %1178 = vmatprep.subr.mxu0 0.0
        %1179 = vmatpush1.msra.mxu0 0.0
        %1180 = vmatprep.subr.mxu0 0.0
        %1181 = vmatpush1.msra.mxu0 0.0
        %1182 = vmatprep.subr.mxu0 0.0
        %1183 = vmatpush1.msra.mxu0 0.0
        %1184 = vmatprep.subr.mxu0 0.0
        %1185 = vmatpush1.msra.mxu0 0.0
        %1186 = vmatprep.subr.mxu0 0.0
        %1187 = vmatpush1.msra.mxu0 0.0
        %1188 = vmatprep.subr.mxu0 0.0
        %1189 = vmatpush1.msra.mxu0 0.0
        %1190 = vmatprep.subr.mxu0 0.0
        %1191 = vmatpush1.msra.mxu0 0.0
        %1192 = vmatprep.mubr.f32.mxu0 0.0
        %v1193 = vand.u32 %v813, 4294901760
        %v1194 = vsub.f32 %v813, %v1193
        %1195 = vmatmul.mubr.f32.gmra.mrb[0].mxu0 %v1194
        %v1196 = vpop.f32.mrb[0].mxu0
        %v1197 = vadd.f32 %v1087, %v1196
        %v1198 = vpop.f32.mrb[0].mxu0
        %1199 = vmatprep.mubr.f32.mxu0 0.0
        %v1200 = vand.u32 %v819, 4294901760
        %v1201 = vsub.f32 %v819, %v1200
        %1202 = vmatmul.mubr.f32.gmra.mrb[0].mxu0 %v1201
        %v1203 = vpop.f32.mrb[0].mxu0
        %v1204 = vadd.f32 %v1093, %v1203
        %v1205 = vpop.f32.mrb[0].mxu0
        %1206 = vdwg.mxu0
        %1207 = vmatprep.subr.mxu0 0.0
        %v1208 = vand.u32 %v822, 4294901760
        %1209 = vmatpush1.msra.mxu0 %v1208
        %1210 = vmatprep.subr.mxu0 0.0
        %v1211 = vand.u32 %v823, 4294901760
        %1212 = vmatpush1.msra.mxu0 %v1211
        %1213 = vmatprep.subr.mxu0 0.0
        %v1214 = vand.u32 %v824, 4294901760
        %1215 = vmatpush1.msra.mxu0 %v1214
        %1216 = vmatprep.subr.mxu0 0.0
        %v1217 = vand.u32 %v825, 4294901760
        %1218 = vmatpush1.msra.mxu0 %v1217
        %1219 = vmatprep.subr.mxu0 0.0
        %v1220 = vand.u32 %v826, 4294901760
        %1221 = vmatpush1.msra.mxu0 %v1220
        %1222 = vmatprep.subr.mxu0 0.0
        %v1223 = vand.u32 %v827, 4294901760
        %1224 = vmatpush1.msra.mxu0 %v1223
        %1225 = vmatprep.subr.mxu0 0.0
        %v1226 = vand.u32 %v828, 4294901760
        %1227 = vmatpush1.msra.mxu0 %v1226
        %1228 = vmatprep.subr.mxu0 0.0
        %v1229 = vand.u32 %v829, 4294901760
        %1230 = vmatpush1.msra.mxu0 %v1229
        %1231 = vmatprep.subr.mxu0 0.0
        %v1232 = vand.u32 %v830, 4294901760
        %1233 = vmatpush1.msra.mxu0 %v1232
        %1234 = vmatprep.subr.mxu0 0.0
        %v1235 = vand.u32 %v831, 4294901760
        %1236 = vmatpush1.msra.mxu0 %v1235
        %1237 = vmatprep.subr.mxu0 0.0
        %v1238 = vand.u32 %v832, 4294901760
        %1239 = vmatpush1.msra.mxu0 %v1238
        %1240 = vmatprep.subr.mxu0 0.0
        %v1241 = vand.u32 %v833, 4294901760
        %1242 = vmatpush1.msra.mxu0 %v1241
        %1243 = vmatprep.subr.mxu0 0.0
        %v1244 = vand.u32 %v834, 4294901760
        %1245 = vmatpush1.msra.mxu0 %v1244
        %1246 = vmatprep.subr.mxu0 0.0
        %v1247 = vand.u32 %v835, 4294901760
        %1248 = vmatpush1.msra.mxu0 %v1247
        %1249 = vmatprep.subr.mxu0 0.0
        %v1250 = vand.u32 %v836, 4294901760
        %1251 = vmatpush1.msra.mxu0 %v1250
        %1252 = vmatprep.subr.mxu0 0.0
        %v1253 = vand.u32 %v837, 4294901760
        %1254 = vmatpush1.msra.mxu0 %v1253
        %1255 = vmatprep.subr.mxu0 0.0
        %1256 = vmatpush1.msra.mxu0 0.0
        %1257 = vmatprep.subr.mxu0 0.0
        %1258 = vmatpush1.msra.mxu0 0.0
        %1259 = vmatprep.subr.mxu0 0.0
        %1260 = vmatpush1.msra.mxu0 0.0
        %1261 = vmatprep.subr.mxu0 0.0
        %1262 = vmatpush1.msra.mxu0 0.0
        %1263 = vmatprep.subr.mxu0 0.0
        %1264 = vmatpush1.msra.mxu0 0.0
        %1265 = vmatprep.subr.mxu0 0.0
        %1266 = vmatpush1.msra.mxu0 0.0
        %1267 = vmatprep.subr.mxu0 0.0
        %1268 = vmatpush1.msra.mxu0 0.0
        %1269 = vmatprep.subr.mxu0 0.0
        %1270 = vmatpush1.msra.mxu0 0.0
        %1271 = vmatprep.subr.mxu0 0.0
        %1272 = vmatpush1.msra.mxu0 0.0
        %1273 = vmatprep.subr.mxu0 0.0
        %1274 = vmatpush1.msra.mxu0 0.0
        %1275 = vmatprep.subr.mxu0 0.0
        %1276 = vmatpush1.msra.mxu0 0.0
        %1277 = vmatprep.subr.mxu0 0.0
        %1278 = vmatpush1.msra.mxu0 0.0
        %1279 = vmatprep.subr.mxu0 0.0
        %1280 = vmatpush1.msra.mxu0 0.0
        %1281 = vmatprep.subr.mxu0 0.0
        %1282 = vmatpush1.msra.mxu0 0.0
        %1283 = vmatprep.subr.mxu0 0.0
        %1284 = vmatpush1.msra.mxu0 0.0
        %1285 = vmatprep.subr.mxu0 0.0
        %1286 = vmatpush1.msra.mxu0 0.0
        %1287 = vmatprep.mubr.f32.mxu0 0.0
        %v1288 = vand.u32 %v813, 4294901760
        %v1289 = vsub.f32 %v813, %v1288
        %v1290 = vand.u32 %v1289, 4294901760
        %1291 = vmatmul.mubr.f32.gmra.mrb[0].mxu0 %v1290
        %v1292 = vpop.f32.mrb[0].mxu0
        %v1293 = vadd.f32 %v1197, %v1292
        %v1294 = vpop.f32.mrb[0].mxu0
        %1295 = vmatprep.mubr.f32.mxu0 0.0
        %v1296 = vand.u32 %v819, 4294901760
        %v1297 = vsub.f32 %v819, %v1296
        %v1298 = vand.u32 %v1297, 4294901760
        %1299 = vmatmul.mubr.f32.gmra.mrb[0].mxu0 %v1298
        %v1300 = vpop.f32.mrb[0].mxu0
        %v1301 = vadd.f32 %v1204, %v1300
        %v1302 = vpop.f32.mrb[0].mxu0
        %1303 = vdwg.mxu0
        %1304 = vmatprep.subr.mxu0 0.0
        %v1305 = vand.u32 %v822, 4294901760
        %v1306 = vsub.f32 %v822, %v1305
        %v1307 = vand.u32 %v1306, 4294901760
        %1308 = vmatpush1.msra.mxu0 %v1307
        %1309 = vmatprep.subr.mxu0 0.0
        %v1310 = vand.u32 %v823, 4294901760
        %v1311 = vsub.f32 %v823, %v1310
        %v1312 = vand.u32 %v1311, 4294901760
        %1313 = vmatpush1.msra.mxu0 %v1312
        %1314 = vmatprep.subr.mxu0 0.0
        %v1315 = vand.u32 %v824, 4294901760
        %v1316 = vsub.f32 %v824, %v1315
        %v1317 = vand.u32 %v1316, 4294901760
        %1318 = vmatpush1.msra.mxu0 %v1317
        %1319 = vmatprep.subr.mxu0 0.0
        %v1320 = vand.u32 %v825, 4294901760
        %v1321 = vsub.f32 %v825, %v1320
        %v1322 = vand.u32 %v1321, 4294901760
        %1323 = vmatpush1.msra.mxu0 %v1322
        %1324 = vmatprep.subr.mxu0 0.0
        %v1325 = vand.u32 %v826, 4294901760
        %v1326 = vsub.f32 %v826, %v1325
        %v1327 = vand.u32 %v1326, 4294901760
        %1328 = vmatpush1.msra.mxu0 %v1327
        %1329 = vmatprep.subr.mxu0 0.0
        %v1330 = vand.u32 %v827, 4294901760
        %v1331 = vsub.f32 %v827, %v1330
        %v1332 = vand.u32 %v1331, 4294901760
        %1333 = vmatpush1.msra.mxu0 %v1332
        %1334 = vmatprep.subr.mxu0 0.0
        %v1335 = vand.u32 %v828, 4294901760
        %v1336 = vsub.f32 %v828, %v1335
        %v1337 = vand.u32 %v1336, 4294901760
        %1338 = vmatpush1.msra.mxu0 %v1337
        %1339 = vmatprep.subr.mxu0 0.0
        %v1340 = vand.u32 %v829, 4294901760
        %v1341 = vsub.f32 %v829, %v1340
        %v1342 = vand.u32 %v1341, 4294901760
        %1343 = vmatpush1.msra.mxu0 %v1342
        %1344 = vmatprep.subr.mxu0 0.0
        %v1345 = vand.u32 %v830, 4294901760
        %v1346 = vsub.f32 %v830, %v1345
        %v1347 = vand.u32 %v1346, 4294901760
        %1348 = vmatpush1.msra.mxu0 %v1347
        %1349 = vmatprep.subr.mxu0 0.0
        %v1350 = vand.u32 %v831, 4294901760
        %v1351 = vsub.f32 %v831, %v1350
        %v1352 = vand.u32 %v1351, 4294901760
        %1353 = vmatpush1.msra.mxu0 %v1352
        %1354 = vmatprep.subr.mxu0 0.0
        %v1355 = vand.u32 %v832, 4294901760
        %v1356 = vsub.f32 %v832, %v1355
        %v1357 = vand.u32 %v1356, 4294901760
        %1358 = vmatpush1.msra.mxu0 %v1357
        %1359 = vmatprep.subr.mxu0 0.0
        %v1360 = vand.u32 %v833, 4294901760
        %v1361 = vsub.f32 %v833, %v1360
        %v1362 = vand.u32 %v1361, 4294901760
        %1363 = vmatpush1.msra.mxu0 %v1362
        %1364 = vmatprep.subr.mxu0 0.0
        %v1365 = vand.u32 %v834, 4294901760
        %v1366 = vsub.f32 %v834, %v1365
        %v1367 = vand.u32 %v1366, 4294901760
        %1368 = vmatpush1.msra.mxu0 %v1367
        %1369 = vmatprep.subr.mxu0 0.0
        %v1370 = vand.u32 %v835, 4294901760
        %v1371 = vsub.f32 %v835, %v1370
        %v1372 = vand.u32 %v1371, 4294901760
        %1373 = vmatpush1.msra.mxu0 %v1372
        %1374 = vmatprep.subr.mxu0 0.0
        %v1375 = vand.u32 %v836, 4294901760
        %v1376 = vsub.f32 %v836, %v1375
        %v1377 = vand.u32 %v1376, 4294901760
        %1378 = vmatpush1.msra.mxu0 %v1377
        %1379 = vmatprep.subr.mxu0 0.0
        %v1380 = vand.u32 %v837, 4294901760
        %v1381 = vsub.f32 %v837, %v1380
        %v1382 = vand.u32 %v1381, 4294901760
        %1383 = vmatpush1.msra.mxu0 %v1382
        %1384 = vmatprep.subr.mxu0 0.0
        %1385 = vmatpush1.msra.mxu0 0.0
        %1386 = vmatprep.subr.mxu0 0.0
        %1387 = vmatpush1.msra.mxu0 0.0
        %1388 = vmatprep.subr.mxu0 0.0
        %1389 = vmatpush1.msra.mxu0 0.0
        %1390 = vmatprep.subr.mxu0 0.0
        %1391 = vmatpush1.msra.mxu0 0.0
        %1392 = vmatprep.subr.mxu0 0.0
        %1393 = vmatpush1.msra.mxu0 0.0
        %1394 = vmatprep.subr.mxu0 0.0
        %1395 = vmatpush1.msra.mxu0 0.0
        %1396 = vmatprep.subr.mxu0 0.0
        %1397 = vmatpush1.msra.mxu0 0.0
        %1398 = vmatprep.subr.mxu0 0.0
        %1399 = vmatpush1.msra.mxu0 0.0
        %1400 = vmatprep.subr.mxu0 0.0
        %1401 = vmatpush1.msra.mxu0 0.0
        %1402 = vmatprep.subr.mxu0 0.0
        %1403 = vmatpush1.msra.mxu0 0.0
        %1404 = vmatprep.subr.mxu0 0.0
        %1405 = vmatpush1.msra.mxu0 0.0
        %1406 = vmatprep.subr.mxu0 0.0
        %1407 = vmatpush1.msra.mxu0 0.0
        %1408 = vmatprep.subr.mxu0 0.0
        %1409 = vmatpush1.msra.mxu0 0.0
        %1410 = vmatprep.subr.mxu0 0.0
        %1411 = vmatpush1.msra.mxu0 0.0
        %1412 = vmatprep.subr.mxu0 0.0
        %1413 = vmatpush1.msra.mxu0 0.0
        %1414 = vmatprep.subr.mxu0 0.0
        %1415 = vmatpush1.msra.mxu0 0.0
        %1416 = vmatprep.mubr.f32.mxu0 0.0
        %v1417 = vand.u32 %v813, 4294901760
        %1418 = vmatmul.mubr.f32.gmra.mrb[0].mxu0 %v1417
        %v1419 = vpop.f32.mrb[0].mxu0
        %v1420 = vadd.f32 %v1293, %v1419
        %v1421 = vpop.f32.mrb[0].mxu0
        %1422 = vmatprep.mubr.f32.mxu0 0.0
        %v1423 = vand.u32 %v819, 4294901760
        %1424 = vmatmul.mubr.f32.gmra.mrb[0].mxu0 %v1423
        %v1425 = vpop.f32.mrb[0].mxu0
        %v1426 = vadd.f32 %v1301, %v1425
        %v1427 = vpop.f32.mrb[0].mxu0
        %1428 = vdwg.mxu0
        %1429 = vmatprep.subr.mxu0 0.0
        %v1430 = vand.u32 %v822, 4294901760
        %1431 = vmatpush1.msra.mxu0 %v1430
        %1432 = vmatprep.subr.mxu0 0.0
        %v1433 = vand.u32 %v823, 4294901760
        %1434 = vmatpush1.msra.mxu0 %v1433
        %1435 = vmatprep.subr.mxu0 0.0
        %v1436 = vand.u32 %v824, 4294901760
        %1437 = vmatpush1.msra.mxu0 %v1436
        %1438 = vmatprep.subr.mxu0 0.0
        %v1439 = vand.u32 %v825, 4294901760
        %1440 = vmatpush1.msra.mxu0 %v1439
        %1441 = vmatprep.subr.mxu0 0.0
        %v1442 = vand.u32 %v826, 4294901760
        %1443 = vmatpush1.msra.mxu0 %v1442
        %1444 = vmatprep.subr.mxu0 0.0
        %v1445 = vand.u32 %v827, 4294901760
        %1446 = vmatpush1.msra.mxu0 %v1445
        %1447 = vmatprep.subr.mxu0 0.0
        %v1448 = vand.u32 %v828, 4294901760
        %1449 = vmatpush1.msra.mxu0 %v1448
        %1450 = vmatprep.subr.mxu0 0.0
        %v1451 = vand.u32 %v829, 4294901760
        %1452 = vmatpush1.msra.mxu0 %v1451
        %1453 = vmatprep.subr.mxu0 0.0
        %v1454 = vand.u32 %v830, 4294901760
        %1455 = vmatpush1.msra.mxu0 %v1454
        %1456 = vmatprep.subr.mxu0 0.0
        %v1457 = vand.u32 %v831, 4294901760
        %1458 = vmatpush1.msra.mxu0 %v1457
        %1459 = vmatprep.subr.mxu0 0.0
        %v1460 = vand.u32 %v832, 4294901760
        %1461 = vmatpush1.msra.mxu0 %v1460
        %1462 = vmatprep.subr.mxu0 0.0
        %v1463 = vand.u32 %v833, 4294901760
        %1464 = vmatpush1.msra.mxu0 %v1463
        %1465 = vmatprep.subr.mxu0 0.0
        %v1466 = vand.u32 %v834, 4294901760
        %1467 = vmatpush1.msra.mxu0 %v1466
        %1468 = vmatprep.subr.mxu0 0.0
        %v1469 = vand.u32 %v835, 4294901760
        %1470 = vmatpush1.msra.mxu0 %v1469
        %1471 = vmatprep.subr.mxu0 0.0
        %v1472 = vand.u32 %v836, 4294901760
        %1473 = vmatpush1.msra.mxu0 %v1472
        %1474 = vmatprep.subr.mxu0 0.0
        %v1475 = vand.u32 %v837, 4294901760
        %1476 = vmatpush1.msra.mxu0 %v1475
        %1477 = vmatprep.subr.mxu0 0.0
        %1478 = vmatpush1.msra.mxu0 0.0
        %1479 = vmatprep.subr.mxu0 0.0
        %1480 = vmatpush1.msra.mxu0 0.0
        %1481 = vmatprep.subr.mxu0 0.0
        %1482 = vmatpush1.msra.mxu0 0.0
        %1483 = vmatprep.subr.mxu0 0.0
        %1484 = vmatpush1.msra.mxu0 0.0
        %1485 = vmatprep.subr.mxu0 0.0
        %1486 = vmatpush1.msra.mxu0 0.0
        %1487 = vmatprep.subr.mxu0 0.0
        %1488 = vmatpush1.msra.mxu0 0.0
        %1489 = vmatprep.subr.mxu0 0.0
        %1490 = vmatpush1.msra.mxu0 0.0
        %1491 = vmatprep.subr.mxu0 0.0
        %1492 = vmatpush1.msra.mxu0 0.0
        %1493 = vmatprep.subr.mxu0 0.0
        %1494 = vmatpush1.msra.mxu0 0.0
        %1495 = vmatprep.subr.mxu0 0.0
        %1496 = vmatpush1.msra.mxu0 0.0
        %1497 = vmatprep.subr.mxu0 0.0
        %1498 = vmatpush1.msra.mxu0 0.0
        %1499 = vmatprep.subr.mxu0 0.0
        %1500 = vmatpush1.msra.mxu0 0.0
        %1501 = vmatprep.subr.mxu0 0.0
        %1502 = vmatpush1.msra.mxu0 0.0
        %1503 = vmatprep.subr.mxu0 0.0
        %1504 = vmatpush1.msra.mxu0 0.0
        %1505 = vmatprep.subr.mxu0 0.0
        %1506 = vmatpush1.msra.mxu0 0.0
        %1507 = vmatprep.subr.mxu0 0.0
        %1508 = vmatpush1.msra.mxu0 0.0
        %1509 = vmatprep.mubr.f32.mxu0 0.0
        %v1510 = vand.u32 %v813, 4294901760
        %1511 = vmatmul.mubr.f32.gmra.mrb[0].mxu0 %v1510
        %v1512 = vpop.f32.mrb[0].mxu0
        %v1513 = vadd.f32 %v1420, %v1512
        %v1514 = vpop.f32.mrb[0].mxu0
        %1515 = vmatprep.mubr.f32.mxu0 0.0
        %v1516 = vand.u32 %v819, 4294901760
        %1517 = vmatmul.mubr.f32.gmra.mrb[0].mxu0 %v1516
        %v1518 = vpop.f32.mrb[0].mxu0
        %v1519 = vadd.f32 %v1426, %v1518
        %v1520 = vpop.f32.mrb[0].mxu0
        %1521 = vdwg.mxu0
        %v1522 = vadd.f32 %v309, %v1513
        %v1523 = vadd.f32 %v309, %v1519
        %s1524 = scalar_lea.vmem %s263, 16 [#allocation2]
        %v1525 = vld [vmem:[%s1524] sm:$0xff]
        %v1526 = vld [vmem:[%s1524 + $0x8] sm:$0xff]
        %v1528 = vsel %vm313, %v1525, 0
        %v1531 = vsel %vm313, %v1526, 0
        %1533 = vmatprep.subr.mxu0 0.0
        %v1534 = vand.u32 %v302, 4294901760
        %1535 = vmatpush1.msra.mxu0 %v1534
        %1536 = vmatprep.subr.mxu0 0.0
        %v1537 = vand.u32 %v303, 4294901760
        %1538 = vmatpush1.msra.mxu0 %v1537
        %1539 = vmatprep.subr.mxu0 0.0
        %1540 = vmatpush1.msra.mxu0 0.0
        %1541 = vmatprep.subr.mxu0 0.0
        %1542 = vmatpush1.msra.mxu0 0.0
        %1543 = vmatprep.subr.mxu0 0.0
        %1544 = vmatpush1.msra.mxu0 0.0
        %1545 = vmatprep.subr.mxu0 0.0
        %1546 = vmatpush1.msra.mxu0 0.0
        %1547 = vmatprep.subr.mxu0 0.0
        %1548 = vmatpush1.msra.mxu0 0.0
        %1549 = vmatprep.subr.mxu0 0.0
        %1550 = vmatpush1.msra.mxu0 0.0
        %1551 = vmatprep.subr.mxu0 0.0
        %1552 = vmatpush1.msra.mxu0 0.0
        %1553 = vmatprep.subr.mxu0 0.0
        %1554 = vmatpush1.msra.mxu0 0.0
        %1555 = vmatprep.subr.mxu0 0.0
        %1556 = vmatpush1.msra.mxu0 0.0
        %1557 = vmatprep.subr.mxu0 0.0
        %1558 = vmatpush1.msra.mxu0 0.0
        %1559 = vmatprep.subr.mxu0 0.0
        %1560 = vmatpush1.msra.mxu0 0.0
        %1561 = vmatprep.subr.mxu0 0.0
        %1562 = vmatpush1.msra.mxu0 0.0
        %1563 = vmatprep.subr.mxu0 0.0
        %1564 = vmatpush1.msra.mxu0 0.0
        %1565 = vmatprep.subr.mxu0 0.0
        %1566 = vmatpush1.msra.mxu0 0.0
        %1567 = vmatprep.subr.mxu0 0.0
        %1568 = vmatpush1.msra.mxu0 0.0
        %1569 = vmatprep.subr.mxu0 0.0
        %1570 = vmatpush1.msra.mxu0 0.0
        %1571 = vmatprep.subr.mxu0 0.0
        %1572 = vmatpush1.msra.mxu0 0.0
        %1573 = vmatprep.subr.mxu0 0.0
        %1574 = vmatpush1.msra.mxu0 0.0
        %1575 = vmatprep.subr.mxu0 0.0
        %1576 = vmatpush1.msra.mxu0 0.0
        %1577 = vmatprep.subr.mxu0 0.0
        %1578 = vmatpush1.msra.mxu0 0.0
        %1579 = vmatprep.subr.mxu0 0.0
        %1580 = vmatpush1.msra.mxu0 0.0
        %1581 = vmatprep.subr.mxu0 0.0
        %1582 = vmatpush1.msra.mxu0 0.0
        %1583 = vmatprep.subr.mxu0 0.0
        %1584 = vmatpush1.msra.mxu0 0.0
        %1585 = vmatprep.subr.mxu0 0.0
        %1586 = vmatpush1.msra.mxu0 0.0
        %1587 = vmatprep.subr.mxu0 0.0
        %1588 = vmatpush1.msra.mxu0 0.0
        %1589 = vmatprep.subr.mxu0 0.0
        %1590 = vmatpush1.msra.mxu0 0.0
        %1591 = vmatprep.subr.mxu0 0.0
        %1592 = vmatpush1.msra.mxu0 0.0
        %1593 = vmatprep.subr.mxu0 0.0
        %1594 = vmatpush1.msra.mxu0 0.0
        %1595 = vmatprep.subr.mxu0 0.0
        %1596 = vmatpush1.msra.mxu0 0.0
        %1597 = vmatprep.subr.mxu0 0.0
        %1598 = vmatpush1.msra.mxu0 0.0
        %1599 = vmatprep.mubr.f32.mxu0 0.0
        %v1600 = vand.u32 %v1528, 4294901760
        %v1601 = vsub.f32 %v1528, %v1600
        %v1602 = vand.u32 %v1601, 4294901760
        %v1603 = vsub.f32 %v1601, %v1602
        %v1604 = vand.u32 %v1603, 4294901760
        %1605 = vmatmul.mubr.f32.gmra.mrb[0].mxu0 %v1604
        %v1606 = vpop.f32.mrb[0].mxu0
        %v1607 = vadd.f32 0.0, %v1606
        %v1608 = vpop.f32.mrb[0].mxu0
        %1609 = vmatprep.mubr.f32.mxu0 0.0
        %v1610 = vand.u32 %v1531, 4294901760
        %v1611 = vsub.f32 %v1531, %v1610
        %v1612 = vand.u32 %v1611, 4294901760
        %v1613 = vsub.f32 %v1611, %v1612
        %v1614 = vand.u32 %v1613, 4294901760
        %1615 = vmatmul.mubr.f32.gmra.mrb[0].mxu0 %v1614
        %v1616 = vpop.f32.mrb[0].mxu0
        %v1617 = vadd.f32 0.0, %v1616
        %v1618 = vpop.f32.mrb[0].mxu0
        %1619 = vdwg.mxu0
        %1620 = vmatprep.subr.mxu0 0.0
        %v1621 = vand.u32 %v302, 4294901760
        %v1622 = vsub.f32 %v302, %v1621
        %v1623 = vand.u32 %v1622, 4294901760
        %v1624 = vsub.f32 %v1622, %v1623
        %v1625 = vand.u32 %v1624, 4294901760
        %1626 = vmatpush1.msra.mxu0 %v1625
        %1627 = vmatprep.subr.mxu0 0.0
        %v1628 = vand.u32 %v303, 4294901760
        %v1629 = vsub.f32 %v303, %v1628
        %v1630 = vand.u32 %v1629, 4294901760
        %v1631 = vsub.f32 %v1629, %v1630
        %v1632 = vand.u32 %v1631, 4294901760
        %1633 = vmatpush1.msra.mxu0 %v1632
        %1634 = vmatprep.subr.mxu0 0.0
        %1635 = vmatpush1.msra.mxu0 0.0
        %1636 = vmatprep.subr.mxu0 0.0
        %1637 = vmatpush1.msra.mxu0 0.0
        %1638 = vmatprep.subr.mxu0 0.0
        %1639 = vmatpush1.msra.mxu0 0.0
        %1640 = vmatprep.subr.mxu0 0.0
        %1641 = vmatpush1.msra.mxu0 0.0
        %1642 = vmatprep.subr.mxu0 0.0
        %1643 = vmatpush1.msra.mxu0 0.0
        %1644 = vmatprep.subr.mxu0 0.0
        %1645 = vmatpush1.msra.mxu0 0.0
        %1646 = vmatprep.subr.mxu0 0.0
        %1647 = vmatpush1.msra.mxu0 0.0
        %1648 = vmatprep.subr.mxu0 0.0
        %1649 = vmatpush1.msra.mxu0 0.0
        %1650 = vmatprep.subr.mxu0 0.0
        %1651 = vmatpush1.msra.mxu0 0.0
        %1652 = vmatprep.subr.mxu0 0.0
        %1653 = vmatpush1.msra.mxu0 0.0
        %1654 = vmatprep.subr.mxu0 0.0
        %1655 = vmatpush1.msra.mxu0 0.0
        %1656 = vmatprep.subr.mxu0 0.0
        %1657 = vmatpush1.msra.mxu0 0.0
        %1658 = vmatprep.subr.mxu0 0.0
        %1659 = vmatpush1.msra.mxu0 0.0
        %1660 = vmatprep.subr.mxu0 0.0
        %1661 = vmatpush1.msra.mxu0 0.0
        %1662 = vmatprep.subr.mxu0 0.0
        %1663 = vmatpush1.msra.mxu0 0.0
        %1664 = vmatprep.subr.mxu0 0.0
        %1665 = vmatpush1.msra.mxu0 0.0
        %1666 = vmatprep.subr.mxu0 0.0
        %1667 = vmatpush1.msra.mxu0 0.0
        %1668 = vmatprep.subr.mxu0 0.0
        %1669 = vmatpush1.msra.mxu0 0.0
        %1670 = vmatprep.subr.mxu0 0.0
        %1671 = vmatpush1.msra.mxu0 0.0
        %1672 = vmatprep.subr.mxu0 0.0
        %1673 = vmatpush1.msra.mxu0 0.0
        %1674 = vmatprep.subr.mxu0 0.0
        %1675 = vmatpush1.msra.mxu0 0.0
        %1676 = vmatprep.subr.mxu0 0.0
        %1677 = vmatpush1.msra.mxu0 0.0
        %1678 = vmatprep.subr.mxu0 0.0
        %1679 = vmatpush1.msra.mxu0 0.0
        %1680 = vmatprep.subr.mxu0 0.0
        %1681 = vmatpush1.msra.mxu0 0.0
        %1682 = vmatprep.subr.mxu0 0.0
        %1683 = vmatpush1.msra.mxu0 0.0
        %1684 = vmatprep.subr.mxu0 0.0
        %1685 = vmatpush1.msra.mxu0 0.0
        %1686 = vmatprep.subr.mxu0 0.0
        %1687 = vmatpush1.msra.mxu0 0.0
        %1688 = vmatprep.subr.mxu0 0.0
        %1689 = vmatpush1.msra.mxu0 0.0
        %1690 = vmatprep.subr.mxu0 0.0
        %1691 = vmatpush1.msra.mxu0 0.0
        %1692 = vmatprep.subr.mxu0 0.0
        %1693 = vmatpush1.msra.mxu0 0.0
        %1694 = vmatprep.mubr.f32.mxu0 0.0
        %v1695 = vand.u32 %v1528, 4294901760
        %1696 = vmatmul.mubr.f32.gmra.mrb[0].mxu0 %v1695
        %v1697 = vpop.f32.mrb[0].mxu0
        %v1698 = vadd.f32 %v1607, %v1697
        %v1699 = vpop.f32.mrb[0].mxu0
        %1700 = vmatprep.mubr.f32.mxu0 0.0
        %v1701 = vand.u32 %v1531, 4294901760
        %1702 = vmatmul.mubr.f32.gmra.mrb[0].mxu0 %v1701
        %v1703 = vpop.f32.mrb[0].mxu0
        %v1704 = vadd.f32 %v1617, %v1703
        %v1705 = vpop.f32.mrb[0].mxu0
        %1706 = vdwg.mxu0
        %1707 = vmatprep.subr.mxu0 0.0
        %v1708 = vand.u32 %v302, 4294901760
        %v1709 = vsub.f32 %v302, %v1708
        %1710 = vmatpush1.msra.mxu0 %v1709
        %1711 = vmatprep.subr.mxu0 0.0
        %v1712 = vand.u32 %v303, 4294901760
        %v1713 = vsub.f32 %v303, %v1712
        %1714 = vmatpush1.msra.mxu0 %v1713
        %1715 = vmatprep.subr.mxu0 0.0
        %1716 = vmatpush1.msra.mxu0 0.0
        %1717 = vmatprep.subr.mxu0 0.0
        %1718 = vmatpush1.msra.mxu0 0.0
        %1719 = vmatprep.subr.mxu0 0.0
        %1720 = vmatpush1.msra.mxu0 0.0
        %1721 = vmatprep.subr.mxu0 0.0
        %1722 = vmatpush1.msra.mxu0 0.0
        %1723 = vmatprep.subr.mxu0 0.0
        %1724 = vmatpush1.msra.mxu0 0.0
        %1725 = vmatprep.subr.mxu0 0.0
        %1726 = vmatpush1.msra.mxu0 0.0
        %1727 = vmatprep.subr.mxu0 0.0
        %1728 = vmatpush1.msra.mxu0 0.0
        %1729 = vmatprep.subr.mxu0 0.0
        %1730 = vmatpush1.msra.mxu0 0.0
        %1731 = vmatprep.subr.mxu0 0.0
        %1732 = vmatpush1.msra.mxu0 0.0
        %1733 = vmatprep.subr.mxu0 0.0
        %1734 = vmatpush1.msra.mxu0 0.0
        %1735 = vmatprep.subr.mxu0 0.0
        %1736 = vmatpush1.msra.mxu0 0.0
        %1737 = vmatprep.subr.mxu0 0.0
        %1738 = vmatpush1.msra.mxu0 0.0
        %1739 = vmatprep.subr.mxu0 0.0
        %1740 = vmatpush1.msra.mxu0 0.0
        %1741 = vmatprep.subr.mxu0 0.0
        %1742 = vmatpush1.msra.mxu0 0.0
        %1743 = vmatprep.subr.mxu0 0.0
        %1744 = vmatpush1.msra.mxu0 0.0
        %1745 = vmatprep.subr.mxu0 0.0
        %1746 = vmatpush1.msra.mxu0 0.0
        %1747 = vmatprep.subr.mxu0 0.0
        %1748 = vmatpush1.msra.mxu0 0.0
        %1749 = vmatprep.subr.mxu0 0.0
        %1750 = vmatpush1.msra.mxu0 0.0
        %1751 = vmatprep.subr.mxu0 0.0
        %1752 = vmatpush1.msra.mxu0 0.0
        %1753 = vmatprep.subr.mxu0 0.0
        %1754 = vmatpush1.msra.mxu0 0.0
        %1755 = vmatprep.subr.mxu0 0.0
        %1756 = vmatpush1.msra.mxu0 0.0
        %1757 = vmatprep.subr.mxu0 0.0
        %1758 = vmatpush1.msra.mxu0 0.0
        %1759 = vmatprep.subr.mxu0 0.0
        %1760 = vmatpush1.msra.mxu0 0.0
        %1761 = vmatprep.subr.mxu0 0.0
        %1762 = vmatpush1.msra.mxu0 0.0
        %1763 = vmatprep.subr.mxu0 0.0
        %1764 = vmatpush1.msra.mxu0 0.0
        %1765 = vmatprep.subr.mxu0 0.0
        %1766 = vmatpush1.msra.mxu0 0.0
        %1767 = vmatprep.subr.mxu0 0.0
        %1768 = vmatpush1.msra.mxu0 0.0
        %1769 = vmatprep.subr.mxu0 0.0
        %1770 = vmatpush1.msra.mxu0 0.0
        %1771 = vmatprep.subr.mxu0 0.0
        %1772 = vmatpush1.msra.mxu0 0.0
        %1773 = vmatprep.subr.mxu0 0.0
        %1774 = vmatpush1.msra.mxu0 0.0
        %1775 = vmatprep.mubr.f32.mxu0 0.0
        %v1776 = vand.u32 %v1528, 4294901760
        %v1777 = vsub.f32 %v1528, %v1776
        %1778 = vmatmul.mubr.f32.gmra.mrb[0].mxu0 %v1777
        %v1779 = vpop.f32.mrb[0].mxu0
        %v1780 = vadd.f32 %v1698, %v1779
        %v1781 = vpop.f32.mrb[0].mxu0
        %1782 = vmatprep.mubr.f32.mxu0 0.0
        %v1783 = vand.u32 %v1531, 4294901760
        %v1784 = vsub.f32 %v1531, %v1783
        %1785 = vmatmul.mubr.f32.gmra.mrb[0].mxu0 %v1784
        %v1786 = vpop.f32.mrb[0].mxu0
        %v1787 = vadd.f32 %v1704, %v1786
        %v1788 = vpop.f32.mrb[0].mxu0
        %1789 = vdwg.mxu0
        %1790 = vmatprep.subr.mxu0 0.0
        %v1791 = vand.u32 %v302, 4294901760
        %1792 = vmatpush1.msra.mxu0 %v1791
        %1793 = vmatprep.subr.mxu0 0.0
        %v1794 = vand.u32 %v303, 4294901760
        %1795 = vmatpush1.msra.mxu0 %v1794
        %1796 = vmatprep.subr.mxu0 0.0
        %1797 = vmatpush1.msra.mxu0 0.0
        %1798 = vmatprep.subr.mxu0 0.0
        %1799 = vmatpush1.msra.mxu0 0.0
        %1800 = vmatprep.subr.mxu0 0.0
        %1801 = vmatpush1.msra.mxu0 0.0
        %1802 = vmatprep.subr.mxu0 0.0
        %1803 = vmatpush1.msra.mxu0 0.0
        %1804 = vmatprep.subr.mxu0 0.0
        %1805 = vmatpush1.msra.mxu0 0.0
        %1806 = vmatprep.subr.mxu0 0.0
        %1807 = vmatpush1.msra.mxu0 0.0
        %1808 = vmatprep.subr.mxu0 0.0
        %1809 = vmatpush1.msra.mxu0 0.0
        %1810 = vmatprep.subr.mxu0 0.0
        %1811 = vmatpush1.msra.mxu0 0.0
        %1812 = vmatprep.subr.mxu0 0.0
        %1813 = vmatpush1.msra.mxu0 0.0
        %1814 = vmatprep.subr.mxu0 0.0
        %1815 = vmatpush1.msra.mxu0 0.0
        %1816 = vmatprep.subr.mxu0 0.0
        %1817 = vmatpush1.msra.mxu0 0.0
        %1818 = vmatprep.subr.mxu0 0.0
        %1819 = vmatpush1.msra.mxu0 0.0
        %1820 = vmatprep.subr.mxu0 0.0
        %1821 = vmatpush1.msra.mxu0 0.0
        %1822 = vmatprep.subr.mxu0 0.0
        %1823 = vmatpush1.msra.mxu0 0.0
        %1824 = vmatprep.subr.mxu0 0.0
        %1825 = vmatpush1.msra.mxu0 0.0
        %1826 = vmatprep.subr.mxu0 0.0
        %1827 = vmatpush1.msra.mxu0 0.0
        %1828 = vmatprep.subr.mxu0 0.0
        %1829 = vmatpush1.msra.mxu0 0.0
        %1830 = vmatprep.subr.mxu0 0.0
        %1831 = vmatpush1.msra.mxu0 0.0
        %1832 = vmatprep.subr.mxu0 0.0
        %1833 = vmatpush1.msra.mxu0 0.0
        %1834 = vmatprep.subr.mxu0 0.0
        %1835 = vmatpush1.msra.mxu0 0.0
        %1836 = vmatprep.subr.mxu0 0.0
        %1837 = vmatpush1.msra.mxu0 0.0
        %1838 = vmatprep.subr.mxu0 0.0
        %1839 = vmatpush1.msra.mxu0 0.0
        %1840 = vmatprep.subr.mxu0 0.0
        %1841 = vmatpush1.msra.mxu0 0.0
        %1842 = vmatprep.subr.mxu0 0.0
        %1843 = vmatpush1.msra.mxu0 0.0
        %1844 = vmatprep.subr.mxu0 0.0
        %1845 = vmatpush1.msra.mxu0 0.0
        %1846 = vmatprep.subr.mxu0 0.0
        %1847 = vmatpush1.msra.mxu0 0.0
        %1848 = vmatprep.subr.mxu0 0.0
        %1849 = vmatpush1.msra.mxu0 0.0
        %1850 = vmatprep.subr.mxu0 0.0
        %1851 = vmatpush1.msra.mxu0 0.0
        %1852 = vmatprep.subr.mxu0 0.0
        %1853 = vmatpush1.msra.mxu0 0.0
        %1854 = vmatprep.subr.mxu0 0.0
        %1855 = vmatpush1.msra.mxu0 0.0
        %1856 = vmatprep.mubr.f32.mxu0 0.0
        %v1857 = vand.u32 %v1528, 4294901760
        %v1858 = vsub.f32 %v1528, %v1857
        %v1859 = vand.u32 %v1858, 4294901760
        %1860 = vmatmul.mubr.f32.gmra.mrb[0].mxu0 %v1859
        %v1861 = vpop.f32.mrb[0].mxu0
        %v1862 = vadd.f32 %v1780, %v1861
        %v1863 = vpop.f32.mrb[0].mxu0
        %1864 = vmatprep.mubr.f32.mxu0 0.0
        %v1865 = vand.u32 %v1531, 4294901760
        %v1866 = vsub.f32 %v1531, %v1865
        %v1867 = vand.u32 %v1866, 4294901760
        %1868 = vmatmul.mubr.f32.gmra.mrb[0].mxu0 %v1867
        %v1869 = vpop.f32.mrb[0].mxu0
        %v1870 = vadd.f32 %v1787, %v1869
        %v1871 = vpop.f32.mrb[0].mxu0
        %1872 = vdwg.mxu0
        %1873 = vmatprep.subr.mxu0 0.0
        %v1874 = vand.u32 %v302, 4294901760
        %v1875 = vsub.f32 %v302, %v1874
        %v1876 = vand.u32 %v1875, 4294901760
        %1877 = vmatpush1.msra.mxu0 %v1876
        %1878 = vmatprep.subr.mxu0 0.0
        %v1879 = vand.u32 %v303, 4294901760
        %v1880 = vsub.f32 %v303, %v1879
        %v1881 = vand.u32 %v1880, 4294901760
        %1882 = vmatpush1.msra.mxu0 %v1881
        %1883 = vmatprep.subr.mxu0 0.0
        %1884 = vmatpush1.msra.mxu0 0.0
        %1885 = vmatprep.subr.mxu0 0.0
        %1886 = vmatpush1.msra.mxu0 0.0
        %1887 = vmatprep.subr.mxu0 0.0
        %1888 = vmatpush1.msra.mxu0 0.0
        %1889 = vmatprep.subr.mxu0 0.0
        %1890 = vmatpush1.msra.mxu0 0.0
        %1891 = vmatprep.subr.mxu0 0.0
        %1892 = vmatpush1.msra.mxu0 0.0
        %1893 = vmatprep.subr.mxu0 0.0
        %1894 = vmatpush1.msra.mxu0 0.0
        %1895 = vmatprep.subr.mxu0 0.0
        %1896 = vmatpush1.msra.mxu0 0.0
        %1897 = vmatprep.subr.mxu0 0.0
        %1898 = vmatpush1.msra.mxu0 0.0
        %1899 = vmatprep.subr.mxu0 0.0
        %1900 = vmatpush1.msra.mxu0 0.0
        %1901 = vmatprep.subr.mxu0 0.0
        %1902 = vmatpush1.msra.mxu0 0.0
        %1903 = vmatprep.subr.mxu0 0.0
        %1904 = vmatpush1.msra.mxu0 0.0
        %1905 = vmatprep.subr.mxu0 0.0
        %1906 = vmatpush1.msra.mxu0 0.0
        %1907 = vmatprep.subr.mxu0 0.0
        %1908 = vmatpush1.msra.mxu0 0.0
        %1909 = vmatprep.subr.mxu0 0.0
        %1910 = vmatpush1.msra.mxu0 0.0
        %1911 = vmatprep.subr.mxu0 0.0
        %1912 = vmatpush1.msra.mxu0 0.0
        %1913 = vmatprep.subr.mxu0 0.0
        %1914 = vmatpush1.msra.mxu0 0.0
        %1915 = vmatprep.subr.mxu0 0.0
        %1916 = vmatpush1.msra.mxu0 0.0
        %1917 = vmatprep.subr.mxu0 0.0
        %1918 = vmatpush1.msra.mxu0 0.0
        %1919 = vmatprep.subr.mxu0 0.0
        %1920 = vmatpush1.msra.mxu0 0.0
        %1921 = vmatprep.subr.mxu0 0.0
        %1922 = vmatpush1.msra.mxu0 0.0
        %1923 = vmatprep.subr.mxu0 0.0
        %1924 = vmatpush1.msra.mxu0 0.0
        %1925 = vmatprep.subr.mxu0 0.0
        %1926 = vmatpush1.msra.mxu0 0.0
        %1927 = vmatprep.subr.mxu0 0.0
        %1928 = vmatpush1.msra.mxu0 0.0
        %1929 = vmatprep.subr.mxu0 0.0
        %1930 = vmatpush1.msra.mxu0 0.0
        %1931 = vmatprep.subr.mxu0 0.0
        %1932 = vmatpush1.msra.mxu0 0.0
        %1933 = vmatprep.subr.mxu0 0.0
        %1934 = vmatpush1.msra.mxu0 0.0
        %1935 = vmatprep.subr.mxu0 0.0
        %1936 = vmatpush1.msra.mxu0 0.0
        %1937 = vmatprep.subr.mxu0 0.0
        %1938 = vmatpush1.msra.mxu0 0.0
        %1939 = vmatprep.subr.mxu0 0.0
        %1940 = vmatpush1.msra.mxu0 0.0
        %1941 = vmatprep.subr.mxu0 0.0
        %1942 = vmatpush1.msra.mxu0 0.0
        %1943 = vmatprep.mubr.f32.mxu0 0.0
        %v1944 = vand.u32 %v1528, 4294901760
        %1945 = vmatmul.mubr.f32.gmra.mrb[0].mxu0 %v1944
        %v1946 = vpop.f32.mrb[0].mxu0
        %v1947 = vadd.f32 %v1862, %v1946
        %v1948 = vpop.f32.mrb[0].mxu0
        %1949 = vmatprep.mubr.f32.mxu0 0.0
        %v1950 = vand.u32 %v1531, 4294901760
        %1951 = vmatmul.mubr.f32.gmra.mrb[0].mxu0 %v1950
        %v1952 = vpop.f32.mrb[0].mxu0
        %v1953 = vadd.f32 %v1870, %v1952
        %v1954 = vpop.f32.mrb[0].mxu0
        %1955 = vdwg.mxu0
        %1956 = vmatprep.subr.mxu0 0.0
        %v1957 = vand.u32 %v302, 4294901760
        %1958 = vmatpush1.msra.mxu0 %v1957
        %1959 = vmatprep.subr.mxu0 0.0
        %v1960 = vand.u32 %v303, 4294901760
        %1961 = vmatpush1.msra.mxu0 %v1960
        %1962 = vmatprep.subr.mxu0 0.0
        %1963 = vmatpush1.msra.mxu0 0.0
        %1964 = vmatprep.subr.mxu0 0.0
        %1965 = vmatpush1.msra.mxu0 0.0
        %1966 = vmatprep.subr.mxu0 0.0
        %1967 = vmatpush1.msra.mxu0 0.0
        %1968 = vmatprep.subr.mxu0 0.0
        %1969 = vmatpush1.msra.mxu0 0.0
        %1970 = vmatprep.subr.mxu0 0.0
        %1971 = vmatpush1.msra.mxu0 0.0
        %1972 = vmatprep.subr.mxu0 0.0
        %1973 = vmatpush1.msra.mxu0 0.0
        %1974 = vmatprep.subr.mxu0 0.0
        %1975 = vmatpush1.msra.mxu0 0.0
        %1976 = vmatprep.subr.mxu0 0.0
        %1977 = vmatpush1.msra.mxu0 0.0
        %1978 = vmatprep.subr.mxu0 0.0
        %1979 = vmatpush1.msra.mxu0 0.0
        %1980 = vmatprep.subr.mxu0 0.0
        %1981 = vmatpush1.msra.mxu0 0.0
        %1982 = vmatprep.subr.mxu0 0.0
        %1983 = vmatpush1.msra.mxu0 0.0
        %1984 = vmatprep.subr.mxu0 0.0
        %1985 = vmatpush1.msra.mxu0 0.0
        %1986 = vmatprep.subr.mxu0 0.0
        %1987 = vmatpush1.msra.mxu0 0.0
        %1988 = vmatprep.subr.mxu0 0.0
        %1989 = vmatpush1.msra.mxu0 0.0
        %1990 = vmatprep.subr.mxu0 0.0
        %1991 = vmatpush1.msra.mxu0 0.0
        %1992 = vmatprep.subr.mxu0 0.0
        %1993 = vmatpush1.msra.mxu0 0.0
        %1994 = vmatprep.subr.mxu0 0.0
        %1995 = vmatpush1.msra.mxu0 0.0
        %1996 = vmatprep.subr.mxu0 0.0
        %1997 = vmatpush1.msra.mxu0 0.0
        %1998 = vmatprep.subr.mxu0 0.0
        %1999 = vmatpush1.msra.mxu0 0.0
        %2000 = vmatprep.subr.mxu0 0.0
        %2001 = vmatpush1.msra.mxu0 0.0
        %2002 = vmatprep.subr.mxu0 0.0
        %2003 = vmatpush1.msra.mxu0 0.0
        %2004 = vmatprep.subr.mxu0 0.0
        %2005 = vmatpush1.msra.mxu0 0.0
        %2006 = vmatprep.subr.mxu0 0.0
        %2007 = vmatpush1.msra.mxu0 0.0
        %2008 = vmatprep.subr.mxu0 0.0
        %2009 = vmatpush1.msra.mxu0 0.0
        %2010 = vmatprep.subr.mxu0 0.0
        %2011 = vmatpush1.msra.mxu0 0.0
        %2012 = vmatprep.subr.mxu0 0.0
        %2013 = vmatpush1.msra.mxu0 0.0
        %2014 = vmatprep.subr.mxu0 0.0
        %2015 = vmatpush1.msra.mxu0 0.0
        %2016 = vmatprep.subr.mxu0 0.0
        %2017 = vmatpush1.msra.mxu0 0.0
        %2018 = vmatprep.subr.mxu0 0.0
        %2019 = vmatpush1.msra.mxu0 0.0
        %2020 = vmatprep.subr.mxu0 0.0
        %2021 = vmatpush1.msra.mxu0 0.0
        %2022 = vmatprep.mubr.f32.mxu0 0.0
        %v2023 = vand.u32 %v1528, 4294901760
        %2024 = vmatmul.mubr.f32.gmra.mrb[0].mxu0 %v2023
        %v2025 = vpop.f32.mrb[0].mxu0
        %v2026 = vadd.f32 %v1947, %v2025
        %v2027 = vpop.f32.mrb[0].mxu0
        %2028 = vmatprep.mubr.f32.mxu0 0.0
        %v2029 = vand.u32 %v1531, 4294901760
        %2030 = vmatmul.mubr.f32.gmra.mrb[0].mxu0 %v2029
        %v2031 = vpop.f32.mrb[0].mxu0
        %v2032 = vadd.f32 %v1953, %v2031
        %v2033 = vpop.f32.mrb[0].mxu0
        %2034 = vdwg.mxu0
        %s2035 = scalar_lea.vmem [#allocation3], 128
        %v2036 = vld [vmem:[%s2035] sm:$0xff]
        %v2037 = vld [vmem:[%s2035 + $0x8] sm:$0xff]
        %v2038 = vld [vmem:[%s2035 + $0x10] sm:$0xff]
        %v2039 = vld [vmem:[%s2035 + $0x18] sm:$0xff]
        %v2040 = vld [vmem:[%s2035 + $0x20] sm:$0xff]
        %v2041 = vld [vmem:[%s2035 + $0x28] sm:$0xff]
        %v2042 = vld [vmem:[%s2035 + $0x30] sm:$0xff]
        %v2043 = vld [vmem:[%s2035 + $0x38] sm:$0xff]
        %v2044 = vld [vmem:[%s2035 + $0x40] sm:$0xff]
        %v2045 = vld [vmem:[%s2035 + $0x48] sm:$0xff]
        %v2046 = vld [vmem:[%s2035 + $0x50] sm:$0xff]
        %v2047 = vld [vmem:[%s2035 + $0x58] sm:$0xff]
        %v2048 = vld [vmem:[%s2035 + $0x60] sm:$0xff]
        %v2049 = vld [vmem:[%s2035 + $0x68] sm:$0xff]
        %v2050 = vld [vmem:[%s2035 + $0x70] sm:$0xff]
        %v2051 = vld [vmem:[%s2035 + $0x78] sm:$0xff]
        %2052 = vmatprep.subr.mxu0 0.0
        %v2053 = vand.u32 %v2036, 4294901760
        %2054 = vmatpush1.msra.mxu0 %v2053
        %2055 = vmatprep.subr.mxu0 0.0
        %v2056 = vand.u32 %v2037, 4294901760
        %2057 = vmatpush1.msra.mxu0 %v2056
        %2058 = vmatprep.subr.mxu0 0.0
        %v2059 = vand.u32 %v2038, 4294901760
        %2060 = vmatpush1.msra.mxu0 %v2059
        %2061 = vmatprep.subr.mxu0 0.0
        %v2062 = vand.u32 %v2039, 4294901760
        %2063 = vmatpush1.msra.mxu0 %v2062
        %2064 = vmatprep.subr.mxu0 0.0
        %v2065 = vand.u32 %v2040, 4294901760
        %2066 = vmatpush1.msra.mxu0 %v2065
        %2067 = vmatprep.subr.mxu0 0.0
        %v2068 = vand.u32 %v2041, 4294901760
        %2069 = vmatpush1.msra.mxu0 %v2068
        %2070 = vmatprep.subr.mxu0 0.0
        %v2071 = vand.u32 %v2042, 4294901760
        %2072 = vmatpush1.msra.mxu0 %v2071
        %2073 = vmatprep.subr.mxu0 0.0
        %v2074 = vand.u32 %v2043, 4294901760
        %2075 = vmatpush1.msra.mxu0 %v2074
        %2076 = vmatprep.subr.mxu0 0.0
        %v2077 = vand.u32 %v2044, 4294901760
        %2078 = vmatpush1.msra.mxu0 %v2077
        %2079 = vmatprep.subr.mxu0 0.0
        %v2080 = vand.u32 %v2045, 4294901760
        %2081 = vmatpush1.msra.mxu0 %v2080
        %2082 = vmatprep.subr.mxu0 0.0
        %v2083 = vand.u32 %v2046, 4294901760
        %2084 = vmatpush1.msra.mxu0 %v2083
        %2085 = vmatprep.subr.mxu0 0.0
        %v2086 = vand.u32 %v2047, 4294901760
        %2087 = vmatpush1.msra.mxu0 %v2086
        %2088 = vmatprep.subr.mxu0 0.0
        %v2089 = vand.u32 %v2048, 4294901760
        %2090 = vmatpush1.msra.mxu0 %v2089
        %2091 = vmatprep.subr.mxu0 0.0
        %v2092 = vand.u32 %v2049, 4294901760
        %2093 = vmatpush1.msra.mxu0 %v2092
        %2094 = vmatprep.subr.mxu0 0.0
        %v2095 = vand.u32 %v2050, 4294901760
        %2096 = vmatpush1.msra.mxu0 %v2095
        %2097 = vmatprep.subr.mxu0 0.0
        %v2098 = vand.u32 %v2051, 4294901760
        %2099 = vmatpush1.msra.mxu0 %v2098
        %2100 = vmatprep.subr.mxu0 0.0
        %2101 = vmatpush1.msra.mxu0 0.0
        %2102 = vmatprep.subr.mxu0 0.0
        %2103 = vmatpush1.msra.mxu0 0.0
        %2104 = vmatprep.subr.mxu0 0.0
        %2105 = vmatpush1.msra.mxu0 0.0
        %2106 = vmatprep.subr.mxu0 0.0
        %2107 = vmatpush1.msra.mxu0 0.0
        %2108 = vmatprep.subr.mxu0 0.0
        %2109 = vmatpush1.msra.mxu0 0.0
        %2110 = vmatprep.subr.mxu0 0.0
        %2111 = vmatpush1.msra.mxu0 0.0
        %2112 = vmatprep.subr.mxu0 0.0
        %2113 = vmatpush1.msra.mxu0 0.0
        %2114 = vmatprep.subr.mxu0 0.0
        %2115 = vmatpush1.msra.mxu0 0.0
        %2116 = vmatprep.subr.mxu0 0.0
        %2117 = vmatpush1.msra.mxu0 0.0
        %2118 = vmatprep.subr.mxu0 0.0
        %2119 = vmatpush1.msra.mxu0 0.0
        %2120 = vmatprep.subr.mxu0 0.0
        %2121 = vmatpush1.msra.mxu0 0.0
        %2122 = vmatprep.subr.mxu0 0.0
        %2123 = vmatpush1.msra.mxu0 0.0
        %2124 = vmatprep.subr.mxu0 0.0
        %2125 = vmatpush1.msra.mxu0 0.0
        %2126 = vmatprep.subr.mxu0 0.0
        %2127 = vmatpush1.msra.mxu0 0.0
        %2128 = vmatprep.subr.mxu0 0.0
        %2129 = vmatpush1.msra.mxu0 0.0
        %2130 = vmatprep.subr.mxu0 0.0
        %2131 = vmatpush1.msra.mxu0 0.0
        %2132 = vmatprep.mubr.f32.mxu0 0.0
        %v2133 = vand.u32 %v2026, 4294901760
        %v2134 = vsub.f32 %v2026, %v2133
        %v2135 = vand.u32 %v2134, 4294901760
        %v2136 = vsub.f32 %v2134, %v2135
        %v2137 = vand.u32 %v2136, 4294901760
        %2138 = vmatmul.mubr.f32.gmra.mrb[0].mxu0 %v2137
        %v2139 = vpop.f32.mrb[0].mxu0
        %v2140 = vadd.f32 0.0, %v2139
        %v2141 = vpop.f32.mrb[0].mxu0
        %2142 = vmatprep.mubr.f32.mxu0 0.0
        %v2143 = vand.u32 %v2032, 4294901760
        %v2144 = vsub.f32 %v2032, %v2143
        %v2145 = vand.u32 %v2144, 4294901760
        %v2146 = vsub.f32 %v2144, %v2145
        %v2147 = vand.u32 %v2146, 4294901760
        %2148 = vmatmul.mubr.f32.gmra.mrb[0].mxu0 %v2147
        %v2149 = vpop.f32.mrb[0].mxu0
        %v2150 = vadd.f32 0.0, %v2149
        %v2151 = vpop.f32.mrb[0].mxu0
        %2152 = vdwg.mxu0
        %2153 = vmatprep.subr.mxu0 0.0
        %v2154 = vand.u32 %v2036, 4294901760
        %v2155 = vsub.f32 %v2036, %v2154
        %v2156 = vand.u32 %v2155, 4294901760
        %v2157 = vsub.f32 %v2155, %v2156
        %v2158 = vand.u32 %v2157, 4294901760
        %2159 = vmatpush1.msra.mxu0 %v2158
        %2160 = vmatprep.subr.mxu0 0.0
        %v2161 = vand.u32 %v2037, 4294901760
        %v2162 = vsub.f32 %v2037, %v2161
        %v2163 = vand.u32 %v2162, 4294901760
        %v2164 = vsub.f32 %v2162, %v2163
        %v2165 = vand.u32 %v2164, 4294901760
        %2166 = vmatpush1.msra.mxu0 %v2165
        %2167 = vmatprep.subr.mxu0 0.0
        %v2168 = vand.u32 %v2038, 4294901760
        %v2169 = vsub.f32 %v2038, %v2168
        %v2170 = vand.u32 %v2169, 4294901760
        %v2171 = vsub.f32 %v2169, %v2170
        %v2172 = vand.u32 %v2171, 4294901760
        %2173 = vmatpush1.msra.mxu0 %v2172
        %2174 = vmatprep.subr.mxu0 0.0
        %v2175 = vand.u32 %v2039, 4294901760
        %v2176 = vsub.f32 %v2039, %v2175
        %v2177 = vand.u32 %v2176, 4294901760
        %v2178 = vsub.f32 %v2176, %v2177
        %v2179 = vand.u32 %v2178, 4294901760
        %2180 = vmatpush1.msra.mxu0 %v2179
        %2181 = vmatprep.subr.mxu0 0.0
        %v2182 = vand.u32 %v2040, 4294901760
        %v2183 = vsub.f32 %v2040, %v2182
        %v2184 = vand.u32 %v2183, 4294901760
        %v2185 = vsub.f32 %v2183, %v2184
        %v2186 = vand.u32 %v2185, 4294901760
        %2187 = vmatpush1.msra.mxu0 %v2186
        %2188 = vmatprep.subr.mxu0 0.0
        %v2189 = vand.u32 %v2041, 4294901760
        %v2190 = vsub.f32 %v2041, %v2189
        %v2191 = vand.u32 %v2190, 4294901760
        %v2192 = vsub.f32 %v2190, %v2191
        %v2193 = vand.u32 %v2192, 4294901760
        %2194 = vmatpush1.msra.mxu0 %v2193
        %2195 = vmatprep.subr.mxu0 0.0
        %v2196 = vand.u32 %v2042, 4294901760
        %v2197 = vsub.f32 %v2042, %v2196
        %v2198 = vand.u32 %v2197, 4294901760
        %v2199 = vsub.f32 %v2197, %v2198
        %v2200 = vand.u32 %v2199, 4294901760
        %2201 = vmatpush1.msra.mxu0 %v2200
        %2202 = vmatprep.subr.mxu0 0.0
        %v2203 = vand.u32 %v2043, 4294901760
        %v2204 = vsub.f32 %v2043, %v2203
        %v2205 = vand.u32 %v2204, 4294901760
        %v2206 = vsub.f32 %v2204, %v2205
        %v2207 = vand.u32 %v2206, 4294901760
        %2208 = vmatpush1.msra.mxu0 %v2207
        %2209 = vmatprep.subr.mxu0 0.0
        %v2210 = vand.u32 %v2044, 4294901760
        %v2211 = vsub.f32 %v2044, %v2210
        %v2212 = vand.u32 %v2211, 4294901760
        %v2213 = vsub.f32 %v2211, %v2212
        %v2214 = vand.u32 %v2213, 4294901760
        %2215 = vmatpush1.msra.mxu0 %v2214
        %2216 = vmatprep.subr.mxu0 0.0
        %v2217 = vand.u32 %v2045, 4294901760
        %v2218 = vsub.f32 %v2045, %v2217
        %v2219 = vand.u32 %v2218, 4294901760
        %v2220 = vsub.f32 %v2218, %v2219
        %v2221 = vand.u32 %v2220, 4294901760
        %2222 = vmatpush1.msra.mxu0 %v2221
        %2223 = vmatprep.subr.mxu0 0.0
        %v2224 = vand.u32 %v2046, 4294901760
        %v2225 = vsub.f32 %v2046, %v2224
        %v2226 = vand.u32 %v2225, 4294901760
        %v2227 = vsub.f32 %v2225, %v2226
        %v2228 = vand.u32 %v2227, 4294901760
        %2229 = vmatpush1.msra.mxu0 %v2228
        %2230 = vmatprep.subr.mxu0 0.0
        %v2231 = vand.u32 %v2047, 4294901760
        %v2232 = vsub.f32 %v2047, %v2231
        %v2233 = vand.u32 %v2232, 4294901760
        %v2234 = vsub.f32 %v2232, %v2233
        %v2235 = vand.u32 %v2234, 4294901760
        %2236 = vmatpush1.msra.mxu0 %v2235
        %2237 = vmatprep.subr.mxu0 0.0
        %v2238 = vand.u32 %v2048, 4294901760
        %v2239 = vsub.f32 %v2048, %v2238
        %v2240 = vand.u32 %v2239, 4294901760
        %v2241 = vsub.f32 %v2239, %v2240
        %v2242 = vand.u32 %v2241, 4294901760
        %2243 = vmatpush1.msra.mxu0 %v2242
        %2244 = vmatprep.subr.mxu0 0.0
        %v2245 = vand.u32 %v2049, 4294901760
        %v2246 = vsub.f32 %v2049, %v2245
        %v2247 = vand.u32 %v2246, 4294901760
        %v2248 = vsub.f32 %v2246, %v2247
        %v2249 = vand.u32 %v2248, 4294901760
        %2250 = vmatpush1.msra.mxu0 %v2249
        %2251 = vmatprep.subr.mxu0 0.0
        %v2252 = vand.u32 %v2050, 4294901760
        %v2253 = vsub.f32 %v2050, %v2252
        %v2254 = vand.u32 %v2253, 4294901760
        %v2255 = vsub.f32 %v2253, %v2254
        %v2256 = vand.u32 %v2255, 4294901760
        %2257 = vmatpush1.msra.mxu0 %v2256
        %2258 = vmatprep.subr.mxu0 0.0
        %v2259 = vand.u32 %v2051, 4294901760
        %v2260 = vsub.f32 %v2051, %v2259
        %v2261 = vand.u32 %v2260, 4294901760
        %v2262 = vsub.f32 %v2260, %v2261
        %v2263 = vand.u32 %v2262, 4294901760
        %2264 = vmatpush1.msra.mxu0 %v2263
        %2265 = vmatprep.subr.mxu0 0.0
        %2266 = vmatpush1.msra.mxu0 0.0
        %2267 = vmatprep.subr.mxu0 0.0
        %2268 = vmatpush1.msra.mxu0 0.0
        %2269 = vmatprep.subr.mxu0 0.0
        %2270 = vmatpush1.msra.mxu0 0.0
        %2271 = vmatprep.subr.mxu0 0.0
        %2272 = vmatpush1.msra.mxu0 0.0
        %2273 = vmatprep.subr.mxu0 0.0
        %2274 = vmatpush1.msra.mxu0 0.0
        %2275 = vmatprep.subr.mxu0 0.0
        %2276 = vmatpush1.msra.mxu0 0.0
        %2277 = vmatprep.subr.mxu0 0.0
        %2278 = vmatpush1.msra.mxu0 0.0
        %2279 = vmatprep.subr.mxu0 0.0
        %2280 = vmatpush1.msra.mxu0 0.0
        %2281 = vmatprep.subr.mxu0 0.0
        %2282 = vmatpush1.msra.mxu0 0.0
        %2283 = vmatprep.subr.mxu0 0.0
        %2284 = vmatpush1.msra.mxu0 0.0
        %2285 = vmatprep.subr.mxu0 0.0
        %2286 = vmatpush1.msra.mxu0 0.0
        %2287 = vmatprep.subr.mxu0 0.0
        %2288 = vmatpush1.msra.mxu0 0.0
        %2289 = vmatprep.subr.mxu0 0.0
        %2290 = vmatpush1.msra.mxu0 0.0
        %2291 = vmatprep.subr.mxu0 0.0
        %2292 = vmatpush1.msra.mxu0 0.0
        %2293 = vmatprep.subr.mxu0 0.0
        %2294 = vmatpush1.msra.mxu0 0.0
        %2295 = vmatprep.subr.mxu0 0.0
        %2296 = vmatpush1.msra.mxu0 0.0
        %2297 = vmatprep.mubr.f32.mxu0 0.0
        %v2298 = vand.u32 %v2026, 4294901760
        %2299 = vmatmul.mubr.f32.gmra.mrb[0].mxu0 %v2298
        %v2300 = vpop.f32.mrb[0].mxu0
        %v2301 = vadd.f32 %v2140, %v2300
        %v2302 = vpop.f32.mrb[0].mxu0
        %2303 = vmatprep.mubr.f32.mxu0 0.0
        %v2304 = vand.u32 %v2032, 4294901760
        %2305 = vmatmul.mubr.f32.gmra.mrb[0].mxu0 %v2304
        %v2306 = vpop.f32.mrb[0].mxu0
        %v2307 = vadd.f32 %v2150, %v2306
        %v2308 = vpop.f32.mrb[0].mxu0
        %2309 = vdwg.mxu0
        %2310 = vmatprep.subr.mxu0 0.0
        %v2311 = vand.u32 %v2036, 4294901760
        %v2312 = vsub.f32 %v2036, %v2311
        %2313 = vmatpush1.msra.mxu0 %v2312
        %2314 = vmatprep.subr.mxu0 0.0
        %v2315 = vand.u32 %v2037, 4294901760
        %v2316 = vsub.f32 %v2037, %v2315
        %2317 = vmatpush1.msra.mxu0 %v2316
        %2318 = vmatprep.subr.mxu0 0.0
        %v2319 = vand.u32 %v2038, 4294901760
        %v2320 = vsub.f32 %v2038, %v2319
        %2321 = vmatpush1.msra.mxu0 %v2320
        %2322 = vmatprep.subr.mxu0 0.0
        %v2323 = vand.u32 %v2039, 4294901760
        %v2324 = vsub.f32 %v2039, %v2323
        %2325 = vmatpush1.msra.mxu0 %v2324
        %2326 = vmatprep.subr.mxu0 0.0
        %v2327 = vand.u32 %v2040, 4294901760
        %v2328 = vsub.f32 %v2040, %v2327
        %2329 = vmatpush1.msra.mxu0 %v2328
        %2330 = vmatprep.subr.mxu0 0.0
        %v2331 = vand.u32 %v2041, 4294901760
        %v2332 = vsub.f32 %v2041, %v2331
        %2333 = vmatpush1.msra.mxu0 %v2332
        %2334 = vmatprep.subr.mxu0 0.0
        %v2335 = vand.u32 %v2042, 4294901760
        %v2336 = vsub.f32 %v2042, %v2335
        %2337 = vmatpush1.msra.mxu0 %v2336
        %2338 = vmatprep.subr.mxu0 0.0
        %v2339 = vand.u32 %v2043, 4294901760
        %v2340 = vsub.f32 %v2043, %v2339
        %2341 = vmatpush1.msra.mxu0 %v2340
        %2342 = vmatprep.subr.mxu0 0.0
        %v2343 = vand.u32 %v2044, 4294901760
        %v2344 = vsub.f32 %v2044, %v2343
        %2345 = vmatpush1.msra.mxu0 %v2344
        %2346 = vmatprep.subr.mxu0 0.0
        %v2347 = vand.u32 %v2045, 4294901760
        %v2348 = vsub.f32 %v2045, %v2347
        %2349 = vmatpush1.msra.mxu0 %v2348
        %2350 = vmatprep.subr.mxu0 0.0
        %v2351 = vand.u32 %v2046, 4294901760
        %v2352 = vsub.f32 %v2046, %v2351
        %2353 = vmatpush1.msra.mxu0 %v2352
        %2354 = vmatprep.subr.mxu0 0.0
        %v2355 = vand.u32 %v2047, 4294901760
        %v2356 = vsub.f32 %v2047, %v2355
        %2357 = vmatpush1.msra.mxu0 %v2356
        %2358 = vmatprep.subr.mxu0 0.0
        %v2359 = vand.u32 %v2048, 4294901760
        %v2360 = vsub.f32 %v2048, %v2359
        %2361 = vmatpush1.msra.mxu0 %v2360
        %2362 = vmatprep.subr.mxu0 0.0
        %v2363 = vand.u32 %v2049, 4294901760
        %v2364 = vsub.f32 %v2049, %v2363
        %2365 = vmatpush1.msra.mxu0 %v2364
        %2366 = vmatprep.subr.mxu0 0.0
        %v2367 = vand.u32 %v2050, 4294901760
        %v2368 = vsub.f32 %v2050, %v2367
        %2369 = vmatpush1.msra.mxu0 %v2368
        %2370 = vmatprep.subr.mxu0 0.0
        %v2371 = vand.u32 %v2051, 4294901760
        %v2372 = vsub.f32 %v2051, %v2371
        %2373 = vmatpush1.msra.mxu0 %v2372
        %2374 = vmatprep.subr.mxu0 0.0
        %2375 = vmatpush1.msra.mxu0 0.0
        %2376 = vmatprep.subr.mxu0 0.0
        %2377 = vmatpush1.msra.mxu0 0.0
        %2378 = vmatprep.subr.mxu0 0.0
        %2379 = vmatpush1.msra.mxu0 0.0
        %2380 = vmatprep.subr.mxu0 0.0
        %2381 = vmatpush1.msra.mxu0 0.0
        %2382 = vmatprep.subr.mxu0 0.0
        %2383 = vmatpush1.msra.mxu0 0.0
        %2384 = vmatprep.subr.mxu0 0.0
        %2385 = vmatpush1.msra.mxu0 0.0
        %2386 = vmatprep.subr.mxu0 0.0
        %2387 = vmatpush1.msra.mxu0 0.0
        %2388 = vmatprep.subr.mxu0 0.0
        %2389 = vmatpush1.msra.mxu0 0.0
        %2390 = vmatprep.subr.mxu0 0.0
        %2391 = vmatpush1.msra.mxu0 0.0
        %2392 = vmatprep.subr.mxu0 0.0
        %2393 = vmatpush1.msra.mxu0 0.0
        %2394 = vmatprep.subr.mxu0 0.0
        %2395 = vmatpush1.msra.mxu0 0.0
        %2396 = vmatprep.subr.mxu0 0.0
        %2397 = vmatpush1.msra.mxu0 0.0
        %2398 = vmatprep.subr.mxu0 0.0
        %2399 = vmatpush1.msra.mxu0 0.0
        %2400 = vmatprep.subr.mxu0 0.0
        %2401 = vmatpush1.msra.mxu0 0.0
        %2402 = vmatprep.subr.mxu0 0.0
        %2403 = vmatpush1.msra.mxu0 0.0
        %2404 = vmatprep.subr.mxu0 0.0
        %2405 = vmatpush1.msra.mxu0 0.0
        %2406 = vmatprep.mubr.f32.mxu0 0.0
        %v2407 = vand.u32 %v2026, 4294901760
        %v2408 = vsub.f32 %v2026, %v2407
        %2409 = vmatmul.mubr.f32.gmra.mrb[0].mxu0 %v2408
        %v2410 = vpop.f32.mrb[0].mxu0
        %v2411 = vadd.f32 %v2301, %v2410
        %v2412 = vpop.f32.mrb[0].mxu0
        %2413 = vmatprep.mubr.f32.mxu0 0.0
        %v2414 = vand.u32 %v2032, 4294901760
        %v2415 = vsub.f32 %v2032, %v2414
        %2416 = vmatmul.mubr.f32.gmra.mrb[0].mxu0 %v2415
        %v2417 = vpop.f32.mrb[0].mxu0
        %v2418 = vadd.f32 %v2307, %v2417
        %v2419 = vpop.f32.mrb[0].mxu0
        %2420 = vdwg.mxu0
        %2421 = vmatprep.subr.mxu0 0.0
        %v2422 = vand.u32 %v2036, 4294901760
        %2423 = vmatpush1.msra.mxu0 %v2422
        %2424 = vmatprep.subr.mxu0 0.0
        %v2425 = vand.u32 %v2037, 4294901760
        %2426 = vmatpush1.msra.mxu0 %v2425
        %2427 = vmatprep.subr.mxu0 0.0
        %v2428 = vand.u32 %v2038, 4294901760
        %2429 = vmatpush1.msra.mxu0 %v2428
        %2430 = vmatprep.subr.mxu0 0.0
        %v2431 = vand.u32 %v2039, 4294901760
        %2432 = vmatpush1.msra.mxu0 %v2431
        %2433 = vmatprep.subr.mxu0 0.0
        %v2434 = vand.u32 %v2040, 4294901760
        %2435 = vmatpush1.msra.mxu0 %v2434
        %2436 = vmatprep.subr.mxu0 0.0
        %v2437 = vand.u32 %v2041, 4294901760
        %2438 = vmatpush1.msra.mxu0 %v2437
        %2439 = vmatprep.subr.mxu0 0.0
        %v2440 = vand.u32 %v2042, 4294901760
        %2441 = vmatpush1.msra.mxu0 %v2440
        %2442 = vmatprep.subr.mxu0 0.0
        %v2443 = vand.u32 %v2043, 4294901760
        %2444 = vmatpush1.msra.mxu0 %v2443
        %2445 = vmatprep.subr.mxu0 0.0
        %v2446 = vand.u32 %v2044, 4294901760
        %2447 = vmatpush1.msra.mxu0 %v2446
        %2448 = vmatprep.subr.mxu0 0.0
        %v2449 = vand.u32 %v2045, 4294901760
        %2450 = vmatpush1.msra.mxu0 %v2449
        %2451 = vmatprep.subr.mxu0 0.0
        %v2452 = vand.u32 %v2046, 4294901760
        %2453 = vmatpush1.msra.mxu0 %v2452
        %2454 = vmatprep.subr.mxu0 0.0
        %v2455 = vand.u32 %v2047, 4294901760
        %2456 = vmatpush1.msra.mxu0 %v2455
        %2457 = vmatprep.subr.mxu0 0.0
        %v2458 = vand.u32 %v2048, 4294901760
        %2459 = vmatpush1.msra.mxu0 %v2458
        %2460 = vmatprep.subr.mxu0 0.0
        %v2461 = vand.u32 %v2049, 4294901760
        %2462 = vmatpush1.msra.mxu0 %v2461
        %2463 = vmatprep.subr.mxu0 0.0
        %v2464 = vand.u32 %v2050, 4294901760
        %2465 = vmatpush1.msra.mxu0 %v2464
        %2466 = vmatprep.subr.mxu0 0.0
        %v2467 = vand.u32 %v2051, 4294901760
        %2468 = vmatpush1.msra.mxu0 %v2467
        %2469 = vmatprep.subr.mxu0 0.0
        %2470 = vmatpush1.msra.mxu0 0.0
        %2471 = vmatprep.subr.mxu0 0.0
        %2472 = vmatpush1.msra.mxu0 0.0
        %2473 = vmatprep.subr.mxu0 0.0
        %2474 = vmatpush1.msra.mxu0 0.0
        %2475 = vmatprep.subr.mxu0 0.0
        %2476 = vmatpush1.msra.mxu0 0.0
        %2477 = vmatprep.subr.mxu0 0.0
        %2478 = vmatpush1.msra.mxu0 0.0
        %2479 = vmatprep.subr.mxu0 0.0
        %2480 = vmatpush1.msra.mxu0 0.0
        %2481 = vmatprep.subr.mxu0 0.0
        %2482 = vmatpush1.msra.mxu0 0.0
        %2483 = vmatprep.subr.mxu0 0.0
        %2484 = vmatpush1.msra.mxu0 0.0
        %2485 = vmatprep.subr.mxu0 0.0
        %2486 = vmatpush1.msra.mxu0 0.0
        %2487 = vmatprep.subr.mxu0 0.0
        %2488 = vmatpush1.msra.mxu0 0.0
        %2489 = vmatprep.subr.mxu0 0.0
        %2490 = vmatpush1.msra.mxu0 0.0
        %2491 = vmatprep.subr.mxu0 0.0
        %2492 = vmatpush1.msra.mxu0 0.0
        %2493 = vmatprep.subr.mxu0 0.0
        %2494 = vmatpush1.msra.mxu0 0.0
        %2495 = vmatprep.subr.mxu0 0.0
        %2496 = vmatpush1.msra.mxu0 0.0
        %2497 = vmatprep.subr.mxu0 0.0
        %2498 = vmatpush1.msra.mxu0 0.0
        %2499 = vmatprep.subr.mxu0 0.0
        %2500 = vmatpush1.msra.mxu0 0.0
        %2501 = vmatprep.mubr.f32.mxu0 0.0
        %v2502 = vand.u32 %v2026, 4294901760
        %v2503 = vsub.f32 %v2026, %v2502
        %v2504 = vand.u32 %v2503, 4294901760
        %2505 = vmatmul.mubr.f32.gmra.mrb[0].mxu0 %v2504
        %v2506 = vpop.f32.mrb[0].mxu0
        %v2507 = vadd.f32 %v2411, %v2506
        %v2508 = vpop.f32.mrb[0].mxu0
        %2509 = vmatprep.mubr.f32.mxu0 0.0
        %v2510 = vand.u32 %v2032, 4294901760
        %v2511 = vsub.f32 %v2032, %v2510
        %v2512 = vand.u32 %v2511, 4294901760
        %2513 = vmatmul.mubr.f32.gmra.mrb[0].mxu0 %v2512
        %v2514 = vpop.f32.mrb[0].mxu0
        %v2515 = vadd.f32 %v2418, %v2514
        %v2516 = vpop.f32.mrb[0].mxu0
        %2517 = vdwg.mxu0
        %2518 = vmatprep.subr.mxu0 0.0
        %v2519 = vand.u32 %v2036, 4294901760
        %v2520 = vsub.f32 %v2036, %v2519
        %v2521 = vand.u32 %v2520, 4294901760
        %2522 = vmatpush1.msra.mxu0 %v2521
        %2523 = vmatprep.subr.mxu0 0.0
        %v2524 = vand.u32 %v2037, 4294901760
        %v2525 = vsub.f32 %v2037, %v2524
        %v2526 = vand.u32 %v2525, 4294901760
        %2527 = vmatpush1.msra.mxu0 %v2526
        %2528 = vmatprep.subr.mxu0 0.0
        %v2529 = vand.u32 %v2038, 4294901760
        %v2530 = vsub.f32 %v2038, %v2529
        %v2531 = vand.u32 %v2530, 4294901760
        %2532 = vmatpush1.msra.mxu0 %v2531
        %2533 = vmatprep.subr.mxu0 0.0
        %v2534 = vand.u32 %v2039, 4294901760
        %v2535 = vsub.f32 %v2039, %v2534
        %v2536 = vand.u32 %v2535, 4294901760
        %2537 = vmatpush1.msra.mxu0 %v2536
        %2538 = vmatprep.subr.mxu0 0.0
        %v2539 = vand.u32 %v2040, 4294901760
        %v2540 = vsub.f32 %v2040, %v2539
        %v2541 = vand.u32 %v2540, 4294901760
        %2542 = vmatpush1.msra.mxu0 %v2541
        %2543 = vmatprep.subr.mxu0 0.0
        %v2544 = vand.u32 %v2041, 4294901760
        %v2545 = vsub.f32 %v2041, %v2544
        %v2546 = vand.u32 %v2545, 4294901760
        %2547 = vmatpush1.msra.mxu0 %v2546
        %2548 = vmatprep.subr.mxu0 0.0
        %v2549 = vand.u32 %v2042, 4294901760
        %v2550 = vsub.f32 %v2042, %v2549
        %v2551 = vand.u32 %v2550, 4294901760
        %2552 = vmatpush1.msra.mxu0 %v2551
        %2553 = vmatprep.subr.mxu0 0.0
        %v2554 = vand.u32 %v2043, 4294901760
        %v2555 = vsub.f32 %v2043, %v2554
        %v2556 = vand.u32 %v2555, 4294901760
        %2557 = vmatpush1.msra.mxu0 %v2556
        %2558 = vmatprep.subr.mxu0 0.0
        %v2559 = vand.u32 %v2044, 4294901760
        %v2560 = vsub.f32 %v2044, %v2559
        %v2561 = vand.u32 %v2560, 4294901760
        %2562 = vmatpush1.msra.mxu0 %v2561
        %2563 = vmatprep.subr.mxu0 0.0
        %v2564 = vand.u32 %v2045, 4294901760
        %v2565 = vsub.f32 %v2045, %v2564
        %v2566 = vand.u32 %v2565, 4294901760
        %2567 = vmatpush1.msra.mxu0 %v2566
        %2568 = vmatprep.subr.mxu0 0.0
        %v2569 = vand.u32 %v2046, 4294901760
        %v2570 = vsub.f32 %v2046, %v2569
        %v2571 = vand.u32 %v2570, 4294901760
        %2572 = vmatpush1.msra.mxu0 %v2571
        %2573 = vmatprep.subr.mxu0 0.0
        %v2574 = vand.u32 %v2047, 4294901760
        %v2575 = vsub.f32 %v2047, %v2574
        %v2576 = vand.u32 %v2575, 4294901760
        %2577 = vmatpush1.msra.mxu0 %v2576
        %2578 = vmatprep.subr.mxu0 0.0
        %v2579 = vand.u32 %v2048, 4294901760
        %v2580 = vsub.f32 %v2048, %v2579
        %v2581 = vand.u32 %v2580, 4294901760
        %2582 = vmatpush1.msra.mxu0 %v2581
        %2583 = vmatprep.subr.mxu0 0.0
        %v2584 = vand.u32 %v2049, 4294901760
        %v2585 = vsub.f32 %v2049, %v2584
        %v2586 = vand.u32 %v2585, 4294901760
        %2587 = vmatpush1.msra.mxu0 %v2586
        %2588 = vmatprep.subr.mxu0 0.0
        %v2589 = vand.u32 %v2050, 4294901760
        %v2590 = vsub.f32 %v2050, %v2589
        %v2591 = vand.u32 %v2590, 4294901760
        %2592 = vmatpush1.msra.mxu0 %v2591
        %2593 = vmatprep.subr.mxu0 0.0
        %v2594 = vand.u32 %v2051, 4294901760
        %v2595 = vsub.f32 %v2051, %v2594
        %v2596 = vand.u32 %v2595, 4294901760
        %2597 = vmatpush1.msra.mxu0 %v2596
        %2598 = vmatprep.subr.mxu0 0.0
        %2599 = vmatpush1.msra.mxu0 0.0
        %2600 = vmatprep.subr.mxu0 0.0
        %2601 = vmatpush1.msra.mxu0 0.0
        %2602 = vmatprep.subr.mxu0 0.0
        %2603 = vmatpush1.msra.mxu0 0.0
        %2604 = vmatprep.subr.mxu0 0.0
        %2605 = vmatpush1.msra.mxu0 0.0
        %2606 = vmatprep.subr.mxu0 0.0
        %2607 = vmatpush1.msra.mxu0 0.0
        %2608 = vmatprep.subr.mxu0 0.0
        %2609 = vmatpush1.msra.mxu0 0.0
        %2610 = vmatprep.subr.mxu0 0.0
        %2611 = vmatpush1.msra.mxu0 0.0
        %2612 = vmatprep.subr.mxu0 0.0
        %2613 = vmatpush1.msra.mxu0 0.0
        %2614 = vmatprep.subr.mxu0 0.0
        %2615 = vmatpush1.msra.mxu0 0.0
        %2616 = vmatprep.subr.mxu0 0.0
        %2617 = vmatpush1.msra.mxu0 0.0
        %2618 = vmatprep.subr.mxu0 0.0
        %2619 = vmatpush1.msra.mxu0 0.0
        %2620 = vmatprep.subr.mxu0 0.0
        %2621 = vmatpush1.msra.mxu0 0.0
        %2622 = vmatprep.subr.mxu0 0.0
        %2623 = vmatpush1.msra.mxu0 0.0
        %2624 = vmatprep.subr.mxu0 0.0
        %2625 = vmatpush1.msra.mxu0 0.0
        %2626 = vmatprep.subr.mxu0 0.0
        %2627 = vmatpush1.msra.mxu0 0.0
        %2628 = vmatprep.subr.mxu0 0.0
        %2629 = vmatpush1.msra.mxu0 0.0
        %2630 = vmatprep.mubr.f32.mxu0 0.0
        %v2631 = vand.u32 %v2026, 4294901760
        %2632 = vmatmul.mubr.f32.gmra.mrb[0].mxu0 %v2631
        %v2633 = vpop.f32.mrb[0].mxu0
        %v2634 = vadd.f32 %v2507, %v2633
        %v2635 = vpop.f32.mrb[0].mxu0
        %2636 = vmatprep.mubr.f32.mxu0 0.0
        %v2637 = vand.u32 %v2032, 4294901760
        %2638 = vmatmul.mubr.f32.gmra.mrb[0].mxu0 %v2637
        %v2639 = vpop.f32.mrb[0].mxu0
        %v2640 = vadd.f32 %v2515, %v2639
        %v2641 = vpop.f32.mrb[0].mxu0
        %2642 = vdwg.mxu0
        %2643 = vmatprep.subr.mxu0 0.0
        %v2644 = vand.u32 %v2036, 4294901760
        %2645 = vmatpush1.msra.mxu0 %v2644
        %2646 = vmatprep.subr.mxu0 0.0
        %v2647 = vand.u32 %v2037, 4294901760
        %2648 = vmatpush1.msra.mxu0 %v2647
        %2649 = vmatprep.subr.mxu0 0.0
        %v2650 = vand.u32 %v2038, 4294901760
        %2651 = vmatpush1.msra.mxu0 %v2650
        %2652 = vmatprep.subr.mxu0 0.0
        %v2653 = vand.u32 %v2039, 4294901760
        %2654 = vmatpush1.msra.mxu0 %v2653
        %2655 = vmatprep.subr.mxu0 0.0
        %v2656 = vand.u32 %v2040, 4294901760
        %2657 = vmatpush1.msra.mxu0 %v2656
        %2658 = vmatprep.subr.mxu0 0.0
        %v2659 = vand.u32 %v2041, 4294901760
        %2660 = vmatpush1.msra.mxu0 %v2659
        %2661 = vmatprep.subr.mxu0 0.0
        %v2662 = vand.u32 %v2042, 4294901760
        %2663 = vmatpush1.msra.mxu0 %v2662
        %2664 = vmatprep.subr.mxu0 0.0
        %v2665 = vand.u32 %v2043, 4294901760
        %2666 = vmatpush1.msra.mxu0 %v2665
        %2667 = vmatprep.subr.mxu0 0.0
        %v2668 = vand.u32 %v2044, 4294901760
        %2669 = vmatpush1.msra.mxu0 %v2668
        %2670 = vmatprep.subr.mxu0 0.0
        %v2671 = vand.u32 %v2045, 4294901760
        %2672 = vmatpush1.msra.mxu0 %v2671
        %2673 = vmatprep.subr.mxu0 0.0
        %v2674 = vand.u32 %v2046, 4294901760
        %2675 = vmatpush1.msra.mxu0 %v2674
        %2676 = vmatprep.subr.mxu0 0.0
        %v2677 = vand.u32 %v2047, 4294901760
        %2678 = vmatpush1.msra.mxu0 %v2677
        %2679 = vmatprep.subr.mxu0 0.0
        %v2680 = vand.u32 %v2048, 4294901760
        %2681 = vmatpush1.msra.mxu0 %v2680
        %2682 = vmatprep.subr.mxu0 0.0
        %v2683 = vand.u32 %v2049, 4294901760
        %2684 = vmatpush1.msra.mxu0 %v2683
        %2685 = vmatprep.subr.mxu0 0.0
        %v2686 = vand.u32 %v2050, 4294901760
        %2687 = vmatpush1.msra.mxu0 %v2686
        %2688 = vmatprep.subr.mxu0 0.0
        %v2689 = vand.u32 %v2051, 4294901760
        %2690 = vmatpush1.msra.mxu0 %v2689
        %2691 = vmatprep.subr.mxu0 0.0
        %2692 = vmatpush1.msra.mxu0 0.0
        %2693 = vmatprep.subr.mxu0 0.0
        %2694 = vmatpush1.msra.mxu0 0.0
        %2695 = vmatprep.subr.mxu0 0.0
        %2696 = vmatpush1.msra.mxu0 0.0
        %2697 = vmatprep.subr.mxu0 0.0
        %2698 = vmatpush1.msra.mxu0 0.0
        %2699 = vmatprep.subr.mxu0 0.0
        %2700 = vmatpush1.msra.mxu0 0.0
        %2701 = vmatprep.subr.mxu0 0.0
        %2702 = vmatpush1.msra.mxu0 0.0
        %2703 = vmatprep.subr.mxu0 0.0
        %2704 = vmatpush1.msra.mxu0 0.0
        %2705 = vmatprep.subr.mxu0 0.0
        %2706 = vmatpush1.msra.mxu0 0.0
        %2707 = vmatprep.subr.mxu0 0.0
        %2708 = vmatpush1.msra.mxu0 0.0
        %2709 = vmatprep.subr.mxu0 0.0
        %2710 = vmatpush1.msra.mxu0 0.0
        %2711 = vmatprep.subr.mxu0 0.0
        %2712 = vmatpush1.msra.mxu0 0.0
        %2713 = vmatprep.subr.mxu0 0.0
        %2714 = vmatpush1.msra.mxu0 0.0
        %2715 = vmatprep.subr.mxu0 0.0
        %2716 = vmatpush1.msra.mxu0 0.0
        %2717 = vmatprep.subr.mxu0 0.0
        %2718 = vmatpush1.msra.mxu0 0.0
        %2719 = vmatprep.subr.mxu0 0.0
        %2720 = vmatpush1.msra.mxu0 0.0
        %2721 = vmatprep.subr.mxu0 0.0
        %2722 = vmatpush1.msra.mxu0 0.0
        %2723 = vmatprep.mubr.f32.mxu0 0.0
        %v2724 = vand.u32 %v2026, 4294901760
        %2725 = vmatmul.mubr.f32.gmra.mrb[0].mxu0 %v2724
        %v2726 = vpop.f32.mrb[0].mxu0
        %v2727 = vadd.f32 %v2634, %v2726
        %v2728 = vpop.f32.mrb[0].mxu0
        %2729 = vmatprep.mubr.f32.mxu0 0.0
        %v2730 = vand.u32 %v2032, 4294901760
        %2731 = vmatmul.mubr.f32.gmra.mrb[0].mxu0 %v2730
        %v2732 = vpop.f32.mrb[0].mxu0
        %v2733 = vadd.f32 %v2640, %v2732
        %v2734 = vpop.f32.mrb[0].mxu0
        %2735 = vdwg.mxu0
        %v2736 = vadd.f32 %v1522, %v2727
        %v2737 = vadd.f32 %v1523, %v2733
        %s2738 = scalar_lea.vmem %s263, 32 [#allocation2]
        %v2739 = vld [vmem:[%s2738] sm:$0xff]
        %v2740 = vld [vmem:[%s2738 + $0x8] sm:$0xff]
        %v2742 = vsel %vm313, %v2739, 0
        %v2745 = vsel %vm313, %v2740, 0
        %2747 = vmatprep.subr.mxu0 0.0
        %v2748 = vand.u32 %v302, 4294901760
        %2749 = vmatpush1.msra.mxu0 %v2748
        %2750 = vmatprep.subr.mxu0 0.0
        %v2751 = vand.u32 %v303, 4294901760
        %2752 = vmatpush1.msra.mxu0 %v2751
        %2753 = vmatprep.subr.mxu0 0.0
        %2754 = vmatpush1.msra.mxu0 0.0
        %2755 = vmatprep.subr.mxu0 0.0
        %2756 = vmatpush1.msra.mxu0 0.0
        %2757 = vmatprep.subr.mxu0 0.0
        %2758 = vmatpush1.msra.mxu0 0.0
        %2759 = vmatprep.subr.mxu0 0.0
        %2760 = vmatpush1.msra.mxu0 0.0
        %2761 = vmatprep.subr.mxu0 0.0
        %2762 = vmatpush1.msra.mxu0 0.0
        %2763 = vmatprep.subr.mxu0 0.0
        %2764 = vmatpush1.msra.mxu0 0.0
        %2765 = vmatprep.subr.mxu0 0.0
        %2766 = vmatpush1.msra.mxu0 0.0
        %2767 = vmatprep.subr.mxu0 0.0
        %2768 = vmatpush1.msra.mxu0 0.0
        %2769 = vmatprep.subr.mxu0 0.0
        %2770 = vmatpush1.msra.mxu0 0.0
        %2771 = vmatprep.subr.mxu0 0.0
        %2772 = vmatpush1.msra.mxu0 0.0
        %2773 = vmatprep.subr.mxu0 0.0
        %2774 = vmatpush1.msra.mxu0 0.0
        %2775 = vmatprep.subr.mxu0 0.0
        %2776 = vmatpush1.msra.mxu0 0.0
        %2777 = vmatprep.subr.mxu0 0.0
        %2778 = vmatpush1.msra.mxu0 0.0
        %2779 = vmatprep.subr.mxu0 0.0
        %2780 = vmatpush1.msra.mxu0 0.0
        %2781 = vmatprep.subr.mxu0 0.0
        %2782 = vmatpush1.msra.mxu0 0.0
        %2783 = vmatprep.subr.mxu0 0.0
        %2784 = vmatpush1.msra.mxu0 0.0
        %2785 = vmatprep.subr.mxu0 0.0
        %2786 = vmatpush1.msra.mxu0 0.0
        %2787 = vmatprep.subr.mxu0 0.0
        %2788 = vmatpush1.msra.mxu0 0.0
        %2789 = vmatprep.subr.mxu0 0.0
        %2790 = vmatpush1.msra.mxu0 0.0
        %2791 = vmatprep.subr.mxu0 0.0
        %2792 = vmatpush1.msra.mxu0 0.0
        %2793 = vmatprep.subr.mxu0 0.0
        %2794 = vmatpush1.msra.mxu0 0.0
        %2795 = vmatprep.subr.mxu0 0.0
        %2796 = vmatpush1.msra.mxu0 0.0
        %2797 = vmatprep.subr.mxu0 0.0
        %2798 = vmatpush1.msra.mxu0 0.0
        %2799 = vmatprep.subr.mxu0 0.0
        %2800 = vmatpush1.msra.mxu0 0.0
        %2801 = vmatprep.subr.mxu0 0.0
        %2802 = vmatpush1.msra.mxu0 0.0
        %2803 = vmatprep.subr.mxu0 0.0
        %2804 = vmatpush1.msra.mxu0 0.0
        %2805 = vmatprep.subr.mxu0 0.0
        %2806 = vmatpush1.msra.mxu0 0.0
        %2807 = vmatprep.subr.mxu0 0.0
        %2808 = vmatpush1.msra.mxu0 0.0
        %2809 = vmatprep.subr.mxu0 0.0
        %2810 = vmatpush1.msra.mxu0 0.0
        %2811 = vmatprep.subr.mxu0 0.0
        %2812 = vmatpush1.msra.mxu0 0.0
        %2813 = vmatprep.mubr.f32.mxu0 0.0
        %v2814 = vand.u32 %v2742, 4294901760
        %v2815 = vsub.f32 %v2742, %v2814
        %v2816 = vand.u32 %v2815, 4294901760
        %v2817 = vsub.f32 %v2815, %v2816
        %v2818 = vand.u32 %v2817, 4294901760
        %2819 = vmatmul.mubr.f32.gmra.mrb[0].mxu0 %v2818
        %v2820 = vpop.f32.mrb[0].mxu0
        %v2821 = vadd.f32 0.0, %v2820
        %v2822 = vpop.f32.mrb[0].mxu0
        %2823 = vmatprep.mubr.f32.mxu0 0.0
        %v2824 = vand.u32 %v2745, 4294901760
        %v2825 = vsub.f32 %v2745, %v2824
        %v2826 = vand.u32 %v2825, 4294901760
        %v2827 = vsub.f32 %v2825, %v2826
        %v2828 = vand.u32 %v2827, 4294901760
        %2829 = vmatmul.mubr.f32.gmra.mrb[0].mxu0 %v2828
        %v2830 = vpop.f32.mrb[0].mxu0
        %v2831 = vadd.f32 0.0, %v2830
        %v2832 = vpop.f32.mrb[0].mxu0
        %2833 = vdwg.mxu0
        %2834 = vmatprep.subr.mxu0 0.0
        %v2835 = vand.u32 %v302, 4294901760
        %v2836 = vsub.f32 %v302, %v2835
        %v2837 = vand.u32 %v2836, 4294901760
        %v2838 = vsub.f32 %v2836, %v2837
        %v2839 = vand.u32 %v2838, 4294901760
        %2840 = vmatpush1.msra.mxu0 %v2839
        %2841 = vmatprep.subr.mxu0 0.0
        %v2842 = vand.u32 %v303, 4294901760
        %v2843 = vsub.f32 %v303, %v2842
        %v2844 = vand.u32 %v2843, 4294901760
        %v2845 = vsub.f32 %v2843, %v2844
        %v2846 = vand.u32 %v2845, 4294901760
        %2847 = vmatpush1.msra.mxu0 %v2846
        %2848 = vmatprep.subr.mxu0 0.0
        %2849 = vmatpush1.msra.mxu0 0.0
        %2850 = vmatprep.subr.mxu0 0.0
        %2851 = vmatpush1.msra.mxu0 0.0
        %2852 = vmatprep.subr.mxu0 0.0
        %2853 = vmatpush1.msra.mxu0 0.0
        %2854 = vmatprep.subr.mxu0 0.0
        %2855 = vmatpush1.msra.mxu0 0.0
        %2856 = vmatprep.subr.mxu0 0.0
        %2857 = vmatpush1.msra.mxu0 0.0
        %2858 = vmatprep.subr.mxu0 0.0
        %2859 = vmatpush1.msra.mxu0 0.0
        %2860 = vmatprep.subr.mxu0 0.0
        %2861 = vmatpush1.msra.mxu0 0.0
        %2862 = vmatprep.subr.mxu0 0.0
        %2863 = vmatpush1.msra.mxu0 0.0
        %2864 = vmatprep.subr.mxu0 0.0
        %2865 = vmatpush1.msra.mxu0 0.0
        %2866 = vmatprep.subr.mxu0 0.0
        %2867 = vmatpush1.msra.mxu0 0.0
        %2868 = vmatprep.subr.mxu0 0.0
        %2869 = vmatpush1.msra.mxu0 0.0
        %2870 = vmatprep.subr.mxu0 0.0
        %2871 = vmatpush1.msra.mxu0 0.0
        %2872 = vmatprep.subr.mxu0 0.0
        %2873 = vmatpush1.msra.mxu0 0.0
        %2874 = vmatprep.subr.mxu0 0.0
        %2875 = vmatpush1.msra.mxu0 0.0
        %2876 = vmatprep.subr.mxu0 0.0
        %2877 = vmatpush1.msra.mxu0 0.0
        %2878 = vmatprep.subr.mxu0 0.0
        %2879 = vmatpush1.msra.mxu0 0.0
        %2880 = vmatprep.subr.mxu0 0.0
        %2881 = vmatpush1.msra.mxu0 0.0
        %2882 = vmatprep.subr.mxu0 0.0
        %2883 = vmatpush1.msra.mxu0 0.0
        %2884 = vmatprep.subr.mxu0 0.0
        %2885 = vmatpush1.msra.mxu0 0.0
        %2886 = vmatprep.subr.mxu0 0.0
        %2887 = vmatpush1.msra.mxu0 0.0
        %2888 = vmatprep.subr.mxu0 0.0
        %2889 = vmatpush1.msra.mxu0 0.0
        %2890 = vmatprep.subr.mxu0 0.0
        %2891 = vmatpush1.msra.mxu0 0.0
        %2892 = vmatprep.subr.mxu0 0.0
        %2893 = vmatpush1.msra.mxu0 0.0
        %2894 = vmatprep.subr.mxu0 0.0
        %2895 = vmatpush1.msra.mxu0 0.0
        %2896 = vmatprep.subr.mxu0 0.0
        %2897 = vmatpush1.msra.mxu0 0.0
        %2898 = vmatprep.subr.mxu0 0.0
        %2899 = vmatpush1.msra.mxu0 0.0
        %2900 = vmatprep.subr.mxu0 0.0
        %2901 = vmatpush1.msra.mxu0 0.0
        %2902 = vmatprep.subr.mxu0 0.0
        %2903 = vmatpush1.msra.mxu0 0.0
        %2904 = vmatprep.subr.mxu0 0.0
        %2905 = vmatpush1.msra.mxu0 0.0
        %2906 = vmatprep.subr.mxu0 0.0
        %2907 = vmatpush1.msra.mxu0 0.0
        %2908 = vmatprep.mubr.f32.mxu0 0.0
        %v2909 = vand.u32 %v2742, 4294901760
        %2910 = vmatmul.mubr.f32.gmra.mrb[0].mxu0 %v2909
        %v2911 = vpop.f32.mrb[0].mxu0
        %v2912 = vadd.f32 %v2821, %v2911
        %v2913 = vpop.f32.mrb[0].mxu0
        %2914 = vmatprep.mubr.f32.mxu0 0.0
        %v2915 = vand.u32 %v2745, 4294901760
        %2916 = vmatmul.mubr.f32.gmra.mrb[0].mxu0 %v2915
        %v2917 = vpop.f32.mrb[0].mxu0
        %v2918 = vadd.f32 %v2831, %v2917
        %v2919 = vpop.f32.mrb[0].mxu0
        %2920 = vdwg.mxu0
        %2921 = vmatprep.subr.mxu0 0.0
        %v2922 = vand.u32 %v302, 4294901760
        %v2923 = vsub.f32 %v302, %v2922
        %2924 = vmatpush1.msra.mxu0 %v2923
        %2925 = vmatprep.subr.mxu0 0.0
        %v2926 = vand.u32 %v303, 4294901760
        %v2927 = vsub.f32 %v303, %v2926
        %2928 = vmatpush1.msra.mxu0 %v2927
        %2929 = vmatprep.subr.mxu0 0.0
        %2930 = vmatpush1.msra.mxu0 0.0
        %2931 = vmatprep.subr.mxu0 0.0
        %2932 = vmatpush1.msra.mxu0 0.0
        %2933 = vmatprep.subr.mxu0 0.0
        %2934 = vmatpush1.msra.mxu0 0.0
        %2935 = vmatprep.subr.mxu0 0.0
        %2936 = vmatpush1.msra.mxu0 0.0
        %2937 = vmatprep.subr.mxu0 0.0
        %2938 = vmatpush1.msra.mxu0 0.0
        %2939 = vmatprep.subr.mxu0 0.0
        %2940 = vmatpush1.msra.mxu0 0.0
        %2941 = vmatprep.subr.mxu0 0.0
        %2942 = vmatpush1.msra.mxu0 0.0
        %2943 = vmatprep.subr.mxu0 0.0
        %2944 = vmatpush1.msra.mxu0 0.0
        %2945 = vmatprep.subr.mxu0 0.0
        %2946 = vmatpush1.msra.mxu0 0.0
        %2947 = vmatprep.subr.mxu0 0.0
        %2948 = vmatpush1.msra.mxu0 0.0
        %2949 = vmatprep.subr.mxu0 0.0
        %2950 = vmatpush1.msra.mxu0 0.0
        %2951 = vmatprep.subr.mxu0 0.0
        %2952 = vmatpush1.msra.mxu0 0.0
        %2953 = vmatprep.subr.mxu0 0.0
        %2954 = vmatpush1.msra.mxu0 0.0
        %2955 = vmatprep.subr.mxu0 0.0
        %2956 = vmatpush1.msra.mxu0 0.0
        %2957 = vmatprep.subr.mxu0 0.0
        %2958 = vmatpush1.msra.mxu0 0.0
        %2959 = vmatprep.subr.mxu0 0.0
        %2960 = vmatpush1.msra.mxu0 0.0
        %2961 = vmatprep.subr.mxu0 0.0
        %2962 = vmatpush1.msra.mxu0 0.0
        %2963 = vmatprep.subr.mxu0 0.0
        %2964 = vmatpush1.msra.mxu0 0.0
        %2965 = vmatprep.subr.mxu0 0.0
        %2966 = vmatpush1.msra.mxu0 0.0
        %2967 = vmatprep.subr.mxu0 0.0
        %2968 = vmatpush1.msra.mxu0 0.0
        %2969 = vmatprep.subr.mxu0 0.0
        %2970 = vmatpush1.msra.mxu0 0.0
        %2971 = vmatprep.subr.mxu0 0.0
        %2972 = vmatpush1.msra.mxu0 0.0
        %2973 = vmatprep.subr.mxu0 0.0
        %2974 = vmatpush1.msra.mxu0 0.0
        %2975 = vmatprep.subr.mxu0 0.0
        %2976 = vmatpush1.msra.mxu0 0.0
        %2977 = vmatprep.subr.mxu0 0.0
        %2978 = vmatpush1.msra.mxu0 0.0
        %2979 = vmatprep.subr.mxu0 0.0
        %2980 = vmatpush1.msra.mxu0 0.0
        %2981 = vmatprep.subr.mxu0 0.0
        %2982 = vmatpush1.msra.mxu0 0.0
        %2983 = vmatprep.subr.mxu0 0.0
        %2984 = vmatpush1.msra.mxu0 0.0
        %2985 = vmatprep.subr.mxu0 0.0
        %2986 = vmatpush1.msra.mxu0 0.0
        %2987 = vmatprep.subr.mxu0 0.0
        %2988 = vmatpush1.msra.mxu0 0.0
        %2989 = vmatprep.mubr.f32.mxu0 0.0
        %v2990 = vand.u32 %v2742, 4294901760
        %v2991 = vsub.f32 %v2742, %v2990
        %2992 = vmatmul.mubr.f32.gmra.mrb[0].mxu0 %v2991
        %v2993 = vpop.f32.mrb[0].mxu0
        %v2994 = vadd.f32 %v2912, %v2993
        %v2995 = vpop.f32.mrb[0].mxu0
        %2996 = vmatprep.mubr.f32.mxu0 0.0
        %v2997 = vand.u32 %v2745, 4294901760
        %v2998 = vsub.f32 %v2745, %v2997
        %2999 = vmatmul.mubr.f32.gmra.mrb[0].mxu0 %v2998
        %v3000 = vpop.f32.mrb[0].mxu0
        %v3001 = vadd.f32 %v2918, %v3000
        %v3002 = vpop.f32.mrb[0].mxu0
        %3003 = vdwg.mxu0
        %3004 = vmatprep.subr.mxu0 0.0
        %v3005 = vand.u32 %v302, 4294901760
        %3006 = vmatpush1.msra.mxu0 %v3005
        %3007 = vmatprep.subr.mxu0 0.0
        %v3008 = vand.u32 %v303, 4294901760
        %3009 = vmatpush1.msra.mxu0 %v3008
        %3010 = vmatprep.subr.mxu0 0.0
        %3011 = vmatpush1.msra.mxu0 0.0
        %3012 = vmatprep.subr.mxu0 0.0
        %3013 = vmatpush1.msra.mxu0 0.0
        %3014 = vmatprep.subr.mxu0 0.0
        %3015 = vmatpush1.msra.mxu0 0.0
        %3016 = vmatprep.subr.mxu0 0.0
        %3017 = vmatpush1.msra.mxu0 0.0
        %3018 = vmatprep.subr.mxu0 0.0
        %3019 = vmatpush1.msra.mxu0 0.0
        %3020 = vmatprep.subr.mxu0 0.0
        %3021 = vmatpush1.msra.mxu0 0.0
        %3022 = vmatprep.subr.mxu0 0.0
        %3023 = vmatpush1.msra.mxu0 0.0
        %3024 = vmatprep.subr.mxu0 0.0
        %3025 = vmatpush1.msra.mxu0 0.0
        %3026 = vmatprep.subr.mxu0 0.0
        %3027 = vmatpush1.msra.mxu0 0.0
        %3028 = vmatprep.subr.mxu0 0.0
        %3029 = vmatpush1.msra.mxu0 0.0
        %3030 = vmatprep.subr.mxu0 0.0
        %3031 = vmatpush1.msra.mxu0 0.0
        %3032 = vmatprep.subr.mxu0 0.0
        %3033 = vmatpush1.msra.mxu0 0.0
        %3034 = vmatprep.subr.mxu0 0.0
        %3035 = vmatpush1.msra.mxu0 0.0
        %3036 = vmatprep.subr.mxu0 0.0
        %3037 = vmatpush1.msra.mxu0 0.0
        %3038 = vmatprep.subr.mxu0 0.0
        %3039 = vmatpush1.msra.mxu0 0.0
        %3040 = vmatprep.subr.mxu0 0.0
        %3041 = vmatpush1.msra.mxu0 0.0
        %3042 = vmatprep.subr.mxu0 0.0
        %3043 = vmatpush1.msra.mxu0 0.0
        %3044 = vmatprep.subr.mxu0 0.0
        %3045 = vmatpush1.msra.mxu0 0.0
        %3046 = vmatprep.subr.mxu0 0.0
        %3047 = vmatpush1.msra.mxu0 0.0
        %3048 = vmatprep.subr.mxu0 0.0
        %3049 = vmatpush1.msra.mxu0 0.0
        %3050 = vmatprep.subr.mxu0 0.0
        %3051 = vmatpush1.msra.mxu0 0.0
        %3052 = vmatprep.subr.mxu0 0.0
        %3053 = vmatpush1.msra.mxu0 0.0
        %3054 = vmatprep.subr.mxu0 0.0
        %3055 = vmatpush1.msra.mxu0 0.0
        %3056 = vmatprep.subr.mxu0 0.0
        %3057 = vmatpush1.msra.mxu0 0.0
        %3058 = vmatprep.subr.mxu0 0.0
        %3059 = vmatpush1.msra.mxu0 0.0
        %3060 = vmatprep.subr.mxu0 0.0
        %3061 = vmatpush1.msra.mxu0 0.0
        %3062 = vmatprep.subr.mxu0 0.0
        %3063 = vmatpush1.msra.mxu0 0.0
        %3064 = vmatprep.subr.mxu0 0.0
        %3065 = vmatpush1.msra.mxu0 0.0
        %3066 = vmatprep.subr.mxu0 0.0
        %3067 = vmatpush1.msra.mxu0 0.0
        %3068 = vmatprep.subr.mxu0 0.0
        %3069 = vmatpush1.msra.mxu0 0.0
        %3070 = vmatprep.mubr.f32.mxu0 0.0
        %v3071 = vand.u32 %v2742, 4294901760
        %v3072 = vsub.f32 %v2742, %v3071
        %v3073 = vand.u32 %v3072, 4294901760
        %3074 = vmatmul.mubr.f32.gmra.mrb[0].mxu0 %v3073
        %v3075 = vpop.f32.mrb[0].mxu0
        %v3076 = vadd.f32 %v2994, %v3075
        %v3077 = vpop.f32.mrb[0].mxu0
        %3078 = vmatprep.mubr.f32.mxu0 0.0
        %v3079 = vand.u32 %v2745, 4294901760
        %v3080 = vsub.f32 %v2745, %v3079
        %v3081 = vand.u32 %v3080, 4294901760
        %3082 = vmatmul.mubr.f32.gmra.mrb[0].mxu0 %v3081
        %v3083 = vpop.f32.mrb[0].mxu0
        %v3084 = vadd.f32 %v3001, %v3083
        %v3085 = vpop.f32.mrb[0].mxu0
        %3086 = vdwg.mxu0
        %3087 = vmatprep.subr.mxu0 0.0
        %v3088 = vand.u32 %v302, 4294901760
        %v3089 = vsub.f32 %v302, %v3088
        %v3090 = vand.u32 %v3089, 4294901760
        %3091 = vmatpush1.msra.mxu0 %v3090
        %3092 = vmatprep.subr.mxu0 0.0
        %v3093 = vand.u32 %v303, 4294901760
        %v3094 = vsub.f32 %v303, %v3093
        %v3095 = vand.u32 %v3094, 4294901760
        %3096 = vmatpush1.msra.mxu0 %v3095
        %3097 = vmatprep.subr.mxu0 0.0
        %3098 = vmatpush1.msra.mxu0 0.0
        %3099 = vmatprep.subr.mxu0 0.0
        %3100 = vmatpush1.msra.mxu0 0.0
        %3101 = vmatprep.subr.mxu0 0.0
        %3102 = vmatpush1.msra.mxu0 0.0
        %3103 = vmatprep.subr.mxu0 0.0
        %3104 = vmatpush1.msra.mxu0 0.0
        %3105 = vmatprep.subr.mxu0 0.0
        %3106 = vmatpush1.msra.mxu0 0.0
        %3107 = vmatprep.subr.mxu0 0.0
        %3108 = vmatpush1.msra.mxu0 0.0
        %3109 = vmatprep.subr.mxu0 0.0
        %3110 = vmatpush1.msra.mxu0 0.0
        %3111 = vmatprep.subr.mxu0 0.0
        %3112 = vmatpush1.msra.mxu0 0.0
        %3113 = vmatprep.subr.mxu0 0.0
        %3114 = vmatpush1.msra.mxu0 0.0
        %3115 = vmatprep.subr.mxu0 0.0
        %3116 = vmatpush1.msra.mxu0 0.0
        %3117 = vmatprep.subr.mxu0 0.0
        %3118 = vmatpush1.msra.mxu0 0.0
        %3119 = vmatprep.subr.mxu0 0.0
        %3120 = vmatpush1.msra.mxu0 0.0
        %3121 = vmatprep.subr.mxu0 0.0
        %3122 = vmatpush1.msra.mxu0 0.0
        %3123 = vmatprep.subr.mxu0 0.0
        %3124 = vmatpush1.msra.mxu0 0.0
        %3125 = vmatprep.subr.mxu0 0.0
        %3126 = vmatpush1.msra.mxu0 0.0
        %3127 = vmatprep.subr.mxu0 0.0
        %3128 = vmatpush1.msra.mxu0 0.0
        %3129 = vmatprep.subr.mxu0 0.0
        %3130 = vmatpush1.msra.mxu0 0.0
        %3131 = vmatprep.subr.mxu0 0.0
        %3132 = vmatpush1.msra.mxu0 0.0
        %3133 = vmatprep.subr.mxu0 0.0
        %3134 = vmatpush1.msra.mxu0 0.0
        %3135 = vmatprep.subr.mxu0 0.0
        %3136 = vmatpush1.msra.mxu0 0.0
        %3137 = vmatprep.subr.mxu0 0.0
        %3138 = vmatpush1.msra.mxu0 0.0
        %3139 = vmatprep.subr.mxu0 0.0
        %3140 = vmatpush1.msra.mxu0 0.0
        %3141 = vmatprep.subr.mxu0 0.0
        %3142 = vmatpush1.msra.mxu0 0.0
        %3143 = vmatprep.subr.mxu0 0.0
        %3144 = vmatpush1.msra.mxu0 0.0
        %3145 = vmatprep.subr.mxu0 0.0
        %3146 = vmatpush1.msra.mxu0 0.0
        %3147 = vmatprep.subr.mxu0 0.0
        %3148 = vmatpush1.msra.mxu0 0.0
        %3149 = vmatprep.subr.mxu0 0.0
        %3150 = vmatpush1.msra.mxu0 0.0
        %3151 = vmatprep.subr.mxu0 0.0
        %3152 = vmatpush1.msra.mxu0 0.0
        %3153 = vmatprep.subr.mxu0 0.0
        %3154 = vmatpush1.msra.mxu0 0.0
        %3155 = vmatprep.subr.mxu0 0.0
        %3156 = vmatpush1.msra.mxu0 0.0
        %3157 = vmatprep.mubr.f32.mxu0 0.0
        %v3158 = vand.u32 %v2742, 4294901760
        %3159 = vmatmul.mubr.f32.gmra.mrb[0].mxu0 %v3158
        %v3160 = vpop.f32.mrb[0].mxu0
        %v3161 = vadd.f32 %v3076, %v3160
        %v3162 = vpop.f32.mrb[0].mxu0
        %3163 = vmatprep.mubr.f32.mxu0 0.0
        %v3164 = vand.u32 %v2745, 4294901760
        %3165 = vmatmul.mubr.f32.gmra.mrb[0].mxu0 %v3164
        %v3166 = vpop.f32.mrb[0].mxu0
        %v3167 = vadd.f32 %v3084, %v3166
        %v3168 = vpop.f32.mrb[0].mxu0
        %3169 = vdwg.mxu0
        %3170 = vmatprep.subr.mxu0 0.0
        %v3171 = vand.u32 %v302, 4294901760
        %3172 = vmatpush1.msra.mxu0 %v3171
        %3173 = vmatprep.subr.mxu0 0.0
        %v3174 = vand.u32 %v303, 4294901760
        %3175 = vmatpush1.msra.mxu0 %v3174
        %3176 = vmatprep.subr.mxu0 0.0
        %3177 = vmatpush1.msra.mxu0 0.0
        %3178 = vmatprep.subr.mxu0 0.0
        %3179 = vmatpush1.msra.mxu0 0.0
        %3180 = vmatprep.subr.mxu0 0.0
        %3181 = vmatpush1.msra.mxu0 0.0
        %3182 = vmatprep.subr.mxu0 0.0
        %3183 = vmatpush1.msra.mxu0 0.0
        %3184 = vmatprep.subr.mxu0 0.0
        %3185 = vmatpush1.msra.mxu0 0.0
        %3186 = vmatprep.subr.mxu0 0.0
        %3187 = vmatpush1.msra.mxu0 0.0
        %3188 = vmatprep.subr.mxu0 0.0
        %3189 = vmatpush1.msra.mxu0 0.0
        %3190 = vmatprep.subr.mxu0 0.0
        %3191 = vmatpush1.msra.mxu0 0.0
        %3192 = vmatprep.subr.mxu0 0.0
        %3193 = vmatpush1.msra.mxu0 0.0
        %3194 = vmatprep.subr.mxu0 0.0
        %3195 = vmatpush1.msra.mxu0 0.0
        %3196 = vmatprep.subr.mxu0 0.0
        %3197 = vmatpush1.msra.mxu0 0.0
        %3198 = vmatprep.subr.mxu0 0.0
        %3199 = vmatpush1.msra.mxu0 0.0
        %3200 = vmatprep.subr.mxu0 0.0
        %3201 = vmatpush1.msra.mxu0 0.0
        %3202 = vmatprep.subr.mxu0 0.0
        %3203 = vmatpush1.msra.mxu0 0.0
        %3204 = vmatprep.subr.mxu0 0.0
        %3205 = vmatpush1.msra.mxu0 0.0
        %3206 = vmatprep.subr.mxu0 0.0
        %3207 = vmatpush1.msra.mxu0 0.0
        %3208 = vmatprep.subr.mxu0 0.0
        %3209 = vmatpush1.msra.mxu0 0.0
        %3210 = vmatprep.subr.mxu0 0.0
        %3211 = vmatpush1.msra.mxu0 0.0
        %3212 = vmatprep.subr.mxu0 0.0
        %3213 = vmatpush1.msra.mxu0 0.0
        %3214 = vmatprep.subr.mxu0 0.0
        %3215 = vmatpush1.msra.mxu0 0.0
        %3216 = vmatprep.subr.mxu0 0.0
        %3217 = vmatpush1.msra.mxu0 0.0
        %3218 = vmatprep.subr.mxu0 0.0
        %3219 = vmatpush1.msra.mxu0 0.0
        %3220 = vmatprep.subr.mxu0 0.0
        %3221 = vmatpush1.msra.mxu0 0.0
        %3222 = vmatprep.subr.mxu0 0.0
        %3223 = vmatpush1.msra.mxu0 0.0
        %3224 = vmatprep.subr.mxu0 0.0
        %3225 = vmatpush1.msra.mxu0 0.0
        %3226 = vmatprep.subr.mxu0 0.0
        %3227 = vmatpush1.msra.mxu0 0.0
        %3228 = vmatprep.subr.mxu0 0.0
        %3229 = vmatpush1.msra.mxu0 0.0
        %3230 = vmatprep.subr.mxu0 0.0
        %3231 = vmatpush1.msra.mxu0 0.0
        %3232 = vmatprep.subr.mxu0 0.0
        %3233 = vmatpush1.msra.mxu0 0.0
        %3234 = vmatprep.subr.mxu0 0.0
        %3235 = vmatpush1.msra.mxu0 0.0
        %3236 = vmatprep.mubr.f32.mxu0 0.0
        %v3237 = vand.u32 %v2742, 4294901760
        %3238 = vmatmul.mubr.f32.gmra.mrb[0].mxu0 %v3237
        %v3239 = vpop.f32.mrb[0].mxu0
        %v3240 = vadd.f32 %v3161, %v3239
        %v3241 = vpop.f32.mrb[0].mxu0
        %3242 = vmatprep.mubr.f32.mxu0 0.0
        %v3243 = vand.u32 %v2745, 4294901760
        %3244 = vmatmul.mubr.f32.gmra.mrb[0].mxu0 %v3243
        %v3245 = vpop.f32.mrb[0].mxu0
        %v3246 = vadd.f32 %v3167, %v3245
        %v3247 = vpop.f32.mrb[0].mxu0
        %3248 = vdwg.mxu0
        %s3249 = scalar_lea.vmem [#allocation3], 256
        %v3250 = vld [vmem:[%s3249] sm:$0xff]
        %v3251 = vld [vmem:[%s3249 + $0x8] sm:$0xff]
        %v3252 = vld [vmem:[%s3249 + $0x10] sm:$0xff]
        %v3253 = vld [vmem:[%s3249 + $0x18] sm:$0xff]
        %v3254 = vld [vmem:[%s3249 + $0x20] sm:$0xff]
        %v3255 = vld [vmem:[%s3249 + $0x28] sm:$0xff]
        %v3256 = vld [vmem:[%s3249 + $0x30] sm:$0xff]
        %v3257 = vld [vmem:[%s3249 + $0x38] sm:$0xff]
        %v3258 = vld [vmem:[%s3249 + $0x40] sm:$0xff]
        %v3259 = vld [vmem:[%s3249 + $0x48] sm:$0xff]
        %v3260 = vld [vmem:[%s3249 + $0x50] sm:$0xff]
        %v3261 = vld [vmem:[%s3249 + $0x58] sm:$0xff]
        %v3262 = vld [vmem:[%s3249 + $0x60] sm:$0xff]
        %v3263 = vld [vmem:[%s3249 + $0x68] sm:$0xff]
        %v3264 = vld [vmem:[%s3249 + $0x70] sm:$0xff]
        %v3265 = vld [vmem:[%s3249 + $0x78] sm:$0xff]
        %3266 = vmatprep.subr.mxu0 0.0
        %v3267 = vand.u32 %v3250, 4294901760
        %3268 = vmatpush1.msra.mxu0 %v3267
        %3269 = vmatprep.subr.mxu0 0.0
        %v3270 = vand.u32 %v3251, 4294901760
        %3271 = vmatpush1.msra.mxu0 %v3270
        %3272 = vmatprep.subr.mxu0 0.0
        %v3273 = vand.u32 %v3252, 4294901760
        %3274 = vmatpush1.msra.mxu0 %v3273
        %3275 = vmatprep.subr.mxu0 0.0
        %v3276 = vand.u32 %v3253, 4294901760
        %3277 = vmatpush1.msra.mxu0 %v3276
        %3278 = vmatprep.subr.mxu0 0.0
        %v3279 = vand.u32 %v3254, 4294901760
        %3280 = vmatpush1.msra.mxu0 %v3279
        %3281 = vmatprep.subr.mxu0 0.0
        %v3282 = vand.u32 %v3255, 4294901760
        %3283 = vmatpush1.msra.mxu0 %v3282
        %3284 = vmatprep.subr.mxu0 0.0
        %v3285 = vand.u32 %v3256, 4294901760
        %3286 = vmatpush1.msra.mxu0 %v3285
        %3287 = vmatprep.subr.mxu0 0.0
        %v3288 = vand.u32 %v3257, 4294901760
        %3289 = vmatpush1.msra.mxu0 %v3288
        %3290 = vmatprep.subr.mxu0 0.0
        %v3291 = vand.u32 %v3258, 4294901760
        %3292 = vmatpush1.msra.mxu0 %v3291
        %3293 = vmatprep.subr.mxu0 0.0
        %v3294 = vand.u32 %v3259, 4294901760
        %3295 = vmatpush1.msra.mxu0 %v3294
        %3296 = vmatprep.subr.mxu0 0.0
        %v3297 = vand.u32 %v3260, 4294901760
        %3298 = vmatpush1.msra.mxu0 %v3297
        %3299 = vmatprep.subr.mxu0 0.0
        %v3300 = vand.u32 %v3261, 4294901760
        %3301 = vmatpush1.msra.mxu0 %v3300
        %3302 = vmatprep.subr.mxu0 0.0
        %v3303 = vand.u32 %v3262, 4294901760
        %3304 = vmatpush1.msra.mxu0 %v3303
        %3305 = vmatprep.subr.mxu0 0.0
        %v3306 = vand.u32 %v3263, 4294901760
        %3307 = vmatpush1.msra.mxu0 %v3306
        %3308 = vmatprep.subr.mxu0 0.0
        %v3309 = vand.u32 %v3264, 4294901760
        %3310 = vmatpush1.msra.mxu0 %v3309
        %3311 = vmatprep.subr.mxu0 0.0
        %v3312 = vand.u32 %v3265, 4294901760
        %3313 = vmatpush1.msra.mxu0 %v3312
        %3314 = vmatprep.subr.mxu0 0.0
        %3315 = vmatpush1.msra.mxu0 0.0
        %3316 = vmatprep.subr.mxu0 0.0
        %3317 = vmatpush1.msra.mxu0 0.0
        %3318 = vmatprep.subr.mxu0 0.0
        %3319 = vmatpush1.msra.mxu0 0.0
        %3320 = vmatprep.subr.mxu0 0.0
        %3321 = vmatpush1.msra.mxu0 0.0
        %3322 = vmatprep.subr.mxu0 0.0
        %3323 = vmatpush1.msra.mxu0 0.0
        %3324 = vmatprep.subr.mxu0 0.0
        %3325 = vmatpush1.msra.mxu0 0.0
        %3326 = vmatprep.subr.mxu0 0.0
        %3327 = vmatpush1.msra.mxu0 0.0
        %3328 = vmatprep.subr.mxu0 0.0
        %3329 = vmatpush1.msra.mxu0 0.0
        %3330 = vmatprep.subr.mxu0 0.0
        %3331 = vmatpush1.msra.mxu0 0.0
        %3332 = vmatprep.subr.mxu0 0.0
        %3333 = vmatpush1.msra.mxu0 0.0
        %3334 = vmatprep.subr.mxu0 0.0
        %3335 = vmatpush1.msra.mxu0 0.0
        %3336 = vmatprep.subr.mxu0 0.0
        %3337 = vmatpush1.msra.mxu0 0.0
        %3338 = vmatprep.subr.mxu0 0.0
        %3339 = vmatpush1.msra.mxu0 0.0
        %3340 = vmatprep.subr.mxu0 0.0
        %3341 = vmatpush1.msra.mxu0 0.0
        %3342 = vmatprep.subr.mxu0 0.0
        %3343 = vmatpush1.msra.mxu0 0.0
        %3344 = vmatprep.subr.mxu0 0.0
        %3345 = vmatpush1.msra.mxu0 0.0
        %3346 = vmatprep.mubr.f32.mxu0 0.0
        %v3347 = vand.u32 %v3240, 4294901760
        %v3348 = vsub.f32 %v3240, %v3347
        %v3349 = vand.u32 %v3348, 4294901760
        %v3350 = vsub.f32 %v3348, %v3349
        %v3351 = vand.u32 %v3350, 4294901760
        %3352 = vmatmul.mubr.f32.gmra.mrb[0].mxu0 %v3351
        %v3353 = vpop.f32.mrb[0].mxu0
        %v3354 = vadd.f32 0.0, %v3353
        %v3355 = vpop.f32.mrb[0].mxu0
        %3356 = vmatprep.mubr.f32.mxu0 0.0
        %v3357 = vand.u32 %v3246, 4294901760
        %v3358 = vsub.f32 %v3246, %v3357
        %v3359 = vand.u32 %v3358, 4294901760
        %v3360 = vsub.f32 %v3358, %v3359
        %v3361 = vand.u32 %v3360, 4294901760
        %3362 = vmatmul.mubr.f32.gmra.mrb[0].mxu0 %v3361
        %v3363 = vpop.f32.mrb[0].mxu0
        %v3364 = vadd.f32 0.0, %v3363
        %v3365 = vpop.f32.mrb[0].mxu0
        %3366 = vdwg.mxu0
        %3367 = vmatprep.subr.mxu0 0.0
        %v3368 = vand.u32 %v3250, 4294901760
        %v3369 = vsub.f32 %v3250, %v3368
        %v3370 = vand.u32 %v3369, 4294901760
        %v3371 = vsub.f32 %v3369, %v3370
        %v3372 = vand.u32 %v3371, 4294901760
        %3373 = vmatpush1.msra.mxu0 %v3372
        %3374 = vmatprep.subr.mxu0 0.0
        %v3375 = vand.u32 %v3251, 4294901760
        %v3376 = vsub.f32 %v3251, %v3375
        %v3377 = vand.u32 %v3376, 4294901760
        %v3378 = vsub.f32 %v3376, %v3377
        %v3379 = vand.u32 %v3378, 4294901760
        %3380 = vmatpush1.msra.mxu0 %v3379
        %3381 = vmatprep.subr.mxu0 0.0
        %v3382 = vand.u32 %v3252, 4294901760
        %v3383 = vsub.f32 %v3252, %v3382
        %v3384 = vand.u32 %v3383, 4294901760
        %v3385 = vsub.f32 %v3383, %v3384
        %v3386 = vand.u32 %v3385, 4294901760
        %3387 = vmatpush1.msra.mxu0 %v3386
        %3388 = vmatprep.subr.mxu0 0.0
        %v3389 = vand.u32 %v3253, 4294901760
        %v3390 = vsub.f32 %v3253, %v3389
        %v3391 = vand.u32 %v3390, 4294901760
        %v3392 = vsub.f32 %v3390, %v3391
        %v3393 = vand.u32 %v3392, 4294901760
        %3394 = vmatpush1.msra.mxu0 %v3393
        %3395 = vmatprep.subr.mxu0 0.0
        %v3396 = vand.u32 %v3254, 4294901760
        %v3397 = vsub.f32 %v3254, %v3396
        %v3398 = vand.u32 %v3397, 4294901760
        %v3399 = vsub.f32 %v3397, %v3398
        %v3400 = vand.u32 %v3399, 4294901760
        %3401 = vmatpush1.msra.mxu0 %v3400
        %3402 = vmatprep.subr.mxu0 0.0
        %v3403 = vand.u32 %v3255, 4294901760
        %v3404 = vsub.f32 %v3255, %v3403
        %v3405 = vand.u32 %v3404, 4294901760
        %v3406 = vsub.f32 %v3404, %v3405
        %v3407 = vand.u32 %v3406, 4294901760
        %3408 = vmatpush1.msra.mxu0 %v3407
        %3409 = vmatprep.subr.mxu0 0.0
        %v3410 = vand.u32 %v3256, 4294901760
        %v3411 = vsub.f32 %v3256, %v3410
        %v3412 = vand.u32 %v3411, 4294901760
        %v3413 = vsub.f32 %v3411, %v3412
        %v3414 = vand.u32 %v3413, 4294901760
        %3415 = vmatpush1.msra.mxu0 %v3414
        %3416 = vmatprep.subr.mxu0 0.0
        %v3417 = vand.u32 %v3257, 4294901760
        %v3418 = vsub.f32 %v3257, %v3417
        %v3419 = vand.u32 %v3418, 4294901760
        %v3420 = vsub.f32 %v3418, %v3419
        %v3421 = vand.u32 %v3420, 4294901760
        %3422 = vmatpush1.msra.mxu0 %v3421
        %3423 = vmatprep.subr.mxu0 0.0
        %v3424 = vand.u32 %v3258, 4294901760
        %v3425 = vsub.f32 %v3258, %v3424
        %v3426 = vand.u32 %v3425, 4294901760
        %v3427 = vsub.f32 %v3425, %v3426
        %v3428 = vand.u32 %v3427, 4294901760
        %3429 = vmatpush1.msra.mxu0 %v3428
        %3430 = vmatprep.subr.mxu0 0.0
        %v3431 = vand.u32 %v3259, 4294901760
        %v3432 = vsub.f32 %v3259, %v3431
        %v3433 = vand.u32 %v3432, 4294901760
        %v3434 = vsub.f32 %v3432, %v3433
        %v3435 = vand.u32 %v3434, 4294901760
        %3436 = vmatpush1.msra.mxu0 %v3435
        %3437 = vmatprep.subr.mxu0 0.0
        %v3438 = vand.u32 %v3260, 4294901760
        %v3439 = vsub.f32 %v3260, %v3438
        %v3440 = vand.u32 %v3439, 4294901760
        %v3441 = vsub.f32 %v3439, %v3440
        %v3442 = vand.u32 %v3441, 4294901760
        %3443 = vmatpush1.msra.mxu0 %v3442
        %3444 = vmatprep.subr.mxu0 0.0
        %v3445 = vand.u32 %v3261, 4294901760
        %v3446 = vsub.f32 %v3261, %v3445
        %v3447 = vand.u32 %v3446, 4294901760
        %v3448 = vsub.f32 %v3446, %v3447
        %v3449 = vand.u32 %v3448, 4294901760
        %3450 = vmatpush1.msra.mxu0 %v3449
        %3451 = vmatprep.subr.mxu0 0.0
        %v3452 = vand.u32 %v3262, 4294901760
        %v3453 = vsub.f32 %v3262, %v3452
        %v3454 = vand.u32 %v3453, 4294901760
        %v3455 = vsub.f32 %v3453, %v3454
        %v3456 = vand.u32 %v3455, 4294901760
        %3457 = vmatpush1.msra.mxu0 %v3456
        %3458 = vmatprep.subr.mxu0 0.0
        %v3459 = vand.u32 %v3263, 4294901760
        %v3460 = vsub.f32 %v3263, %v3459
        %v3461 = vand.u32 %v3460, 4294901760
        %v3462 = vsub.f32 %v3460, %v3461
        %v3463 = vand.u32 %v3462, 4294901760
        %3464 = vmatpush1.msra.mxu0 %v3463
        %3465 = vmatprep.subr.mxu0 0.0
        %v3466 = vand.u32 %v3264, 4294901760
        %v3467 = vsub.f32 %v3264, %v3466
        %v3468 = vand.u32 %v3467, 4294901760
        %v3469 = vsub.f32 %v3467, %v3468
        %v3470 = vand.u32 %v3469, 4294901760
        %3471 = vmatpush1.msra.mxu0 %v3470
        %3472 = vmatprep.subr.mxu0 0.0
        %v3473 = vand.u32 %v3265, 4294901760
        %v3474 = vsub.f32 %v3265, %v3473
        %v3475 = vand.u32 %v3474, 4294901760
        %v3476 = vsub.f32 %v3474, %v3475
        %v3477 = vand.u32 %v3476, 4294901760
        %3478 = vmatpush1.msra.mxu0 %v3477
        %3479 = vmatprep.subr.mxu0 0.0
        %3480 = vmatpush1.msra.mxu0 0.0
        %3481 = vmatprep.subr.mxu0 0.0
        %3482 = vmatpush1.msra.mxu0 0.0
        %3483 = vmatprep.subr.mxu0 0.0
        %3484 = vmatpush1.msra.mxu0 0.0
        %3485 = vmatprep.subr.mxu0 0.0
        %3486 = vmatpush1.msra.mxu0 0.0
        %3487 = vmatprep.subr.mxu0 0.0
        %3488 = vmatpush1.msra.mxu0 0.0
        %3489 = vmatprep.subr.mxu0 0.0
        %3490 = vmatpush1.msra.mxu0 0.0
        %3491 = vmatprep.subr.mxu0 0.0
        %3492 = vmatpush1.msra.mxu0 0.0
        %3493 = vmatprep.subr.mxu0 0.0
        %3494 = vmatpush1.msra.mxu0 0.0
        %3495 = vmatprep.subr.mxu0 0.0
        %3496 = vmatpush1.msra.mxu0 0.0
        %3497 = vmatprep.subr.mxu0 0.0
        %3498 = vmatpush1.msra.mxu0 0.0
        %3499 = vmatprep.subr.mxu0 0.0
        %3500 = vmatpush1.msra.mxu0 0.0
        %3501 = vmatprep.subr.mxu0 0.0
        %3502 = vmatpush1.msra.mxu0 0.0
        %3503 = vmatprep.subr.mxu0 0.0
        %3504 = vmatpush1.msra.mxu0 0.0
        %3505 = vmatprep.subr.mxu0 0.0
        %3506 = vmatpush1.msra.mxu0 0.0
        %3507 = vmatprep.subr.mxu0 0.0
        %3508 = vmatpush1.msra.mxu0 0.0
        %3509 = vmatprep.subr.mxu0 0.0
        %3510 = vmatpush1.msra.mxu0 0.0
        %3511 = vmatprep.mubr.f32.mxu0 0.0
        %v3512 = vand.u32 %v3240, 4294901760
        %3513 = vmatmul.mubr.f32.gmra.mrb[0].mxu0 %v3512
        %v3514 = vpop.f32.mrb[0].mxu0
        %v3515 = vadd.f32 %v3354, %v3514
        %v3516 = vpop.f32.mrb[0].mxu0
        %3517 = vmatprep.mubr.f32.mxu0 0.0
        %v3518 = vand.u32 %v3246, 4294901760
        %3519 = vmatmul.mubr.f32.gmra.mrb[0].mxu0 %v3518
        %v3520 = vpop.f32.mrb[0].mxu0
        %v3521 = vadd.f32 %v3364, %v3520
        %v3522 = vpop.f32.mrb[0].mxu0
        %3523 = vdwg.mxu0
        %3524 = vmatprep.subr.mxu0 0.0
        %v3525 = vand.u32 %v3250, 4294901760
        %v3526 = vsub.f32 %v3250, %v3525
        %3527 = vmatpush1.msra.mxu0 %v3526
        %3528 = vmatprep.subr.mxu0 0.0
        %v3529 = vand.u32 %v3251, 4294901760
        %v3530 = vsub.f32 %v3251, %v3529
        %3531 = vmatpush1.msra.mxu0 %v3530
        %3532 = vmatprep.subr.mxu0 0.0
        %v3533 = vand.u32 %v3252, 4294901760
        %v3534 = vsub.f32 %v3252, %v3533
        %3535 = vmatpush1.msra.mxu0 %v3534
        %3536 = vmatprep.subr.mxu0 0.0
        %v3537 = vand.u32 %v3253, 4294901760
        %v3538 = vsub.f32 %v3253, %v3537
        %3539 = vmatpush1.msra.mxu0 %v3538
        %3540 = vmatprep.subr.mxu0 0.0
        %v3541 = vand.u32 %v3254, 4294901760
        %v3542 = vsub.f32 %v3254, %v3541
        %3543 = vmatpush1.msra.mxu0 %v3542
        %3544 = vmatprep.subr.mxu0 0.0
        %v3545 = vand.u32 %v3255, 4294901760
        %v3546 = vsub.f32 %v3255, %v3545
        %3547 = vmatpush1.msra.mxu0 %v3546
        %3548 = vmatprep.subr.mxu0 0.0
        %v3549 = vand.u32 %v3256, 4294901760
        %v3550 = vsub.f32 %v3256, %v3549
        %3551 = vmatpush1.msra.mxu0 %v3550
        %3552 = vmatprep.subr.mxu0 0.0
        %v3553 = vand.u32 %v3257, 4294901760
        %v3554 = vsub.f32 %v3257, %v3553
        %3555 = vmatpush1.msra.mxu0 %v3554
        %3556 = vmatprep.subr.mxu0 0.0
        %v3557 = vand.u32 %v3258, 4294901760
        %v3558 = vsub.f32 %v3258, %v3557
        %3559 = vmatpush1.msra.mxu0 %v3558
        %3560 = vmatprep.subr.mxu0 0.0
        %v3561 = vand.u32 %v3259, 4294901760
        %v3562 = vsub.f32 %v3259, %v3561
        %3563 = vmatpush1.msra.mxu0 %v3562
        %3564 = vmatprep.subr.mxu0 0.0
        %v3565 = vand.u32 %v3260, 4294901760
        %v3566 = vsub.f32 %v3260, %v3565
        %3567 = vmatpush1.msra.mxu0 %v3566
        %3568 = vmatprep.subr.mxu0 0.0
        %v3569 = vand.u32 %v3261, 4294901760
        %v3570 = vsub.f32 %v3261, %v3569
        %3571 = vmatpush1.msra.mxu0 %v3570
        %3572 = vmatprep.subr.mxu0 0.0
        %v3573 = vand.u32 %v3262, 4294901760
        %v3574 = vsub.f32 %v3262, %v3573
        %3575 = vmatpush1.msra.mxu0 %v3574
        %3576 = vmatprep.subr.mxu0 0.0
        %v3577 = vand.u32 %v3263, 4294901760
        %v3578 = vsub.f32 %v3263, %v3577
        %3579 = vmatpush1.msra.mxu0 %v3578
        %3580 = vmatprep.subr.mxu0 0.0
        %v3581 = vand.u32 %v3264, 4294901760
        %v3582 = vsub.f32 %v3264, %v3581
        %3583 = vmatpush1.msra.mxu0 %v3582
        %3584 = vmatprep.subr.mxu0 0.0
        %v3585 = vand.u32 %v3265, 4294901760
        %v3586 = vsub.f32 %v3265, %v3585
        %3587 = vmatpush1.msra.mxu0 %v3586
        %3588 = vmatprep.subr.mxu0 0.0
        %3589 = vmatpush1.msra.mxu0 0.0
        %3590 = vmatprep.subr.mxu0 0.0
        %3591 = vmatpush1.msra.mxu0 0.0
        %3592 = vmatprep.subr.mxu0 0.0
        %3593 = vmatpush1.msra.mxu0 0.0
        %3594 = vmatprep.subr.mxu0 0.0
        %3595 = vmatpush1.msra.mxu0 0.0
        %3596 = vmatprep.subr.mxu0 0.0
        %3597 = vmatpush1.msra.mxu0 0.0
        %3598 = vmatprep.subr.mxu0 0.0
        %3599 = vmatpush1.msra.mxu0 0.0
        %3600 = vmatprep.subr.mxu0 0.0
        %3601 = vmatpush1.msra.mxu0 0.0
        %3602 = vmatprep.subr.mxu0 0.0
        %3603 = vmatpush1.msra.mxu0 0.0
        %3604 = vmatprep.subr.mxu0 0.0
        %3605 = vmatpush1.msra.mxu0 0.0
        %3606 = vmatprep.subr.mxu0 0.0
        %3607 = vmatpush1.msra.mxu0 0.0
        %3608 = vmatprep.subr.mxu0 0.0
        %3609 = vmatpush1.msra.mxu0 0.0
        %3610 = vmatprep.subr.mxu0 0.0
        %3611 = vmatpush1.msra.mxu0 0.0
        %3612 = vmatprep.subr.mxu0 0.0
        %3613 = vmatpush1.msra.mxu0 0.0
        %3614 = vmatprep.subr.mxu0 0.0
        %3615 = vmatpush1.msra.mxu0 0.0
        %3616 = vmatprep.subr.mxu0 0.0
        %3617 = vmatpush1.msra.mxu0 0.0
        %3618 = vmatprep.subr.mxu0 0.0
        %3619 = vmatpush1.msra.mxu0 0.0
        %3620 = vmatprep.mubr.f32.mxu0 0.0
        %v3621 = vand.u32 %v3240, 4294901760
        %v3622 = vsub.f32 %v3240, %v3621
        %3623 = vmatmul.mubr.f32.gmra.mrb[0].mxu0 %v3622
        %v3624 = vpop.f32.mrb[0].mxu0
        %v3625 = vadd.f32 %v3515, %v3624
        %v3626 = vpop.f32.mrb[0].mxu0
        %3627 = vmatprep.mubr.f32.mxu0 0.0
        %v3628 = vand.u32 %v3246, 4294901760
        %v3629 = vsub.f32 %v3246, %v3628
        %3630 = vmatmul.mubr.f32.gmra.mrb[0].mxu0 %v3629
        %v3631 = vpop.f32.mrb[0].mxu0
        %v3632 = vadd.f32 %v3521, %v3631
        %v3633 = vpop.f32.mrb[0].mxu0
        %3634 = vdwg.mxu0
        %3635 = vmatprep.subr.mxu0 0.0
        %v3636 = vand.u32 %v3250, 4294901760
        %3637 = vmatpush1.msra.mxu0 %v3636
        %3638 = vmatprep.subr.mxu0 0.0
        %v3639 = vand.u32 %v3251, 4294901760
        %3640 = vmatpush1.msra.mxu0 %v3639
        %3641 = vmatprep.subr.mxu0 0.0
        %v3642 = vand.u32 %v3252, 4294901760
        %3643 = vmatpush1.msra.mxu0 %v3642
        %3644 = vmatprep.subr.mxu0 0.0
        %v3645 = vand.u32 %v3253, 4294901760
        %3646 = vmatpush1.msra.mxu0 %v3645
        %3647 = vmatprep.subr.mxu0 0.0
        %v3648 = vand.u32 %v3254, 4294901760
        %3649 = vmatpush1.msra.mxu0 %v3648
        %3650 = vmatprep.subr.mxu0 0.0
        %v3651 = vand.u32 %v3255, 4294901760
        %3652 = vmatpush1.msra.mxu0 %v3651
        %3653 = vmatprep.subr.mxu0 0.0
        %v3654 = vand.u32 %v3256, 4294901760
        %3655 = vmatpush1.msra.mxu0 %v3654
        %3656 = vmatprep.subr.mxu0 0.0
        %v3657 = vand.u32 %v3257, 4294901760
        %3658 = vmatpush1.msra.mxu0 %v3657
        %3659 = vmatprep.subr.mxu0 0.0
        %v3660 = vand.u32 %v3258, 4294901760
        %3661 = vmatpush1.msra.mxu0 %v3660
        %3662 = vmatprep.subr.mxu0 0.0
        %v3663 = vand.u32 %v3259, 4294901760
        %3664 = vmatpush1.msra.mxu0 %v3663
        %3665 = vmatprep.subr.mxu0 0.0
        %v3666 = vand.u32 %v3260, 4294901760
        %3667 = vmatpush1.msra.mxu0 %v3666
        %3668 = vmatprep.subr.mxu0 0.0
        %v3669 = vand.u32 %v3261, 4294901760
        %3670 = vmatpush1.msra.mxu0 %v3669
        %3671 = vmatprep.subr.mxu0 0.0
        %v3672 = vand.u32 %v3262, 4294901760
        %3673 = vmatpush1.msra.mxu0 %v3672
        %3674 = vmatprep.subr.mxu0 0.0
        %v3675 = vand.u32 %v3263, 4294901760
        %3676 = vmatpush1.msra.mxu0 %v3675
        %3677 = vmatprep.subr.mxu0 0.0
        %v3678 = vand.u32 %v3264, 4294901760
        %3679 = vmatpush1.msra.mxu0 %v3678
        %3680 = vmatprep.subr.mxu0 0.0
        %v3681 = vand.u32 %v3265, 4294901760
        %3682 = vmatpush1.msra.mxu0 %v3681
        %3683 = vmatprep.subr.mxu0 0.0
        %3684 = vmatpush1.msra.mxu0 0.0
        %3685 = vmatprep.subr.mxu0 0.0
        %3686 = vmatpush1.msra.mxu0 0.0
        %3687 = vmatprep.subr.mxu0 0.0
        %3688 = vmatpush1.msra.mxu0 0.0
        %3689 = vmatprep.subr.mxu0 0.0
        %3690 = vmatpush1.msra.mxu0 0.0
        %3691 = vmatprep.subr.mxu0 0.0
        %3692 = vmatpush1.msra.mxu0 0.0
        %3693 = vmatprep.subr.mxu0 0.0
        %3694 = vmatpush1.msra.mxu0 0.0
        %3695 = vmatprep.subr.mxu0 0.0
        %3696 = vmatpush1.msra.mxu0 0.0
        %3697 = vmatprep.subr.mxu0 0.0
        %3698 = vmatpush1.msra.mxu0 0.0
        %3699 = vmatprep.subr.mxu0 0.0
        %3700 = vmatpush1.msra.mxu0 0.0
        %3701 = vmatprep.subr.mxu0 0.0
        %3702 = vmatpush1.msra.mxu0 0.0
        %3703 = vmatprep.subr.mxu0 0.0
        %3704 = vmatpush1.msra.mxu0 0.0
        %3705 = vmatprep.subr.mxu0 0.0
        %3706 = vmatpush1.msra.mxu0 0.0
        %3707 = vmatprep.subr.mxu0 0.0
        %3708 = vmatpush1.msra.mxu0 0.0
        %3709 = vmatprep.subr.mxu0 0.0
        %3710 = vmatpush1.msra.mxu0 0.0
        %3711 = vmatprep.subr.mxu0 0.0
        %3712 = vmatpush1.msra.mxu0 0.0
        %3713 = vmatprep.subr.mxu0 0.0
        %3714 = vmatpush1.msra.mxu0 0.0
        %3715 = vmatprep.mubr.f32.mxu0 0.0
        %v3716 = vand.u32 %v3240, 4294901760
        %v3717 = vsub.f32 %v3240, %v3716
        %v3718 = vand.u32 %v3717, 4294901760
        %3719 = vmatmul.mubr.f32.gmra.mrb[0].mxu0 %v3718
        %v3720 = vpop.f32.mrb[0].mxu0
        %v3721 = vadd.f32 %v3625, %v3720
        %v3722 = vpop.f32.mrb[0].mxu0
        %3723 = vmatprep.mubr.f32.mxu0 0.0
        %v3724 = vand.u32 %v3246, 4294901760
        %v3725 = vsub.f32 %v3246, %v3724
        %v3726 = vand.u32 %v3725, 4294901760
        %3727 = vmatmul.mubr.f32.gmra.mrb[0].mxu0 %v3726
        %v3728 = vpop.f32.mrb[0].mxu0
        %v3729 = vadd.f32 %v3632, %v3728
        %v3730 = vpop.f32.mrb[0].mxu0
        %3731 = vdwg.mxu0
        %3732 = vmatprep.subr.mxu0 0.0
        %v3733 = vand.u32 %v3250, 4294901760
        %v3734 = vsub.f32 %v3250, %v3733
        %v3735 = vand.u32 %v3734, 4294901760
        %3736 = vmatpush1.msra.mxu0 %v3735
        %3737 = vmatprep.subr.mxu0 0.0
        %v3738 = vand.u32 %v3251, 4294901760
        %v3739 = vsub.f32 %v3251, %v3738
        %v3740 = vand.u32 %v3739, 4294901760
        %3741 = vmatpush1.msra.mxu0 %v3740
        %3742 = vmatprep.subr.mxu0 0.0
        %v3743 = vand.u32 %v3252, 4294901760
        %v3744 = vsub.f32 %v3252, %v3743
        %v3745 = vand.u32 %v3744, 4294901760
        %3746 = vmatpush1.msra.mxu0 %v3745
        %3747 = vmatprep.subr.mxu0 0.0
        %v3748 = vand.u32 %v3253, 4294901760
        %v3749 = vsub.f32 %v3253, %v3748
        %v3750 = vand.u32 %v3749, 4294901760
        %3751 = vmatpush1.msra.mxu0 %v3750
        %3752 = vmatprep.subr.mxu0 0.0
        %v3753 = vand.u32 %v3254, 4294901760
        %v3754 = vsub.f32 %v3254, %v3753
        %v3755 = vand.u32 %v3754, 4294901760
        %3756 = vmatpush1.msra.mxu0 %v3755
        %3757 = vmatprep.subr.mxu0 0.0
        %v3758 = vand.u32 %v3255, 4294901760
        %v3759 = vsub.f32 %v3255, %v3758
        %v3760 = vand.u32 %v3759, 4294901760
        %3761 = vmatpush1.msra.mxu0 %v3760
        %3762 = vmatprep.subr.mxu0 0.0
        %v3763 = vand.u32 %v3256, 4294901760
        %v3764 = vsub.f32 %v3256, %v3763
        %v3765 = vand.u32 %v3764, 4294901760
        %3766 = vmatpush1.msra.mxu0 %v3765
        %3767 = vmatprep.subr.mxu0 0.0
        %v3768 = vand.u32 %v3257, 4294901760
        %v3769 = vsub.f32 %v3257, %v3768
        %v3770 = vand.u32 %v3769, 4294901760
        %3771 = vmatpush1.msra.mxu0 %v3770
        %3772 = vmatprep.subr.mxu0 0.0
        %v3773 = vand.u32 %v3258, 4294901760
        %v3774 = vsub.f32 %v3258, %v3773
        %v3775 = vand.u32 %v3774, 4294901760
        %3776 = vmatpush1.msra.mxu0 %v3775
        %3777 = vmatprep.subr.mxu0 0.0
        %v3778 = vand.u32 %v3259, 4294901760
        %v3779 = vsub.f32 %v3259, %v3778
        %v3780 = vand.u32 %v3779, 4294901760
        %3781 = vmatpush1.msra.mxu0 %v3780
        %3782 = vmatprep.subr.mxu0 0.0
        %v3783 = vand.u32 %v3260, 4294901760
        %v3784 = vsub.f32 %v3260, %v3783
        %v3785 = vand.u32 %v3784, 4294901760
        %3786 = vmatpush1.msra.mxu0 %v3785
        %3787 = vmatprep.subr.mxu0 0.0
        %v3788 = vand.u32 %v3261, 4294901760
        %v3789 = vsub.f32 %v3261, %v3788
        %v3790 = vand.u32 %v3789, 4294901760
        %3791 = vmatpush1.msra.mxu0 %v3790
        %3792 = vmatprep.subr.mxu0 0.0
        %v3793 = vand.u32 %v3262, 4294901760
        %v3794 = vsub.f32 %v3262, %v3793
        %v3795 = vand.u32 %v3794, 4294901760
        %3796 = vmatpush1.msra.mxu0 %v3795
        %3797 = vmatprep.subr.mxu0 0.0
        %v3798 = vand.u32 %v3263, 4294901760
        %v3799 = vsub.f32 %v3263, %v3798
        %v3800 = vand.u32 %v3799, 4294901760
        %3801 = vmatpush1.msra.mxu0 %v3800
        %3802 = vmatprep.subr.mxu0 0.0
        %v3803 = vand.u32 %v3264, 4294901760
        %v3804 = vsub.f32 %v3264, %v3803
        %v3805 = vand.u32 %v3804, 4294901760
        %3806 = vmatpush1.msra.mxu0 %v3805
        %3807 = vmatprep.subr.mxu0 0.0
        %v3808 = vand.u32 %v3265, 4294901760
        %v3809 = vsub.f32 %v3265, %v3808
        %v3810 = vand.u32 %v3809, 4294901760
        %3811 = vmatpush1.msra.mxu0 %v3810
        %3812 = vmatprep.subr.mxu0 0.0
        %3813 = vmatpush1.msra.mxu0 0.0
        %3814 = vmatprep.subr.mxu0 0.0
        %3815 = vmatpush1.msra.mxu0 0.0
        %3816 = vmatprep.subr.mxu0 0.0
        %3817 = vmatpush1.msra.mxu0 0.0
        %3818 = vmatprep.subr.mxu0 0.0
        %3819 = vmatpush1.msra.mxu0 0.0
        %3820 = vmatprep.subr.mxu0 0.0
        %3821 = vmatpush1.msra.mxu0 0.0
        %3822 = vmatprep.subr.mxu0 0.0
        %3823 = vmatpush1.msra.mxu0 0.0
        %3824 = vmatprep.subr.mxu0 0.0
        %3825 = vmatpush1.msra.mxu0 0.0
        %3826 = vmatprep.subr.mxu0 0.0
        %3827 = vmatpush1.msra.mxu0 0.0
        %3828 = vmatprep.subr.mxu0 0.0
        %3829 = vmatpush1.msra.mxu0 0.0
        %3830 = vmatprep.subr.mxu0 0.0
        %3831 = vmatpush1.msra.mxu0 0.0
        %3832 = vmatprep.subr.mxu0 0.0
        %3833 = vmatpush1.msra.mxu0 0.0
        %3834 = vmatprep.subr.mxu0 0.0
        %3835 = vmatpush1.msra.mxu0 0.0
        %3836 = vmatprep.subr.mxu0 0.0
        %3837 = vmatpush1.msra.mxu0 0.0
        %3838 = vmatprep.subr.mxu0 0.0
        %3839 = vmatpush1.msra.mxu0 0.0
        %3840 = vmatprep.subr.mxu0 0.0
        %3841 = vmatpush1.msra.mxu0 0.0
        %3842 = vmatprep.subr.mxu0 0.0
        %3843 = vmatpush1.msra.mxu0 0.0
        %3844 = vmatprep.mubr.f32.mxu0 0.0
        %v3845 = vand.u32 %v3240, 4294901760
        %3846 = vmatmul.mubr.f32.gmra.mrb[0].mxu0 %v3845
        %v3847 = vpop.f32.mrb[0].mxu0
        %v3848 = vadd.f32 %v3721, %v3847
        %v3849 = vpop.f32.mrb[0].mxu0
        %3850 = vmatprep.mubr.f32.mxu0 0.0
        %v3851 = vand.u32 %v3246, 4294901760
        %3852 = vmatmul.mubr.f32.gmra.mrb[0].mxu0 %v3851
        %v3853 = vpop.f32.mrb[0].mxu0
        %v3854 = vadd.f32 %v3729, %v3853
        %v3855 = vpop.f32.mrb[0].mxu0
        %3856 = vdwg.mxu0
        %3857 = vmatprep.subr.mxu0 0.0
        %v3858 = vand.u32 %v3250, 4294901760
        %3859 = vmatpush1.msra.mxu0 %v3858
        %3860 = vmatprep.subr.mxu0 0.0
        %v3861 = vand.u32 %v3251, 4294901760
        %3862 = vmatpush1.msra.mxu0 %v3861
        %3863 = vmatprep.subr.mxu0 0.0
        %v3864 = vand.u32 %v3252, 4294901760
        %3865 = vmatpush1.msra.mxu0 %v3864
        %3866 = vmatprep.subr.mxu0 0.0
        %v3867 = vand.u32 %v3253, 4294901760
        %3868 = vmatpush1.msra.mxu0 %v3867
        %3869 = vmatprep.subr.mxu0 0.0
        %v3870 = vand.u32 %v3254, 4294901760
        %3871 = vmatpush1.msra.mxu0 %v3870
        %3872 = vmatprep.subr.mxu0 0.0
        %v3873 = vand.u32 %v3255, 4294901760
        %3874 = vmatpush1.msra.mxu0 %v3873
        %3875 = vmatprep.subr.mxu0 0.0
        %v3876 = vand.u32 %v3256, 4294901760
        %3877 = vmatpush1.msra.mxu0 %v3876
        %3878 = vmatprep.subr.mxu0 0.0
        %v3879 = vand.u32 %v3257, 4294901760
        %3880 = vmatpush1.msra.mxu0 %v3879
        %3881 = vmatprep.subr.mxu0 0.0
        %v3882 = vand.u32 %v3258, 4294901760
        %3883 = vmatpush1.msra.mxu0 %v3882
        %3884 = vmatprep.subr.mxu0 0.0
        %v3885 = vand.u32 %v3259, 4294901760
        %3886 = vmatpush1.msra.mxu0 %v3885
        %3887 = vmatprep.subr.mxu0 0.0
        %v3888 = vand.u32 %v3260, 4294901760
        %3889 = vmatpush1.msra.mxu0 %v3888
        %3890 = vmatprep.subr.mxu0 0.0
        %v3891 = vand.u32 %v3261, 4294901760
        %3892 = vmatpush1.msra.mxu0 %v3891
        %3893 = vmatprep.subr.mxu0 0.0
        %v3894 = vand.u32 %v3262, 4294901760
        %3895 = vmatpush1.msra.mxu0 %v3894
        %3896 = vmatprep.subr.mxu0 0.0
        %v3897 = vand.u32 %v3263, 4294901760
        %3898 = vmatpush1.msra.mxu0 %v3897
        %3899 = vmatprep.subr.mxu0 0.0
        %v3900 = vand.u32 %v3264, 4294901760
        %3901 = vmatpush1.msra.mxu0 %v3900
        %3902 = vmatprep.subr.mxu0 0.0
        %v3903 = vand.u32 %v3265, 4294901760
        %3904 = vmatpush1.msra.mxu0 %v3903
        %3905 = vmatprep.subr.mxu0 0.0
        %3906 = vmatpush1.msra.mxu0 0.0
        %3907 = vmatprep.subr.mxu0 0.0
        %3908 = vmatpush1.msra.mxu0 0.0
        %3909 = vmatprep.subr.mxu0 0.0
        %3910 = vmatpush1.msra.mxu0 0.0
        %3911 = vmatprep.subr.mxu0 0.0
        %3912 = vmatpush1.msra.mxu0 0.0
        %3913 = vmatprep.subr.mxu0 0.0
        %3914 = vmatpush1.msra.mxu0 0.0
        %3915 = vmatprep.subr.mxu0 0.0
        %3916 = vmatpush1.msra.mxu0 0.0
        %3917 = vmatprep.subr.mxu0 0.0
        %3918 = vmatpush1.msra.mxu0 0.0
        %3919 = vmatprep.subr.mxu0 0.0
        %3920 = vmatpush1.msra.mxu0 0.0
        %3921 = vmatprep.subr.mxu0 0.0
        %3922 = vmatpush1.msra.mxu0 0.0
        %3923 = vmatprep.subr.mxu0 0.0
        %3924 = vmatpush1.msra.mxu0 0.0
        %3925 = vmatprep.subr.mxu0 0.0
        %3926 = vmatpush1.msra.mxu0 0.0
        %3927 = vmatprep.subr.mxu0 0.0
        %3928 = vmatpush1.msra.mxu0 0.0
        %3929 = vmatprep.subr.mxu0 0.0
        %3930 = vmatpush1.msra.mxu0 0.0
        %3931 = vmatprep.subr.mxu0 0.0
        %3932 = vmatpush1.msra.mxu0 0.0
        %3933 = vmatprep.subr.mxu0 0.0
        %3934 = vmatpush1.msra.mxu0 0.0
        %3935 = vmatprep.subr.mxu0 0.0
        %3936 = vmatpush1.msra.mxu0 0.0
        %3937 = vmatprep.mubr.f32.mxu0 0.0
        %v3938 = vand.u32 %v3240, 4294901760
        %3939 = vmatmul.mubr.f32.gmra.mrb[0].mxu0 %v3938
        %v3940 = vpop.f32.mrb[0].mxu0
        %v3941 = vadd.f32 %v3848, %v3940
        %v3942 = vpop.f32.mrb[0].mxu0
        %3943 = vmatprep.mubr.f32.mxu0 0.0
        %v3944 = vand.u32 %v3246, 4294901760
        %3945 = vmatmul.mubr.f32.gmra.mrb[0].mxu0 %v3944
        %v3946 = vpop.f32.mrb[0].mxu0
        %v3947 = vadd.f32 %v3854, %v3946
        %v3948 = vpop.f32.mrb[0].mxu0
        %3949 = vdwg.mxu0
        %v3950 = vadd.f32 %v2736, %v3941
        %v3951 = vadd.f32 %v2737, %v3947
        %v3952 = vmax.f32 %v3950, 0.0
        %v3953 = vmax.f32 %v3951, 0.0
        %3954 = vst [vmem:[%s294] sm:$0xff] %v3952
        %3955 = vst [vmem:[%s294 + $0x8] sm:$0xff] %v3953
        %s3956 = sand.u32 %s135, 1
        %s3957 = scalar_lea.sflag [#allocation5], %s3956
        %s3958 = sand.u32 %s135, 1
        %s3959 = smul.addr %s3958, 16
        %s3960 = scalar_lea.vmem [#allocation6], %s3959
        // Predicated region
        $region79: #{tpu_custom_call.1} parent=69 // pred_check
          %p3961 = pneg %p145
        $region80: #{tpu_custom_call.1} parent=69 // pred_check_branch
          %3963 = sbr.rel (%p3961) target = $region82
        $region81: #{tpu_custom_call.1} parent=69 // pred_region
          %s3964 = smul.u32 2, %s24
          %s3966 = ssub.s32 256, 256
          %3967 = vsyncadd %s3957, %s3966
          %s3968 = smul.addr %s23, 4
          %s3969 = sadd.s32 %s3964, %s3968
          %s3970 = smul.addr %s3969, 128
          %s3971 = scalar_lea.hbm %s4, %s3970
          %s3972 = sshll.u32 %s3960, 4
          %s3973 = int_to_ptr.vmem [resolvable:$true] %s3972
          %3978 = dma.vmem_to_hbm [thread:$0]  %s3973, 256, %s3971, %s3957, 128, 128, 8
        $region82: #{tpu_custom_call.1} parent=69 // pred_fallthru
          _
      $region70: #{tpu_custom_call.1} parent=5 // pred_fallthru
        _
      %p3979 = scmp.le.s32.totalorder 2, %s14
      // Predicated region
      $region83: #{tpu_custom_call.1} parent=5 // pred_check
        %p3980 = pneg %p3979
      $region84: #{tpu_custom_call.1} parent=5 // pred_check_branch
        %3982 = sbr.rel (%p3980) target = $region86
      $region85: #{tpu_custom_call.1} parent=5 // pred_region
        %s3983 = ssub.s32 %s14, 2
        // Predicated region
        $region87: #{tpu_custom_call.1} parent=85 // pred_check
          %p3984 = pneg %p151
        $region88: #{tpu_custom_call.1} parent=85 // pred_check_branch
          %3986 = sbr.rel (%p3984) target = $region90
        $region89: #{tpu_custom_call.1} parent=85 // pred_region
          %s3987 = sand.u32 %s136, 1
          %s3988 = scalar_lea.sflag [#allocation5], %s3987
          %s3989 = sand.u32 %s136, 1
          %s3990 = smul.addr %s3989, 16
          %s3991 = scalar_lea.vmem [#allocation6], %s3990
          %3992 = dma.done %s3988, 256
        $region90: #{tpu_custom_call.1} parent=85 // pred_fallthru
          _
      $region86: #{tpu_custom_call.1} parent=5 // pred_fallthru
        _
    $region6: #{tpu_custom_call.1} parent=1 // loop_footer
      %s18 = sadd.s32 1, %s14
    $region7: #{tpu_custom_call.1} parent=1 // loop_footer_branch
      %13 = sbr.rel target = $region3
    $region8: #{tpu_custom_call.1} parent=1 // loop_exit
      _
    %3993 = vsyncpa [#allocation4], 1
    %s3994 = scalar_lea.sflag [#allocation4], 1
    %3995 = vsyncpa %s3994, 1
    %3996 = vsyncpa [#allocation5], 1
    %s3997 = scalar_lea.sflag [#allocation5], 1
    %3998 = vsyncpa %s3997, 1

</llo_original>
